<compile_context>
chip_gen: v7x
topology: tpu7x:2x2x1
jax: 0.10.0
libtpu: 0.0.40
codegen_flags: <defaults>
</compile_context>

<pallas_src>
import math
import functools

import jax
import jax.numpy as jnp
from jax.experimental import pallas as pl
from jax.experimental.pallas import tpu as pltpu

NEG_INF = -1e30  # additive mask value (finite; exp() underflows to 0)


# ----------------------------- tiling helpers ------------------------------

def _pick_row_tile(n, target=256):
    """Row (sublane) tile: full array if small, else a multiple-of-8 divisor."""
    if n <= target:
        return n
    t = (target // 8) * 8
    while t >= 8:
        if n % t == 0:
            return t
        t -= 8
    return n


def _pick_lane_tile(n, target=512):
    """Lane tile: full array if small, else a multiple-of-128 divisor."""
    if n <= target:
        return n
    t = (target // 128) * 128
    while t >= 128:
        if n % t == 0:
            return t
        t -= 128
    return n


# ------------------------- tiled linear (M, N, K grid) ----------------------

def _linear_kernel(x_ref, w_ref, b_ref, o_ref, acc_ref, *, relu):
    k = pl.program_id(2)

    @pl.when(k == 0)
    def _():
        acc_ref[...] = jnp.zeros_like(acc_ref)

    acc_ref[...] += jnp.dot(x_ref[...], w_ref[...],
                            preferred_element_type=jnp.float32)

    @pl.when(k == pl.num_programs(2) - 1)
    def _():
        y = acc_ref[...] + b_ref[...]
        if relu:
            y = jnp.maximum(y, 0.0)
        o_ref[...] = y.astype(o_ref.dtype)


def linear(x, w, b, relu=False, out_dtype=jnp.bfloat16,
           tm_target=256, tn_target=512, tk_target=512):
    """x: [M, K] (bf16) @ w: [K, N] (bf16) + b: [N] (f32), tiled (M, N, K) grid."""
    M, K = x.shape
    K2, N = w.shape
    assert K == K2
    tm = _pick_row_tile(M, tm_target)
    tn = _pick_lane_tile(N, tn_target)
    tk = _pick_lane_tile(K, tk_target)
    grid = (M // tm, N // tn, K // tk)
    return pl.pallas_call(
        functools.partial(_linear_kernel, relu=relu),
        out_shape=jax.ShapeDtypeStruct((M, N), out_dtype),
        grid=grid,
        in_specs=[
            pl.BlockSpec((tm, tk), lambda i, j, k: (i, k)),
            pl.BlockSpec((tk, tn), lambda i, j, k: (k, j)),
            pl.BlockSpec((1, tn), lambda i, j, k: (0, j)),   # bias tracks the N tile
        ],
        out_specs=pl.BlockSpec((tm, tn), lambda i, j, k: (i, j)),
        scratch_shapes=[pltpu.VMEM((tm, tn), jnp.float32)],
        compiler_params=pltpu.CompilerParams(
            dimension_semantics=("parallel", "parallel", "arbitrary")),
    )(x, w, b.reshape(1, N))


# ------------- fused: output-projection + residual + LayerNorm --------------

def _proj_res_ln_kernel(x_ref, w_ref, b_ref, r_ref, g_ref, bb_ref, o_ref):
    y = jnp.dot(x_ref[...], w_ref[...], preferred_element_type=jnp.float32)
    y = y + b_ref[...] + r_ref[...].astype(jnp.float32)
    mu = jnp.mean(y, axis=-1, keepdims=True)
    var = jnp.mean(jnp.square(y - mu), axis=-1, keepdims=True)
    o_ref[...] = ((y - mu) * jax.lax.rsqrt(var + 1e-5) * g_ref[...]
                  + bb_ref[...]).astype(o_ref.dtype)


def proj_residual_layernorm(x, w, b, res, gamma, beta, out_dtype=jnp.bfloat16):
    M, D = x.shape
    Do = w.shape[1]
    tm = _pick_row_tile(M, 256)
    return pl.pallas_call(
        _proj_res_ln_kernel,
        out_shape=jax.ShapeDtypeStruct((M, Do), out_dtype),
        grid=(M // tm,),
        in_specs=[
            pl.BlockSpec((tm, D), lambda i: (i, 0)),
            pl.BlockSpec((D, Do), lambda i: (0, 0)),
            pl.BlockSpec((1, Do), lambda i: (0, 0)),
            pl.BlockSpec((tm, Do), lambda i: (i, 0)),
            pl.BlockSpec((1, Do), lambda i: (0, 0)),
            pl.BlockSpec((1, Do), lambda i: (0, 0)),
        ],
        out_specs=pl.BlockSpec((tm, Do), lambda i: (i, 0)),
        compiler_params=pltpu.CompilerParams(dimension_semantics=("parallel",)),
    )(x, w, b.reshape(1, Do), res, gamma.reshape(1, Do), beta.reshape(1, Do))


# ------------- fused: FFN (w1 + ReLU + w2) + residual + LayerNorm ------------

def _ffn_res_ln_kernel(x_ref, w1_ref, b1_ref, w2_ref, b2_ref,
                       r_ref, g_ref, bb_ref, o_ref):
    h = jnp.dot(x_ref[...], w1_ref[...], preferred_element_type=jnp.float32)
    h = jnp.maximum(h + b1_ref[...], 0.0).astype(x_ref.dtype)   # bf16 for 2nd MXU dot
    y = jnp.dot(h, w2_ref[...], preferred_element_type=jnp.float32)
    y = y + b2_ref[...] + r_ref[...].astype(jnp.float32)
    mu = jnp.mean(y, axis=-1, keepdims=True)
    var = jnp.mean(jnp.square(y - mu), axis=-1, keepdims=True)
    o_ref[...] = ((y - mu) * jax.lax.rsqrt(var + 1e-5) * g_ref[...]
                  + bb_ref[...]).astype(o_ref.dtype)


def ffn_residual_layernorm(x, w1, b1, w2, b2, res, gamma, beta,
                           out_dtype=jnp.bfloat16):
    M, D = x.shape
    F = w1.shape[1]
    tm = _pick_row_tile(M, 256)
    return pl.pallas_call(
        _ffn_res_ln_kernel,
        out_shape=jax.ShapeDtypeStruct((M, D), out_dtype),
        grid=(M // tm,),
        in_specs=[
            pl.BlockSpec((tm, D), lambda i: (i, 0)),
            pl.BlockSpec((D, F), lambda i: (0, 0)),
            pl.BlockSpec((1, F), lambda i: (0, 0)),
            pl.BlockSpec((F, D), lambda i: (0, 0)),
            pl.BlockSpec((1, D), lambda i: (0, 0)),
            pl.BlockSpec((tm, D), lambda i: (i, 0)),
            pl.BlockSpec((1, D), lambda i: (0, 0)),
            pl.BlockSpec((1, D), lambda i: (0, 0)),
        ],
        out_specs=pl.BlockSpec((tm, D), lambda i: (i, 0)),
        compiler_params=pltpu.CompilerParams(dimension_semantics=("parallel",)),
    )(x, w1, b1.reshape(1, F), w2, b2.reshape(1, D),
      res, gamma.reshape(1, D), beta.reshape(1, D))


# ------------------------- standalone LayerNorm ------------------------------

def _ln_kernel(x_ref, g_ref, b_ref, o_ref):
    x = x_ref[...].astype(jnp.float32)
    mu = jnp.mean(x, axis=-1, keepdims=True)
    var = jnp.mean(jnp.square(x - mu), axis=-1, keepdims=True)
    o_ref[...] = ((x - mu) * jax.lax.rsqrt(var + 1e-5) * g_ref[...]
                  + b_ref[...]).astype(o_ref.dtype)


def layernorm(x, gamma, beta, out_dtype=jnp.bfloat16):
    M, D = x.shape
    tm = _pick_row_tile(M, 512)
    return pl.pallas_call(
        _ln_kernel,
        out_shape=jax.ShapeDtypeStruct((M, D), out_dtype),
        grid=(M // tm,),
        in_specs=[pl.BlockSpec((tm, D), lambda i: (i, 0)),
                  pl.BlockSpec((1, D), lambda i: (0, 0)),
                  pl.BlockSpec((1, D), lambda i: (0, 0))],
        out_specs=pl.BlockSpec((tm, D), lambda i: (i, 0)),
        compiler_params=pltpu.CompilerParams(dimension_semantics=("parallel",)),
    )(x, gamma.reshape(1, D), beta.reshape(1, D))


# -------- multi-head attention: in-kernel head split + in-kernel masks -------

def _mha_kernel(q_ref, kv_ref, pad_ref, o_ref, *, num_heads, causal):
    Lq = q_ref.shape[1]
    D = q_ref.shape[2]
    Lk = kv_ref.shape[1]
    Dh = D // num_heads
    scale = 1.0 / math.sqrt(Dh)

    mask = pad_ref[0]                                       # (1, Lk) additive f32
    if causal:
        qi = jax.lax.broadcasted_iota(jnp.int32, (Lq, Lk), 0)
        ki = jax.lax.broadcasted_iota(jnp.int32, (Lq, Lk), 1)
        mask = mask + jnp.where(ki > qi, NEG_INF, 0.0)

    outs = []
    for hh in range(num_heads):                              # static loop over heads
        qh = q_ref[0, :, hh * Dh:(hh + 1) * Dh]              # (Lq, Dh) bf16
        kh = kv_ref[0, :, hh * Dh:(hh + 1) * Dh]             # (Lk, Dh) bf16
        vh = kv_ref[0, :, D + hh * Dh:D + (hh + 1) * Dh]     # (Lk, Dh) bf16
        s = jax.lax.dot_general(qh, kh, (((1,), (1,)), ((), ())),
                                preferred_element_type=jnp.float32) * scale + mask
        m = jnp.max(s, axis=-1, keepdims=True)
        p = jnp.exp(s - m)
        inv = pl.reciprocal(jnp.sum(p, axis=-1, keepdims=True), approx=True)
        p = (p * inv).astype(vh.dtype)
        outs.append(jnp.dot(p, vh, preferred_element_type=jnp.float32))
    # single lane-dense (Lq, D) store
    o_ref[0] = jnp.concatenate(outs, axis=-1).astype(o_ref.dtype)


def mha_attention(q, kv, pad_add, num_heads, causal):
    """q: [B, Lq, D], kv: [B, Lk, 2D] (k|v concatenated), pad_add: [B, 1, Lk] additive."""
    # TODO(synk): for long sequences convert to a flash-style KV-tiled grid axis with
    #             online-softmax scratch; at these sizes the full (Lq, Lk) tile fits VMEM.
    B, Lq, D = q.shape
    Lk = kv.shape[1]
    return pl.pallas_call(
        functools.partial(_mha_kernel, num_heads=num_heads, causal=causal),
        out_shape=jax.ShapeDtypeStruct((B, Lq, D), q.dtype),
        grid=(B,),
        in_specs=[
            pl.BlockSpec((1, Lq, D), lambda b: (b, 0, 0)),
            pl.BlockSpec((1, Lk, 2 * D), lambda b: (b, 0, 0)),
            pl.BlockSpec((1, 1, Lk), lambda b: (b, 0, 0)),
        ],
        out_specs=pl.BlockSpec((1, Lq, D), lambda b: (b, 0, 0)),
        compiler_params=pltpu.CompilerParams(dimension_semantics=("parallel",)),
    )(q, kv, pad_add)


# --------- fused: final decoder LayerNorm + generator + log_softmax ----------

def _norm_gen_logsoftmax_kernel(x_ref, g_ref, b_ref, w_ref, bw_ref, o_ref):
    x = x_ref[...].astype(jnp.float32)
    mu = jnp.mean(x, axis=-1, keepdims=True)
    var = jnp.mean(jnp.square(x - mu), axis=-1, keepdims=True)
    xn = ((x - mu) * jax.lax.rsqrt(var + 1e-5) * g_ref[...]
          + b_ref[...]).astype(w_ref.dtype)
    logits = jnp.dot(xn, w_ref[...], preferred_element_type=jnp.float32) + bw_ref[...]
    m = jnp.max(logits, axis=-1, keepdims=True)
    z = logits - m
    lse = jnp.log(jnp.sum(jnp.exp(z), axis=-1, keepdims=True))
    o_ref[...] = z - lse


def norm_generator_logsoftmax(x, gamma, beta, w, b):
    # TODO(synk): for very large vocab, tile the vocab axis + two-pass max/sum log-softmax.
    M, D = x.shape
    V = w.shape[1]
    tm = _pick_row_tile(M, 128)
    return pl.pallas_call(
        _norm_gen_logsoftmax_kernel,
        out_shape=jax.ShapeDtypeStruct((M, V), jnp.float32),
        grid=(M // tm,),
        in_specs=[
            pl.BlockSpec((tm, D), lambda i: (i, 0)),
            pl.BlockSpec((1, D), lambda i: (0, 0)),
            pl.BlockSpec((1, D), lambda i: (0, 0)),
            pl.BlockSpec((D, V), lambda i: (0, 0)),
            pl.BlockSpec((1, V), lambda i: (0, 0)),
        ],
        out_specs=pl.BlockSpec((tm, V), lambda i: (i, 0)),
        compiler_params=pltpu.CompilerParams(dimension_semantics=("parallel",)),
    )(x, gamma.reshape(1, D), beta.reshape(1, D), w, b.reshape(1, V))


# ------------------------------ model glue ----------------------------------

def positional_encoding(L, D):
    pos = jnp.arange(L, dtype=jnp.float32)[:, None]
    div = jnp.exp(jnp.arange(0, D, 2, dtype=jnp.float32) * (-math.log(10000.0) / D))
    pe = jnp.zeros((L, D), jnp.float32)
    pe = pe.at[:, 0::2].set(jnp.sin(pos * div))
    pe = pe.at[:, 1::2].set(jnp.cos(pos * div))
    return pe


def embed(tokens, emb_table, d_model):
    # TODO(synk): embedding lookup is a data-dependent gather — kept in plain JAX glue.
    x = jnp.take(emb_table, tokens, axis=0).astype(jnp.float32) * math.sqrt(d_model)
    x = x + positional_encoding(tokens.shape[1], d_model)[None]
    return x.astype(jnp.bfloat16)


def attention_block(x_q, x_kv, ap, pad_add, ln_g, ln_b, B, h, causal):
    """Q-proj + fused[K|V]-proj (tiled matmuls), per-batch MHA (in-kernel heads+mask),
    then fused out-proj + residual + LayerNorm."""
    Lq, D = x_q.shape[1], x_q.shape[2]
    Lk = x_kv.shape[1]
    q = linear(x_q.reshape(B * Lq, D), ap["wq"], ap["bq"]).reshape(B, Lq, D)
    kv = linear(x_kv.reshape(B * Lk, D), ap["wkv"], ap["bkv"]).reshape(B, Lk, 2 * D)
    attn = mha_attention(q, kv, pad_add, h, causal)
    out = proj_residual_layernorm(attn.reshape(B * Lq, D), ap["wo"], ap["bo"],
                                  x_q.reshape(B * Lq, D), ln_g, ln_b)
    return out.reshape(B, Lq, D)


def encoder_layer(x, p, pad_add, B, h):
    L, D = x.shape[1], x.shape[2]
    x = attention_block(x, x, p["self_attn"], pad_add, p["ln1_g"], p["ln1_b"],
                        B, h, causal=False)
    x = ffn_residual_layernorm(x.reshape(B * L, D), p["w1"], p["b1"],
                               p["w2"], p["b2"], x.reshape(B * L, D),
                               p["ln2_g"], p["ln2_b"]).reshape(B, L, D)
    return x


def decoder_layer(y, memory, p, trg_pad_add, mem_pad_add, B, h):
    L, D = y.shape[1], y.shape[2]
    y = attention_block(y, y, p["self_attn"], trg_pad_add, p["ln1_g"], p["ln1_b"],
                        B, h, causal=True)
    y = attention_block(y, memory, p["cross_attn"], mem_pad_add, p["ln2_g"], p["ln2_b"],
                        B, h, causal=False)
    y = ffn_residual_layernorm(y.reshape(B * L, D), p["w1"], p["b1"],
                               p["w2"], p["b2"], y.reshape(B * L, D),
                               p["ln3_g"], p["ln3_b"]).reshape(B, L, D)
    return y


def transformer_forward(params, src, trg, d_model, h, padding_idx=0):
    B, Ls = src.shape
    Lt = trg.shape[1]
    # tiny additive key-padding vectors (masks are expanded *inside* the attention kernel)
    src_pad_add = jnp.where(src == padding_idx, NEG_INF, 0.0).astype(jnp.float32).reshape(B, 1, Ls)
    trg_pad_add = jnp.where(trg == padding_idx, NEG_INF, 0.0).astype(jnp.float32).reshape(B, 1, Lt)
    no_pad_add = jnp.zeros((B, 1, Ls), jnp.float32)  # no memory_key_padding_mask in reference

    # --- encoder ---
    x = embed(src, params["emb"], d_model)
    for lp in params["enc_layers"]:
        x = encoder_layer(x, lp, src_pad_add, B, h)
    memory = layernorm(x.reshape(B * Ls, d_model),
                       params["enc_norm_g"], params["enc_norm_b"]).reshape(B, Ls, d_model)

    # --- decoder ---
    y = embed(trg, params["emb"], d_model)   # trg_vocab=None -> shared embedding
    for lp in params["dec_layers"]:
        y = decoder_layer(y, memory, lp, trg_pad_add, no_pad_add, B, h)

    # --- final decoder norm + generator + log_softmax (fused) ---
    logp = norm_generator_logsoftmax(y.reshape(B * Lt, d_model),
                                     params["dec_norm_g"], params["dec_norm_b"],
                                     params["gen_w"], params["gen_b"])
    return logp.reshape(B, Lt, -1)


# ---------------------------- parameter init ---------------------------------

def init_params(key, vocab, d_model, h, N, ff_dim, padding_idx=0):
    it = iter(jax.random.split(key, 512))

    def w(*shape):
        return (jax.random.normal(next(it), shape, jnp.float32) * 0.05).astype(jnp.bfloat16)

    def attn():
        return dict(
            wq=w(d_model, d_model), bq=jnp.zeros((d_model,), jnp.float32),
            wkv=w(d_model, 2 * d_model), bkv=jnp.zeros((2 * d_model,), jnp.float32),
            wo=w(d_model, d_model), bo=jnp.zeros((d_model,), jnp.float32),
        )

    def enc_layer():
        return dict(
            self_attn=attn(),
            w1=w(d_model, ff_dim), b1=jnp.zeros((ff_dim,), jnp.float32),
            w2=w(ff_dim, d_model), b2=jnp.zeros((d_model,), jnp.float32),
            ln1_g=jnp.ones((d_model,), jnp.float32), ln1_b=jnp.zeros((d_model,), jnp.float32),
            ln2_g=jnp.ones((d_model,), jnp.float32), ln2_b=jnp.zeros((d_model,), jnp.float32),
        )

    def dec_layer():
        d = enc_layer()
        d["cross_attn"] = attn()
        d["ln3_g"] = jnp.ones((d_model,), jnp.float32)
        d["ln3_b"] = jnp.zeros((d_model,), jnp.float32)
        return d

    emb = w(vocab, d_model).at[padding_idx].set(0.0)
    return dict(
        emb=emb,
        enc_layers=[enc_layer() for _ in range(N)],
        dec_layers=[dec_layer() for _ in range(N)],
        enc_norm_g=jnp.ones((d_model,), jnp.float32),
        enc_norm_b=jnp.zeros((d_model,), jnp.float32),
        dec_norm_g=jnp.ones((d_model,), jnp.float32),
        dec_norm_b=jnp.zeros((d_model,), jnp.float32),
        gen_w=w(d_model, vocab), gen_b=jnp.zeros((vocab,), jnp.float32),
    )


# --------------------------------- main --------------------------------------

if __name__ == "__main__":
    # Small, module-consistent config: shared src/trg vocab, d_model=256, h=2 (Dh=128,
    # lane-aligned head slices), N=2 layers, ff_dim=512, batch=2, src_len=16, trg_len=16.
    src_vocab = 512
    d_model, h, N, ff_dim = 256, 2, 2, 512
    B, Ls, Lt = 2, 16, 16
    padding_idx = 0

    key = jax.random.PRNGKey(0)
    pkey, skey, tkey = jax.random.split(key, 3)

    params = init_params(pkey, src_vocab, d_model, h, N, ff_dim, padding_idx)

    src = jax.random.randint(skey, (B, Ls), 1, src_vocab, dtype=jnp.int32)
    trg = jax.random.randint(tkey, (B, Lt), 1, src_vocab, dtype=jnp.int32)
    # padding tokens at sequence ends (exercise the padding masks)
    src = src.at[1, -2:].set(padding_idx)
    trg = trg.at[0, -1].set(padding_idx)

    fwd = jax.jit(functools.partial(transformer_forward,
                                    d_model=d_model, h=h, padding_idx=padding_idx))
    out = fwd(params, src, trg)
    out = jax.block_until_ready(out)

    assert out.shape == (B, Lt, src_vocab), out.shape
    assert bool(jnp.all(jnp.isfinite(out)))
    # rows of log_softmax should sum (in prob space) to ~1
    assert bool(jnp.allclose(jnp.sum(jnp.exp(out), axis=-1), 1.0, atol=1e-3))
    print("KERNEL_OK")
</pallas_src>

<mosaic_0001>
module attributes {stable_mosaic.version = 11 : i64} {
  func.func @_linear_kernel(%arg0: i32, %arg1: i32, %arg2: i32, %arg3: memref<32x256xbf16, #tpu.memory_space<vmem>>, %arg4: memref<256x512xbf16, #tpu.memory_space<vmem>>, %arg5: memref<1x512xf32, #tpu.memory_space<vmem>>, %arg6: memref<32x512xbf16, #tpu.memory_space<vmem>>, %arg7: memref<32x512xf32, #tpu.memory_space<vmem>>) attributes {dimension_semantics = [#tpu.dimension_semantics<parallel>, #tpu.dimension_semantics<parallel>, #tpu.dimension_semantics<arbitrary>], iteration_bounds = array<i64: 1, 1, 1>, scalar_prefetch = 0 : i64, scratch_operands = 1 : i64, tpu.core_type = #tpu.core_type<tc>, window_params = [{transform_indices = @transform_0, window_bounds = array<i64: 32, 256>}, {transform_indices = @transform_1, window_bounds = array<i64: 256, 512>}, {transform_indices = @transform_2, window_bounds = array<i64: 1, 512>}, {transform_indices = @transform_3, window_bounds = array<i64: 32, 512>}]} {
    %c0_i32 = arith.constant 0 : i32
    %0 = arith.cmpi eq, %arg2, %c0_i32 : i32
    %1 = arith.extui %0 : i1 to i32
    %c0_i32_0 = arith.constant 0 : i32
    %2 = arith.cmpi ne, %1, %c0_i32_0 : i32
    scf.if %2 {
      %cst_10 = arith.constant 0.000000e+00 : f32
      %12 = vector.broadcast %cst_10 : f32 to vector<32x512xf32>
      %c0_11 = arith.constant 0 : index
      %c0_12 = arith.constant 0 : index
      %13 = vector.load %arg7[%c0_11, %c0_12] : memref<32x512xf32, #tpu.memory_space<vmem>>, vector<32x512xf32>
      tpu.vector_store %arg7[%c0_11, %c0_12], %12 {strides = array<i32>} : memref<32x512xf32, #tpu.memory_space<vmem>>, vector<32x512xf32>,
    } else {
    }
    %c0 = arith.constant 0 : index
    %c0_1 = arith.constant 0 : index
    %3 = vector.load %arg7[%c0, %c0_1] : memref<32x512xf32, #tpu.memory_space<vmem>>, vector<32x512xf32>
    %c0_2 = arith.constant 0 : index
    %c0_3 = arith.constant 0 : index
    %4 = vector.load %arg3[%c0_2, %c0_3] : memref<32x256xbf16, #tpu.memory_space<vmem>>, vector<32x256xbf16>
    %c0_4 = arith.constant 0 : index
    %c0_5 = arith.constant 0 : index
    %5 = vector.load %arg4[%c0_4, %c0_5] : memref<256x512xbf16, #tpu.memory_space<vmem>>, vector<256x512xbf16>
    %cst = arith.constant dense<0.000000e+00> : vector<32x512xf32>
    %6 = tpu.matmul %4, %5, %cst {dimension_numbers = #tpu.dot_dimension_numbers<[1], [0], [0], [1], [0, 0, 1, 1], [], []>} : vector<32x256xbf16>, vector<256x512xbf16>, vector<32x512xf32> -> vector<32x512xf32>
    %7 = arith.addf %3, %6 : vector<32x512xf32>
    %c0_6 = arith.constant 0 : index
    %c0_7 = arith.constant 0 : index
    %8 = vector.load %arg7[%c0_6, %c0_7] : memref<32x512xf32, #tpu.memory_space<vmem>>, vector<32x512xf32>
    tpu.vector_store %arg7[%c0_6, %c0_7], %7 {strides = array<i32>} : memref<32x512xf32, #tpu.memory_space<vmem>>, vector<32x512xf32>,
    %c0_i32_8 = arith.constant 0 : i32
    %9 = arith.cmpi eq, %arg2, %c0_i32_8 : i32
    %10 = arith.extui %9 : i1 to i32
    %c0_i32_9 = arith.constant 0 : i32
    %11 = arith.cmpi ne, %10, %c0_i32_9 : i32
    scf.if %11 {
      %c0_10 = arith.constant 0 : index
      %c0_11 = arith.constant 0 : index
      %12 = vector.load %arg7[%c0_10, %c0_11] : memref<32x512xf32, #tpu.memory_space<vmem>>, vector<32x512xf32>
      %c0_12 = arith.constant 0 : index
      %c0_13 = arith.constant 0 : index
      %13 = vector.load %arg5[%c0_12, %c0_13] : memref<1x512xf32, #tpu.memory_space<vmem>>, vector<1x512xf32>
      %14 = vector.broadcast %13 : vector<1x512xf32> to vector<32x512xf32>
      %15 = arith.addf %12, %14 : vector<32x512xf32>
      %16 = arith.truncf %15 : vector<32x512xf32> to vector<32x512xbf16>
      %c0_14 = arith.constant 0 : index
      %c0_15 = arith.constant 0 : index
      %17 = vector.load %arg6[%c0_14, %c0_15] : memref<32x512xbf16, #tpu.memory_space<vmem>>, vector<32x512xbf16>
      tpu.vector_store %arg6[%c0_14, %c0_15], %16 {strides = array<i32>} : memref<32x512xbf16, #tpu.memory_space<vmem>>, vector<32x512xbf16>,
    } else {
    }
    return
  }
  func.func @transform_0(%arg0: i32, %arg1: i32, %arg2: i32) -> (i32, i32) {
    %c0_i32 = arith.constant 0 : i32
    return %arg0, %arg2 : i32, i32
  }
  func.func @transform_1(%arg0: i32, %arg1: i32, %arg2: i32) -> (i32, i32) {
    %c0_i32 = arith.constant 0 : i32
    return %arg2, %arg1 : i32, i32
  }
  func.func @transform_2(%arg0: i32, %arg1: i32, %arg2: i32) -> (i32, i32) {
    %c0_i32 = arith.constant 0 : i32
    %c0_i32_0 = arith.constant 0 : i32
    return %c0_i32, %arg1 : i32, i32
  }
  func.func @transform_3(%arg0: i32, %arg1: i32, %arg2: i32) -> (i32, i32) {
    %c0_i32 = arith.constant 0 : i32
    return %arg0, %arg1 : i32, i32
  }
}

module attributes {stable_mosaic.version = 11 : i64} {
  func.func @_linear_kernel(%arg0: i32, %arg1: i32, %arg2: i32, %arg3: memref<32x256xbf16, #tpu.memory_space<vmem>>, %arg4: memref<256x256xbf16, #tpu.memory_space<vmem>>, %arg5: memref<1x256xf32, #tpu.memory_space<vmem>>, %arg6: memref<32x256xbf16, #tpu.memory_space<vmem>>, %arg7: memref<32x256xf32, #tpu.memory_space<vmem>>) attributes {dimension_semantics = [#tpu.dimension_semantics<parallel>, #tpu.dimension_semantics<parallel>, #tpu.dimension_semantics<arbitrary>], iteration_bounds = array<i64: 1, 1, 1>, scalar_prefetch = 0 : i64, scratch_operands = 1 : i64, tpu.core_type = #tpu.core_type<tc>, window_params = [{transform_indices = @transform_0, window_bounds = array<i64: 32, 256>}, {transform_indices = @transform_1, window_bounds = array<i64: 256, 256>}, {transform_indices = @transform_2, window_bounds = array<i64: 1, 256>}, {transform_indices = @transform_3, window_bounds = array<i64: 32, 256>}]} {
    %c0_i32 = arith.constant 0 : i32
    %0 = arith.cmpi eq, %arg2, %c0_i32 : i32
    %1 = arith.extui %0 : i1 to i32
    %c0_i32_0 = arith.constant 0 : i32
    %2 = arith.cmpi ne, %1, %c0_i32_0 : i32
    scf.if %2 {
      %cst_10 = arith.constant 0.000000e+00 : f32
      %12 = vector.broadcast %cst_10 : f32 to vector<32x256xf32>
      %c0_11 = arith.constant 0 : index
      %c0_12 = arith.constant 0 : index
      %13 = vector.load %arg7[%c0_11, %c0_12] : memref<32x256xf32, #tpu.memory_space<vmem>>, vector<32x256xf32>
      tpu.vector_store %arg7[%c0_11, %c0_12], %12 {strides = array<i32>} : memref<32x256xf32, #tpu.memory_space<vmem>>, vector<32x256xf32>,
    } else {
    }
    %c0 = arith.constant 0 : index
    %c0_1 = arith.constant 0 : index
    %3 = vector.load %arg7[%c0, %c0_1] : memref<32x256xf32, #tpu.memory_space<vmem>>, vector<32x256xf32>
    %c0_2 = arith.constant 0 : index
    %c0_3 = arith.constant 0 : index
    %4 = vector.load %arg3[%c0_2, %c0_3] : memref<32x256xbf16, #tpu.memory_space<vmem>>, vector<32x256xbf16>
    %c0_4 = arith.constant 0 : index
    %c0_5 = arith.constant 0 : index
    %5 = vector.load %arg4[%c0_4, %c0_5] : memref<256x256xbf16, #tpu.memory_space<vmem>>, vector<256x256xbf16>
    %cst = arith.constant dense<0.000000e+00> : vector<32x256xf32>
    %6 = tpu.matmul %4, %5, %cst {dimension_numbers = #tpu.dot_dimension_numbers<[1], [0], [0], [1], [0, 0, 1, 1], [], []>} : vector<32x256xbf16>, vector<256x256xbf16>, vector<32x256xf32> -> vector<32x256xf32>
    %7 = arith.addf %3, %6 : vector<32x256xf32>
    %c0_6 = arith.constant 0 : index
    %c0_7 = arith.constant 0 : index
    %8 = vector.load %arg7[%c0_6, %c0_7] : memref<32x256xf32, #tpu.memory_space<vmem>>, vector<32x256xf32>
    tpu.vector_store %arg7[%c0_6, %c0_7], %7 {strides = array<i32>} : memref<32x256xf32, #tpu.memory_space<vmem>>, vector<32x256xf32>,
    %c0_i32_8 = arith.constant 0 : i32
    %9 = arith.cmpi eq, %arg2, %c0_i32_8 : i32
    %10 = arith.extui %9 : i1 to i32
    %c0_i32_9 = arith.constant 0 : i32
    %11 = arith.cmpi ne, %10, %c0_i32_9 : i32
    scf.if %11 {
      %c0_10 = arith.constant 0 : index
      %c0_11 = arith.constant 0 : index
      %12 = vector.load %arg7[%c0_10, %c0_11] : memref<32x256xf32, #tpu.memory_space<vmem>>, vector<32x256xf32>
      %c0_12 = arith.constant 0 : index
      %c0_13 = arith.constant 0 : index
      %13 = vector.load %arg5[%c0_12, %c0_13] : memref<1x256xf32, #tpu.memory_space<vmem>>, vector<1x256xf32>
      %14 = vector.broadcast %13 : vector<1x256xf32> to vector<32x256xf32>
      %15 = arith.addf %12, %14 : vector<32x256xf32>
      %16 = arith.truncf %15 : vector<32x256xf32> to vector<32x256xbf16>
      %c0_14 = arith.constant 0 : index
      %c0_15 = arith.constant 0 : index
      %17 = vector.load %arg6[%c0_14, %c0_15] : memref<32x256xbf16, #tpu.memory_space<vmem>>, vector<32x256xbf16>
      tpu.vector_store %arg6[%c0_14, %c0_15], %16 {strides = array<i32>} : memref<32x256xbf16, #tpu.memory_space<vmem>>, vector<32x256xbf16>,
    } else {
    }
    return
  }
  func.func @transform_0(%arg0: i32, %arg1: i32, %arg2: i32) -> (i32, i32) {
    %c0_i32 = arith.constant 0 : i32
    return %arg0, %arg2 : i32, i32
  }
  func.func @transform_1(%arg0: i32, %arg1: i32, %arg2: i32) -> (i32, i32) {
    %c0_i32 = arith.constant 0 : i32
    return %arg2, %arg1 : i32, i32
  }
  func.func @transform_2(%arg0: i32, %arg1: i32, %arg2: i32) -> (i32, i32) {
    %c0_i32 = arith.constant 0 : i32
    %c0_i32_0 = arith.constant 0 : i32
    return %c0_i32, %arg1 : i32, i32
  }
  func.func @transform_3(%arg0: i32, %arg1: i32, %arg2: i32) -> (i32, i32) {
    %c0_i32 = arith.constant 0 : i32
    return %arg0, %arg1 : i32, i32
  }
}

module attributes {stable_mosaic.version = 11 : i64} {
  func.func @_mha_kernel(%arg0: i32, %arg1: memref<1x16x256xbf16, #tpu.memory_space<vmem>>, %arg2: memref<1x16x512xbf16, #tpu.memory_space<vmem>>, %arg3: memref<1x1x16xf32, #tpu.memory_space<vmem>>, %arg4: memref<1x16x256xbf16, #tpu.memory_space<vmem>>) attributes {dimension_semantics = [#tpu.dimension_semantics<parallel>], iteration_bounds = array<i64: 2>, scalar_prefetch = 0 : i64, scratch_operands = 0 : i64, tpu.core_type = #tpu.core_type<tc>, window_params = [{transform_indices = @transform_0, window_bounds = array<i64: 1, 16, 256>}, {transform_indices = @transform_1, window_bounds = array<i64: 1, 16, 512>}, {transform_indices = @transform_2, window_bounds = array<i64: 1, 1, 16>}, {transform_indices = @transform_3, window_bounds = array<i64: 1, 16, 256>}]} {
    %c0 = arith.constant 0 : index
    %c0_0 = arith.constant 0 : index
    %c0_1 = arith.constant 0 : index
    %0 = vector.load %arg3[%c0, %c0_0, %c0_1] : memref<1x1x16xf32, #tpu.memory_space<vmem>>, vector<1x1x16xf32>
    %1 = vector.shape_cast %0 : vector<1x1x16xf32> to vector<1x16xf32>
    %c0_2 = arith.constant 0 : index
    %c0_3 = arith.constant 0 : index
    %c0_4 = arith.constant 0 : index
    %2 = vector.load %arg1[%c0_2, %c0_3, %c0_4] : memref<1x16x256xbf16, #tpu.memory_space<vmem>>, vector<1x16x128xbf16>
    %3 = vector.shape_cast %2 : vector<1x16x128xbf16> to vector<16x128xbf16>
    %c0_5 = arith.constant 0 : index
    %c0_6 = arith.constant 0 : index
    %c0_7 = arith.constant 0 : index
    %4 = vector.load %arg2[%c0_5, %c0_6, %c0_7] : memref<1x16x512xbf16, #tpu.memory_space<vmem>>, vector<1x16x128xbf16>
    %5 = vector.shape_cast %4 : vector<1x16x128xbf16> to vector<16x128xbf16>
    %c0_8 = arith.constant 0 : index
    %c0_9 = arith.constant 0 : index
    %c256 = arith.constant 256 : index
    %6 = vector.load %arg2[%c0_8, %c0_9, %c256] : memref<1x16x512xbf16, #tpu.memory_space<vmem>>, vector<1x16x128xbf16>
    %7 = vector.shape_cast %6 : vector<1x16x128xbf16> to vector<16x128xbf16>
    %cst = arith.constant dense<0.000000e+00> : vector<16x16xf32>
    %8 = tpu.matmul %3, %5, %cst {dimension_numbers = #tpu.dot_dimension_numbers<[1], [1], [0], [0], [0, 0, 1, 0], [], []>} : vector<16x128xbf16>, vector<16x128xbf16>, vector<16x16xf32> -> vector<16x16xf32>
    %cst_10 = arith.constant 0.0883883461 : f32
    %9 = vector.broadcast %cst_10 : f32 to vector<16x16xf32>
    %10 = arith.mulf %8, %9 : vector<16x16xf32>
    %11 = vector.broadcast %1 : vector<1x16xf32> to vector<16x16xf32>
    %12 = arith.addf %10, %11 : vector<16x16xf32>
    %cst_11 = arith.constant dense<0xFF800000> : vector<16xf32>
    %13 = vector.multi_reduction <maximumf>, %12, %cst_11 [1] : vector<16x16xf32> to vector<16xf32>
    %14 = vector.shape_cast %13 : vector<16xf32> to vector<16x1xf32>
    %15 = vector.broadcast %14 : vector<16x1xf32> to vector<16x16xf32>
    %16 = arith.subf %12, %15 : vector<16x16xf32>
    %17 = math.exp %16 : vector<16x16xf32>
    %cst_12 = arith.constant dense<0.000000e+00> : vector<16xf32>
    %18 = vector.multi_reduction <add>, %17, %cst_12 [1] : vector<16x16xf32> to vector<16xf32>
    %19 = vector.shape_cast %18 : vector<16xf32> to vector<16x1xf32>
    %20 = tpu.reciprocal %19 {approx = true} : vector<16x1xf32> -> vector<16x1xf32>
    %21 = vector.broadcast %20 : vector<16x1xf32> to vector<16x16xf32>
    %22 = arith.mulf %17, %21 : vector<16x16xf32>
    %23 = arith.truncf %22 : vector<16x16xf32> to vector<16x16xbf16>
    %cst_13 = arith.constant dense<0.000000e+00> : vector<16x128xf32>
    %24 = tpu.matmul %23, %7, %cst_13 {dimension_numbers = #tpu.dot_dimension_numbers<[1], [0], [0], [1], [0, 0, 1, 1], [], []>} : vector<16x16xbf16>, vector<16x128xbf16>, vector<16x128xf32> -> vector<16x128xf32>
    %c0_14 = arith.constant 0 : index
    %c0_15 = arith.constant 0 : index
    %c128 = arith.constant 128 : index
    %25 = vector.load %arg1[%c0_14, %c0_15, %c128] : memref<1x16x256xbf16, #tpu.memory_space<vmem>>, vector<1x16x128xbf16>
    %26 = vector.shape_cast %25 : vector<1x16x128xbf16> to vector<16x128xbf16>
    %c0_16 = arith.constant 0 : index
    %c0_17 = arith.constant 0 : index
    %c128_18 = arith.constant 128 : index
    %27 = vector.load %arg2[%c0_16, %c0_17, %c128_18] : memref<1x16x512xbf16, #tpu.memory_space<vmem>>, vector<1x16x128xbf16>
    %28 = vector.shape_cast %27 : vector<1x16x128xbf16> to vector<16x128xbf16>
    %c0_19 = arith.constant 0 : index
    %c0_20 = arith.constant 0 : index
    %c384 = arith.constant 384 : index
    %29 = vector.load %arg2[%c0_19, %c0_20, %c384] : memref<1x16x512xbf16, #tpu.memory_space<vmem>>, vector<1x16x128xbf16>
    %30 = vector.shape_cast %29 : vector<1x16x128xbf16> to vector<16x128xbf16>
    %cst_21 = arith.constant dense<0.000000e+00> : vector<16x16xf32>
    %31 = tpu.matmul %26, %28, %cst_21 {dimension_numbers = #tpu.dot_dimension_numbers<[1], [1], [0], [0], [0, 0, 1, 0], [], []>} : vector<16x128xbf16>, vector<16x128xbf16>, vector<16x16xf32> -> vector<16x16xf32>
    %cst_22 = arith.constant 0.0883883461 : f32
    %32 = vector.broadcast %cst_22 : f32 to vector<16x16xf32>
    %33 = arith.mulf %31, %32 : vector<16x16xf32>
    %34 = vector.broadcast %1 : vector<1x16xf32> to vector<16x16xf32>
    %35 = arith.addf %33, %34 : vector<16x16xf32>
    %cst_23 = arith.constant dense<0xFF800000> : vector<16xf32>
    %36 = vector.multi_reduction <maximumf>, %35, %cst_23 [1] : vector<16x16xf32> to vector<16xf32>
    %37 = vector.shape_cast %36 : vector<16xf32> to vector<16x1xf32>
    %38 = vector.broadcast %37 : vector<16x1xf32> to vector<16x16xf32>
    %39 = arith.subf %35, %38 : vector<16x16xf32>
    %40 = math.exp %39 : vector<16x16xf32>
    %cst_24 = arith.constant dense<0.000000e+00> : vector<16xf32>
    %41 = vector.multi_reduction <add>, %40, %cst_24 [1] : vector<16x16xf32> to vector<16xf32>
    %42 = vector.shape_cast %41 : vector<16xf32> to vector<16x1xf32>
    %43 = tpu.reciprocal %42 {approx = true} : vector<16x1xf32> -> vector<16x1xf32>
    %44 = vector.broadcast %43 : vector<16x1xf32> to vector<16x16xf32>
    %45 = arith.mulf %40, %44 : vector<16x16xf32>
    %46 = arith.truncf %45 : vector<16x16xf32> to vector<16x16xbf16>
    %cst_25 = arith.constant dense<0.000000e+00> : vector<16x128xf32>
    %47 = tpu.matmul %46, %30, %cst_25 {dimension_numbers = #tpu.dot_dimension_numbers<[1], [0], [0], [1], [0, 0, 1, 1], [], []>} : vector<16x16xbf16>, vector<16x128xbf16>, vector<16x128xf32> -> vector<16x128xf32>
    %48 = tpu.concatenate %24, %47 in 1 : vector<16x128xf32>, vector<16x128xf32> -> vector<16x256xf32>
    %49 = arith.truncf %48 : vector<16x256xf32> to vector<16x256xbf16>
    %c0_26 = arith.constant 0 : index
    %c0_27 = arith.constant 0 : index
    %c0_28 = arith.constant 0 : index
    %50 = vector.load %arg4[%c0_26, %c0_27, %c0_28] : memref<1x16x256xbf16, #tpu.memory_space<vmem>>, vector<1x16x256xbf16>
    %51 = vector.shape_cast %50 : vector<1x16x256xbf16> to vector<16x256xbf16>
    %52 = vector.shape_cast %49 : vector<16x256xbf16> to vector<1x16x256xbf16>
    tpu.vector_store %arg4[%c0_26, %c0_27, %c0_28], %52 {strides = array<i32>} : memref<1x16x256xbf16, #tpu.memory_space<vmem>>, vector<1x16x256xbf16>,
    return
  }
  func.func @transform_0(%arg0: i32) -> (i32, i32, i32) {
    %c0_i32 = arith.constant 0 : i32
    %c0_i32_0 = arith.constant 0 : i32
    %c0_i32_1 = arith.constant 0 : i32
    return %arg0, %c0_i32, %c0_i32_0 : i32, i32, i32
  }
  func.func @transform_1(%arg0: i32) -> (i32, i32, i32) {
    %c0_i32 = arith.constant 0 : i32
    %c0_i32_0 = arith.constant 0 : i32
    %c0_i32_1 = arith.constant 0 : i32
    return %arg0, %c0_i32, %c0_i32_0 : i32, i32, i32
  }
  func.func @transform_2(%arg0: i32) -> (i32, i32, i32) {
    %c0_i32 = arith.constant 0 : i32
    %c0_i32_0 = arith.constant 0 : i32
    %c0_i32_1 = arith.constant 0 : i32
    return %arg0, %c0_i32, %c0_i32_0 : i32, i32, i32
  }
  func.func @transform_3(%arg0: i32) -> (i32, i32, i32) {
    %c0_i32 = arith.constant 0 : i32
    %c0_i32_0 = arith.constant 0 : i32
    %c0_i32_1 = arith.constant 0 : i32
    return %arg0, %c0_i32, %c0_i32_0 : i32, i32, i32
  }
}

module attributes {stable_mosaic.version = 11 : i64} {
  func.func @_proj_res_ln_kernel(%arg0: i32, %arg1: memref<32x256xbf16, #tpu.memory_space<vmem>>, %arg2: memref<256x256xbf16, #tpu.memory_space<vmem>>, %arg3: memref<1x256xf32, #tpu.memory_space<vmem>>, %arg4: memref<32x256xbf16, #tpu.memory_space<vmem>>, %arg5: memref<1x256xf32, #tpu.memory_space<vmem>>, %arg6: memref<1x256xf32, #tpu.memory_space<vmem>>, %arg7: memref<32x256xbf16, #tpu.memory_space<vmem>>) attributes {dimension_semantics = [#tpu.dimension_semantics<parallel>], iteration_bounds = array<i64: 1>, scalar_prefetch = 0 : i64, scratch_operands = 0 : i64, tpu.core_type = #tpu.core_type<tc>, window_params = [{transform_indices = @transform_0, window_bounds = array<i64: 32, 256>}, {pipeline_mode = #tpu.pipeline_mode<synchronous>, transform_indices = @transform_1, window_bounds = array<i64: 256, 256>}, {pipeline_mode = #tpu.pipeline_mode<synchronous>, transform_indices = @transform_2, window_bounds = array<i64: 1, 256>}, {transform_indices = @transform_3, window_bounds = array<i64: 32, 256>}, {pipeline_mode = #tpu.pipeline_mode<synchronous>, transform_indices = @transform_4, window_bounds = array<i64: 1, 256>}, {pipeline_mode = #tpu.pipeline_mode<synchronous>, transform_indices = @transform_5, window_bounds = array<i64: 1, 256>}, {transform_indices = @transform_6, window_bounds = array<i64: 32, 256>}]} {
    %c0 = arith.constant 0 : index
    %c0_0 = arith.constant 0 : index
    %0 = vector.load %arg1[%c0, %c0_0] : memref<32x256xbf16, #tpu.memory_space<vmem>>, vector<32x256xbf16>
    %c0_1 = arith.constant 0 : index
    %c0_2 = arith.constant 0 : index
    %1 = vector.load %arg2[%c0_1, %c0_2] : memref<256x256xbf16, #tpu.memory_space<vmem>>, vector<256x256xbf16>
    %cst = arith.constant dense<0.000000e+00> : vector<32x256xf32>
    %2 = tpu.matmul %0, %1, %cst {dimension_numbers = #tpu.dot_dimension_numbers<[1], [0], [0], [1], [0, 0, 1, 1], [], []>} : vector<32x256xbf16>, vector<256x256xbf16>, vector<32x256xf32> -> vector<32x256xf32>
    %c0_3 = arith.constant 0 : index
    %c0_4 = arith.constant 0 : index
    %3 = vector.load %arg3[%c0_3, %c0_4] : memref<1x256xf32, #tpu.memory_space<vmem>>, vector<1x256xf32>
    %4 = vector.broadcast %3 : vector<1x256xf32> to vector<32x256xf32>
    %5 = arith.addf %2, %4 : vector<32x256xf32>
    %c0_5 = arith.constant 0 : index
    %c0_6 = arith.constant 0 : index
    %6 = vector.load %arg4[%c0_5, %c0_6] : memref<32x256xbf16, #tpu.memory_space<vmem>>, vector<32x256xbf16>
    %7 = arith.extf %6 : vector<32x256xbf16> to vector<32x256xf32>
    %8 = arith.addf %5, %7 : vector<32x256xf32>
    %cst_7 = arith.constant dense<0.000000e+00> : vector<32xf32>
    %9 = vector.multi_reduction <add>, %8, %cst_7 [1] : vector<32x256xf32> to vector<32xf32>
    %10 = vector.shape_cast %9 : vector<32xf32> to vector<32x1xf32>
    %cst_8 = arith.constant 2.560000e+02 : f32
    %11 = vector.broadcast %cst_8 : f32 to vector<32x1xf32>
    %12 = arith.divf %10, %11 : vector<32x1xf32>
    %13 = vector.broadcast %12 : vector<32x1xf32> to vector<32x256xf32>
    %14 = arith.subf %8, %13 : vector<32x256xf32>
    %15 = arith.mulf %14, %14 : vector<32x256xf32>
    %cst_9 = arith.constant dense<0.000000e+00> : vector<32xf32>
    %16 = vector.multi_reduction <add>, %15, %cst_9 [1] : vector<32x256xf32> to vector<32xf32>
    %17 = vector.shape_cast %16 : vector<32xf32> to vector<32x1xf32>
    %cst_10 = arith.constant 2.560000e+02 : f32
    %18 = vector.broadcast %cst_10 : f32 to vector<32x1xf32>
    %19 = arith.divf %17, %18 : vector<32x1xf32>
    %20 = vector.broadcast %12 : vector<32x1xf32> to vector<32x256xf32>
    %21 = arith.subf %8, %20 : vector<32x256xf32>
    %cst_11 = arith.constant 9.99999974E-6 : f32
    %22 = vector.broadcast %cst_11 : f32 to vector<32x1xf32>
    %23 = arith.addf %19, %22 : vector<32x1xf32>
    %24 = math.rsqrt %23 : vector<32x1xf32>
    %25 = vector.broadcast %24 : vector<32x1xf32> to vector<32x256xf32>
    %26 = arith.mulf %21, %25 : vector<32x256xf32>
    %c0_12 = arith.constant 0 : index
    %c0_13 = arith.constant 0 : index
    %27 = vector.load %arg5[%c0_12, %c0_13] : memref<1x256xf32, #tpu.memory_space<vmem>>, vector<1x256xf32>
    %28 = vector.broadcast %27 : vector<1x256xf32> to vector<32x256xf32>
    %29 = arith.mulf %26, %28 : vector<32x256xf32>
    %c0_14 = arith.constant 0 : index
    %c0_15 = arith.constant 0 : index
    %30 = vector.load %arg6[%c0_14, %c0_15] : memref<1x256xf32, #tpu.memory_space<vmem>>, vector<1x256xf32>
    %31 = vector.broadcast %30 : vector<1x256xf32> to vector<32x256xf32>
    %32 = arith.addf %29, %31 : vector<32x256xf32>
    %33 = arith.truncf %32 : vector<32x256xf32> to vector<32x256xbf16>
    %c0_16 = arith.constant 0 : index
    %c0_17 = arith.constant 0 : index
    %34 = vector.load %arg7[%c0_16, %c0_17] : memref<32x256xbf16, #tpu.memory_space<vmem>>, vector<32x256xbf16>
    tpu.vector_store %arg7[%c0_16, %c0_17], %33 {strides = array<i32>} : memref<32x256xbf16, #tpu.memory_space<vmem>>, vector<32x256xbf16>,
    return
  }
  func.func @transform_0(%arg0: i32) -> (i32, i32) {
    %c0_i32 = arith.constant 0 : i32
    %c0_i32_0 = arith.constant 0 : i32
    return %arg0, %c0_i32 : i32, i32
  }
  func.func @transform_1(%arg0: i32) -> (i32, i32) {
    %c0_i32 = arith.constant 0 : i32
    %c0_i32_0 = arith.constant 0 : i32
    %c0_i32_1 = arith.constant 0 : i32
    return %c0_i32, %c0_i32_0 : i32, i32
  }
  func.func @transform_2(%arg0: i32) -> (i32, i32) {
    %c0_i32 = arith.constant 0 : i32
    %c0_i32_0 = arith.constant 0 : i32
    %c0_i32_1 = arith.constant 0 : i32
    return %c0_i32, %c0_i32_0 : i32, i32
  }
  func.func @transform_3(%arg0: i32) -> (i32, i32) {
    %c0_i32 = arith.constant 0 : i32
    %c0_i32_0 = arith.constant 0 : i32
    return %arg0, %c0_i32 : i32, i32
  }
  func.func @transform_4(%arg0: i32) -> (i32, i32) {
    %c0_i32 = arith.constant 0 : i32
    %c0_i32_0 = arith.constant 0 : i32
    %c0_i32_1 = arith.constant 0 : i32
    return %c0_i32, %c0_i32_0 : i32, i32
  }
  func.func @transform_5(%arg0: i32) -> (i32, i32) {
    %c0_i32 = arith.constant 0 : i32
    %c0_i32_0 = arith.constant 0 : i32
    %c0_i32_1 = arith.constant 0 : i32
    return %c0_i32, %c0_i32_0 : i32, i32
  }
  func.func @transform_6(%arg0: i32) -> (i32, i32) {
    %c0_i32 = arith.constant 0 : i32
    %c0_i32_0 = arith.constant 0 : i32
    return %arg0, %c0_i32 : i32, i32
  }
}

module attributes {stable_mosaic.version = 11 : i64} {
  func.func @_ffn_res_ln_kernel(%arg0: i32, %arg1: memref<32x256xbf16, #tpu.memory_space<vmem>>, %arg2: memref<256x512xbf16, #tpu.memory_space<vmem>>, %arg3: memref<1x512xf32, #tpu.memory_space<vmem>>, %arg4: memref<512x256xbf16, #tpu.memory_space<vmem>>, %arg5: memref<1x256xf32, #tpu.memory_space<vmem>>, %arg6: memref<32x256xbf16, #tpu.memory_space<vmem>>, %arg7: memref<1x256xf32, #tpu.memory_space<vmem>>, %arg8: memref<1x256xf32, #tpu.memory_space<vmem>>, %arg9: memref<32x256xbf16, #tpu.memory_space<vmem>>) attributes {dimension_semantics = [#tpu.dimension_semantics<parallel>], iteration_bounds = array<i64: 1>, scalar_prefetch = 0 : i64, scratch_operands = 0 : i64, tpu.core_type = #tpu.core_type<tc>, window_params = [{transform_indices = @transform_0, window_bounds = array<i64: 32, 256>}, {pipeline_mode = #tpu.pipeline_mode<synchronous>, transform_indices = @transform_1, window_bounds = array<i64: 256, 512>}, {pipeline_mode = #tpu.pipeline_mode<synchronous>, transform_indices = @transform_2, window_bounds = array<i64: 1, 512>}, {pipeline_mode = #tpu.pipeline_mode<synchronous>, transform_indices = @transform_3, window_bounds = array<i64: 512, 256>}, {pipeline_mode = #tpu.pipeline_mode<synchronous>, transform_indices = @transform_4, window_bounds = array<i64: 1, 256>}, {transform_indices = @transform_5, window_bounds = array<i64: 32, 256>}, {pipeline_mode = #tpu.pipeline_mode<synchronous>, transform_indices = @transform_6, window_bounds = array<i64: 1, 256>}, {pipeline_mode = #tpu.pipeline_mode<synchronous>, transform_indices = @transform_7, window_bounds = array<i64: 1, 256>}, {transform_indices = @transform_8, window_bounds = array<i64: 32, 256>}]} {
    %c0 = arith.constant 0 : index
    %c0_0 = arith.constant 0 : index
    %0 = vector.load %arg1[%c0, %c0_0] : memref<32x256xbf16, #tpu.memory_space<vmem>>, vector<32x256xbf16>
    %c0_1 = arith.constant 0 : index
    %c0_2 = arith.constant 0 : index
    %1 = vector.load %arg2[%c0_1, %c0_2] : memref<256x512xbf16, #tpu.memory_space<vmem>>, vector<256x512xbf16>
    %cst = arith.constant dense<0.000000e+00> : vector<32x512xf32>
    %2 = tpu.matmul %0, %1, %cst {dimension_numbers = #tpu.dot_dimension_numbers<[1], [0], [0], [1], [0, 0, 1, 1], [], []>} : vector<32x256xbf16>, vector<256x512xbf16>, vector<32x512xf32> -> vector<32x512xf32>
    %c0_3 = arith.constant 0 : index
    %c0_4 = arith.constant 0 : index
    %3 = vector.load %arg3[%c0_3, %c0_4] : memref<1x512xf32, #tpu.memory_space<vmem>>, vector<1x512xf32>
    %4 = vector.broadcast %3 : vector<1x512xf32> to vector<32x512xf32>
    %5 = arith.addf %2, %4 : vector<32x512xf32>
    %cst_5 = arith.constant 0.000000e+00 : f32
    %6 = vector.broadcast %cst_5 : f32 to vector<32x512xf32>
    %7 = arith.maximumf %5, %6 : vector<32x512xf32>
    %8 = arith.truncf %7 : vector<32x512xf32> to vector<32x512xbf16>
    %c0_6 = arith.constant 0 : index
    %c0_7 = arith.constant 0 : index
    %9 = vector.load %arg4[%c0_6, %c0_7] : memref<512x256xbf16, #tpu.memory_space<vmem>>, vector<512x256xbf16>
    %cst_8 = arith.constant dense<0.000000e+00> : vector<32x256xf32>
    %10 = tpu.matmul %8, %9, %cst_8 {dimension_numbers = #tpu.dot_dimension_numbers<[1], [0], [0], [1], [0, 0, 1, 1], [], []>} : vector<32x512xbf16>, vector<512x256xbf16>, vector<32x256xf32> -> vector<32x256xf32>
    %c0_9 = arith.constant 0 : index
    %c0_10 = arith.constant 0 : index
    %11 = vector.load %arg5[%c0_9, %c0_10] : memref<1x256xf32, #tpu.memory_space<vmem>>, vector<1x256xf32>
    %12 = vector.broadcast %11 : vector<1x256xf32> to vector<32x256xf32>
    %13 = arith.addf %10, %12 : vector<32x256xf32>
    %c0_11 = arith.constant 0 : index
    %c0_12 = arith.constant 0 : index
    %14 = vector.load %arg6[%c0_11, %c0_12] : memref<32x256xbf16, #tpu.memory_space<vmem>>, vector<32x256xbf16>
    %15 = arith.extf %14 : vector<32x256xbf16> to vector<32x256xf32>
    %16 = arith.addf %13, %15 : vector<32x256xf32>
    %cst_13 = arith.constant dense<0.000000e+00> : vector<32xf32>
    %17 = vector.multi_reduction <add>, %16, %cst_13 [1] : vector<32x256xf32> to vector<32xf32>
    %18 = vector.shape_cast %17 : vector<32xf32> to vector<32x1xf32>
    %cst_14 = arith.constant 2.560000e+02 : f32
    %19 = vector.broadcast %cst_14 : f32 to vector<32x1xf32>
    %20 = arith.divf %18, %19 : vector<32x1xf32>
    %21 = vector.broadcast %20 : vector<32x1xf32> to vector<32x256xf32>
    %22 = arith.subf %16, %21 : vector<32x256xf32>
    %23 = arith.mulf %22, %22 : vector<32x256xf32>
    %cst_15 = arith.constant dense<0.000000e+00> : vector<32xf32>
    %24 = vector.multi_reduction <add>, %23, %cst_15 [1] : vector<32x256xf32> to vector<32xf32>
    %25 = vector.shape_cast %24 : vector<32xf32> to vector<32x1xf32>
    %cst_16 = arith.constant 2.560000e+02 : f32
    %26 = vector.broadcast %cst_16 : f32 to vector<32x1xf32>
    %27 = arith.divf %25, %26 : vector<32x1xf32>
    %28 = vector.broadcast %20 : vector<32x1xf32> to vector<32x256xf32>
    %29 = arith.subf %16, %28 : vector<32x256xf32>
    %cst_17 = arith.constant 9.99999974E-6 : f32
    %30 = vector.broadcast %cst_17 : f32 to vector<32x1xf32>
    %31 = arith.addf %27, %30 : vector<32x1xf32>
    %32 = math.rsqrt %31 : vector<32x1xf32>
    %33 = vector.broadcast %32 : vector<32x1xf32> to vector<32x256xf32>
    %34 = arith.mulf %29, %33 : vector<32x256xf32>
    %c0_18 = arith.constant 0 : index
    %c0_19 = arith.constant 0 : index
    %35 = vector.load %arg7[%c0_18, %c0_19] : memref<1x256xf32, #tpu.memory_space<vmem>>, vector<1x256xf32>
    %36 = vector.broadcast %35 : vector<1x256xf32> to vector<32x256xf32>
    %37 = arith.mulf %34, %36 : vector<32x256xf32>
    %c0_20 = arith.constant 0 : index
    %c0_21 = arith.constant 0 : index
    %38 = vector.load %arg8[%c0_20, %c0_21] : memref<1x256xf32, #tpu.memory_space<vmem>>, vector<1x256xf32>
    %39 = vector.broadcast %38 : vector<1x256xf32> to vector<32x256xf32>
    %40 = arith.addf %37, %39 : vector<32x256xf32>
    %41 = arith.truncf %40 : vector<32x256xf32> to vector<32x256xbf16>
    %c0_22 = arith.constant 0 : index
    %c0_23 = arith.constant 0 : index
    %42 = vector.load %arg9[%c0_22, %c0_23] : memref<32x256xbf16, #tpu.memory_space<vmem>>, vector<32x256xbf16>
    tpu.vector_store %arg9[%c0_22, %c0_23], %41 {strides = array<i32>} : memref<32x256xbf16, #tpu.memory_space<vmem>>, vector<32x256xbf16>,
    return
  }
  func.func @transform_0(%arg0: i32) -> (i32, i32) {
    %c0_i32 = arith.constant 0 : i32
    %c0_i32_0 = arith.constant 0 : i32
    return %arg0, %c0_i32 : i32, i32
  }
  func.func @transform_1(%arg0: i32) -> (i32, i32) {
    %c0_i32 = arith.constant 0 : i32
    %c0_i32_0 = arith.constant 0 : i32
    %c0_i32_1 = arith.constant 0 : i32
    return %c0_i32, %c0_i32_0 : i32, i32
  }
  func.func @transform_2(%arg0: i32) -> (i32, i32) {
    %c0_i32 = arith.constant 0 : i32
    %c0_i32_0 = arith.constant 0 : i32
    %c0_i32_1 = arith.constant 0 : i32
    return %c0_i32, %c0_i32_0 : i32, i32
  }
  func.func @transform_3(%arg0: i32) -> (i32, i32) {
    %c0_i32 = arith.constant 0 : i32
    %c0_i32_0 = arith.constant 0 : i32
    %c0_i32_1 = arith.constant 0 : i32
    return %c0_i32, %c0_i32_0 : i32, i32
  }
  func.func @transform_4(%arg0: i32) -> (i32, i32) {
    %c0_i32 = arith.constant 0 : i32
    %c0_i32_0 = arith.constant 0 : i32
    %c0_i32_1 = arith.constant 0 : i32
    return %c0_i32, %c0_i32_0 : i32, i32
  }
  func.func @transform_5(%arg0: i32) -> (i32, i32) {
    %c0_i32 = arith.constant 0 : i32
    %c0_i32_0 = arith.constant 0 : i32
    return %arg0, %c0_i32 : i32, i32
  }
  func.func @transform_6(%arg0: i32) -> (i32, i32) {
    %c0_i32 = arith.constant 0 : i32
    %c0_i32_0 = arith.constant 0 : i32
    %c0_i32_1 = arith.constant 0 : i32
    return %c0_i32, %c0_i32_0 : i32, i32
  }
  func.func @transform_7(%arg0: i32) -> (i32, i32) {
    %c0_i32 = arith.constant 0 : i32
    %c0_i32_0 = arith.constant 0 : i32
    %c0_i32_1 = arith.constant 0 : i32
    return %c0_i32, %c0_i32_0 : i32, i32
  }
  func.func @transform_8(%arg0: i32) -> (i32, i32) {
    %c0_i32 = arith.constant 0 : i32
    %c0_i32_0 = arith.constant 0 : i32
    return %arg0, %c0_i32 : i32, i32
  }
}

module attributes {stable_mosaic.version = 11 : i64} {
  func.func @_ln_kernel(%arg0: i32, %arg1: memref<32x256xbf16, #tpu.memory_space<vmem>>, %arg2: memref<1x256xf32, #tpu.memory_space<vmem>>, %arg3: memref<1x256xf32, #tpu.memory_space<vmem>>, %arg4: memref<32x256xbf16, #tpu.memory_space<vmem>>) attributes {dimension_semantics = [#tpu.dimension_semantics<parallel>], iteration_bounds = array<i64: 1>, scalar_prefetch = 0 : i64, scratch_operands = 0 : i64, tpu.core_type = #tpu.core_type<tc>, window_params = [{transform_indices = @transform_0, window_bounds = array<i64: 32, 256>}, {pipeline_mode = #tpu.pipeline_mode<synchronous>, transform_indices = @transform_1, window_bounds = array<i64: 1, 256>}, {pipeline_mode = #tpu.pipeline_mode<synchronous>, transform_indices = @transform_2, window_bounds = array<i64: 1, 256>}, {transform_indices = @transform_3, window_bounds = array<i64: 32, 256>}]} {
    %c0 = arith.constant 0 : index
    %c0_0 = arith.constant 0 : index
    %0 = vector.load %arg1[%c0, %c0_0] : memref<32x256xbf16, #tpu.memory_space<vmem>>, vector<32x256xbf16>
    %1 = arith.extf %0 : vector<32x256xbf16> to vector<32x256xf32>
    %cst = arith.constant dense<0.000000e+00> : vector<32xf32>
    %2 = vector.multi_reduction <add>, %1, %cst [1] : vector<32x256xf32> to vector<32xf32>
    %3 = vector.shape_cast %2 : vector<32xf32> to vector<32x1xf32>
    %cst_1 = arith.constant 2.560000e+02 : f32
    %4 = vector.broadcast %cst_1 : f32 to vector<32x1xf32>
    %5 = arith.divf %3, %4 : vector<32x1xf32>
    %6 = vector.broadcast %5 : vector<32x1xf32> to vector<32x256xf32>
    %7 = arith.subf %1, %6 : vector<32x256xf32>
    %8 = arith.mulf %7, %7 : vector<32x256xf32>
    %cst_2 = arith.constant dense<0.000000e+00> : vector<32xf32>
    %9 = vector.multi_reduction <add>, %8, %cst_2 [1] : vector<32x256xf32> to vector<32xf32>
    %10 = vector.shape_cast %9 : vector<32xf32> to vector<32x1xf32>
    %cst_3 = arith.constant 2.560000e+02 : f32
    %11 = vector.broadcast %cst_3 : f32 to vector<32x1xf32>
    %12 = arith.divf %10, %11 : vector<32x1xf32>
    %13 = vector.broadcast %5 : vector<32x1xf32> to vector<32x256xf32>
    %14 = arith.subf %1, %13 : vector<32x256xf32>
    %cst_4 = arith.constant 9.99999974E-6 : f32
    %15 = vector.broadcast %cst_4 : f32 to vector<32x1xf32>
    %16 = arith.addf %12, %15 : vector<32x1xf32>
    %17 = math.rsqrt %16 : vector<32x1xf32>
    %18 = vector.broadcast %17 : vector<32x1xf32> to vector<32x256xf32>
    %19 = arith.mulf %14, %18 : vector<32x256xf32>
    %c0_5 = arith.constant 0 : index
    %c0_6 = arith.constant 0 : index
    %20 = vector.load %arg2[%c0_5, %c0_6] : memref<1x256xf32, #tpu.memory_space<vmem>>, vector<1x256xf32>
    %21 = vector.broadcast %20 : vector<1x256xf32> to vector<32x256xf32>
    %22 = arith.mulf %19, %21 : vector<32x256xf32>
    %c0_7 = arith.constant 0 : index
    %c0_8 = arith.constant 0 : index
    %23 = vector.load %arg3[%c0_7, %c0_8] : memref<1x256xf32, #tpu.memory_space<vmem>>, vector<1x256xf32>
    %24 = vector.broadcast %23 : vector<1x256xf32> to vector<32x256xf32>
    %25 = arith.addf %22, %24 : vector<32x256xf32>
    %26 = arith.truncf %25 : vector<32x256xf32> to vector<32x256xbf16>
    %c0_9 = arith.constant 0 : index
    %c0_10 = arith.constant 0 : index
    %27 = vector.load %arg4[%c0_9, %c0_10] : memref<32x256xbf16, #tpu.memory_space<vmem>>, vector<32x256xbf16>
    tpu.vector_store %arg4[%c0_9, %c0_10], %26 {strides = array<i32>} : memref<32x256xbf16, #tpu.memory_space<vmem>>, vector<32x256xbf16>,
    return
  }
  func.func @transform_0(%arg0: i32) -> (i32, i32) {
    %c0_i32 = arith.constant 0 : i32
    %c0_i32_0 = arith.constant 0 : i32
    return %arg0, %c0_i32 : i32, i32
  }
  func.func @transform_1(%arg0: i32) -> (i32, i32) {
    %c0_i32 = arith.constant 0 : i32
    %c0_i32_0 = arith.constant 0 : i32
    %c0_i32_1 = arith.constant 0 : i32
    return %c0_i32, %c0_i32_0 : i32, i32
  }
  func.func @transform_2(%arg0: i32) -> (i32, i32) {
    %c0_i32 = arith.constant 0 : i32
    %c0_i32_0 = arith.constant 0 : i32
    %c0_i32_1 = arith.constant 0 : i32
    return %c0_i32, %c0_i32_0 : i32, i32
  }
  func.func @transform_3(%arg0: i32) -> (i32, i32) {
    %c0_i32 = arith.constant 0 : i32
    %c0_i32_0 = arith.constant 0 : i32
    return %arg0, %c0_i32 : i32, i32
  }
}

module attributes {stable_mosaic.version = 11 : i64} {
  func.func @_mha_kernel(%arg0: i32, %arg1: memref<1x16x256xbf16, #tpu.memory_space<vmem>>, %arg2: memref<1x16x512xbf16, #tpu.memory_space<vmem>>, %arg3: memref<1x1x16xf32, #tpu.memory_space<vmem>>, %arg4: memref<1x16x256xbf16, #tpu.memory_space<vmem>>) attributes {dimension_semantics = [#tpu.dimension_semantics<parallel>], iteration_bounds = array<i64: 2>, scalar_prefetch = 0 : i64, scratch_operands = 0 : i64, tpu.core_type = #tpu.core_type<tc>, window_params = [{transform_indices = @transform_0, window_bounds = array<i64: 1, 16, 256>}, {transform_indices = @transform_1, window_bounds = array<i64: 1, 16, 512>}, {transform_indices = @transform_2, window_bounds = array<i64: 1, 1, 16>}, {transform_indices = @transform_3, window_bounds = array<i64: 1, 16, 256>}]} {
    %c0 = arith.constant 0 : index
    %c0_0 = arith.constant 0 : index
    %c0_1 = arith.constant 0 : index
    %0 = vector.load %arg3[%c0, %c0_0, %c0_1] : memref<1x1x16xf32, #tpu.memory_space<vmem>>, vector<1x1x16xf32>
    %1 = vector.shape_cast %0 : vector<1x1x16xf32> to vector<1x16xf32>
    %2 = tpu.iota {dimensions = array<i32: 0>} : vector<16x16xi32>
    %3 = tpu.iota {dimensions = array<i32: 1>} : vector<16x16xi32>
    %4 = arith.cmpi sgt, %3, %2 : vector<16x16xi32>
    %cst = arith.constant -1.000000e+30 : f32
    %cst_2 = arith.constant 0.000000e+00 : f32
    %5 = vector.broadcast %cst : f32 to vector<16x16xf32>
    %6 = vector.broadcast %cst_2 : f32 to vector<16x16xf32>
    %7 = arith.select %4, %5, %6 : vector<16x16xi1>, vector<16x16xf32>
    %8 = vector.broadcast %1 : vector<1x16xf32> to vector<16x16xf32>
    %9 = arith.addf %8, %7 : vector<16x16xf32>
    %c0_3 = arith.constant 0 : index
    %c0_4 = arith.constant 0 : index
    %c0_5 = arith.constant 0 : index
    %10 = vector.load %arg1[%c0_3, %c0_4, %c0_5] : memref<1x16x256xbf16, #tpu.memory_space<vmem>>, vector<1x16x128xbf16>
    %11 = vector.shape_cast %10 : vector<1x16x128xbf16> to vector<16x128xbf16>
    %c0_6 = arith.constant 0 : index
    %c0_7 = arith.constant 0 : index
    %c0_8 = arith.constant 0 : index
    %12 = vector.load %arg2[%c0_6, %c0_7, %c0_8] : memref<1x16x512xbf16, #tpu.memory_space<vmem>>, vector<1x16x128xbf16>
    %13 = vector.shape_cast %12 : vector<1x16x128xbf16> to vector<16x128xbf16>
    %c0_9 = arith.constant 0 : index
    %c0_10 = arith.constant 0 : index
    %c256 = arith.constant 256 : index
    %14 = vector.load %arg2[%c0_9, %c0_10, %c256] : memref<1x16x512xbf16, #tpu.memory_space<vmem>>, vector<1x16x128xbf16>
    %15 = vector.shape_cast %14 : vector<1x16x128xbf16> to vector<16x128xbf16>
    %cst_11 = arith.constant dense<0.000000e+00> : vector<16x16xf32>
    %16 = tpu.matmul %11, %13, %cst_11 {dimension_numbers = #tpu.dot_dimension_numbers<[1], [1], [0], [0], [0, 0, 1, 0], [], []>} : vector<16x128xbf16>, vector<16x128xbf16>, vector<16x16xf32> -> vector<16x16xf32>
    %cst_12 = arith.constant 0.0883883461 : f32
    %17 = vector.broadcast %cst_12 : f32 to vector<16x16xf32>
    %18 = arith.mulf %16, %17 : vector<16x16xf32>
    %19 = arith.addf %18, %9 : vector<16x16xf32>
    %cst_13 = arith.constant dense<0xFF800000> : vector<16xf32>
    %20 = vector.multi_reduction <maximumf>, %19, %cst_13 [1] : vector<16x16xf32> to vector<16xf32>
    %21 = vector.shape_cast %20 : vector<16xf32> to vector<16x1xf32>
    %22 = vector.broadcast %21 : vector<16x1xf32> to vector<16x16xf32>
    %23 = arith.subf %19, %22 : vector<16x16xf32>
    %24 = math.exp %23 : vector<16x16xf32>
    %cst_14 = arith.constant dense<0.000000e+00> : vector<16xf32>
    %25 = vector.multi_reduction <add>, %24, %cst_14 [1] : vector<16x16xf32> to vector<16xf32>
    %26 = vector.shape_cast %25 : vector<16xf32> to vector<16x1xf32>
    %27 = tpu.reciprocal %26 {approx = true} : vector<16x1xf32> -> vector<16x1xf32>
    %28 = vector.broadcast %27 : vector<16x1xf32> to vector<16x16xf32>
    %29 = arith.mulf %24, %28 : vector<16x16xf32>
    %30 = arith.truncf %29 : vector<16x16xf32> to vector<16x16xbf16>
    %cst_15 = arith.constant dense<0.000000e+00> : vector<16x128xf32>
    %31 = tpu.matmul %30, %15, %cst_15 {dimension_numbers = #tpu.dot_dimension_numbers<[1], [0], [0], [1], [0, 0, 1, 1], [], []>} : vector<16x16xbf16>, vector<16x128xbf16>, vector<16x128xf32> -> vector<16x128xf32>
    %c0_16 = arith.constant 0 : index
    %c0_17 = arith.constant 0 : index
    %c128 = arith.constant 128 : index
    %32 = vector.load %arg1[%c0_16, %c0_17, %c128] : memref<1x16x256xbf16, #tpu.memory_space<vmem>>, vector<1x16x128xbf16>
    %33 = vector.shape_cast %32 : vector<1x16x128xbf16> to vector<16x128xbf16>
    %c0_18 = arith.constant 0 : index
    %c0_19 = arith.constant 0 : index
    %c128_20 = arith.constant 128 : index
    %34 = vector.load %arg2[%c0_18, %c0_19, %c128_20] : memref<1x16x512xbf16, #tpu.memory_space<vmem>>, vector<1x16x128xbf16>
    %35 = vector.shape_cast %34 : vector<1x16x128xbf16> to vector<16x128xbf16>
    %c0_21 = arith.constant 0 : index
    %c0_22 = arith.constant 0 : index
    %c384 = arith.constant 384 : index
    %36 = vector.load %arg2[%c0_21, %c0_22, %c384] : memref<1x16x512xbf16, #tpu.memory_space<vmem>>, vector<1x16x128xbf16>
    %37 = vector.shape_cast %36 : vector<1x16x128xbf16> to vector<16x128xbf16>
    %cst_23 = arith.constant dense<0.000000e+00> : vector<16x16xf32>
    %38 = tpu.matmul %33, %35, %cst_23 {dimension_numbers = #tpu.dot_dimension_numbers<[1], [1], [0], [0], [0, 0, 1, 0], [], []>} : vector<16x128xbf16>, vector<16x128xbf16>, vector<16x16xf32> -> vector<16x16xf32>
    %cst_24 = arith.constant 0.0883883461 : f32
    %39 = vector.broadcast %cst_24 : f32 to vector<16x16xf32>
    %40 = arith.mulf %38, %39 : vector<16x16xf32>
    %41 = arith.addf %40, %9 : vector<16x16xf32>
    %cst_25 = arith.constant dense<0xFF800000> : vector<16xf32>
    %42 = vector.multi_reduction <maximumf>, %41, %cst_25 [1] : vector<16x16xf32> to vector<16xf32>
    %43 = vector.shape_cast %42 : vector<16xf32> to vector<16x1xf32>
    %44 = vector.broadcast %43 : vector<16x1xf32> to vector<16x16xf32>
    %45 = arith.subf %41, %44 : vector<16x16xf32>
    %46 = math.exp %45 : vector<16x16xf32>
    %cst_26 = arith.constant dense<0.000000e+00> : vector<16xf32>
    %47 = vector.multi_reduction <add>, %46, %cst_26 [1] : vector<16x16xf32> to vector<16xf32>
    %48 = vector.shape_cast %47 : vector<16xf32> to vector<16x1xf32>
    %49 = tpu.reciprocal %48 {approx = true} : vector<16x1xf32> -> vector<16x1xf32>
    %50 = vector.broadcast %49 : vector<16x1xf32> to vector<16x16xf32>
    %51 = arith.mulf %46, %50 : vector<16x16xf32>
    %52 = arith.truncf %51 : vector<16x16xf32> to vector<16x16xbf16>
    %cst_27 = arith.constant dense<0.000000e+00> : vector<16x128xf32>
    %53 = tpu.matmul %52, %37, %cst_27 {dimension_numbers = #tpu.dot_dimension_numbers<[1], [0], [0], [1], [0, 0, 1, 1], [], []>} : vector<16x16xbf16>, vector<16x128xbf16>, vector<16x128xf32> -> vector<16x128xf32>
    %54 = tpu.concatenate %31, %53 in 1 : vector<16x128xf32>, vector<16x128xf32> -> vector<16x256xf32>
    %55 = arith.truncf %54 : vector<16x256xf32> to vector<16x256xbf16>
    %c0_28 = arith.constant 0 : index
    %c0_29 = arith.constant 0 : index
    %c0_30 = arith.constant 0 : index
    %56 = vector.load %arg4[%c0_28, %c0_29, %c0_30] : memref<1x16x256xbf16, #tpu.memory_space<vmem>>, vector<1x16x256xbf16>
    %57 = vector.shape_cast %56 : vector<1x16x256xbf16> to vector<16x256xbf16>
    %58 = vector.shape_cast %55 : vector<16x256xbf16> to vector<1x16x256xbf16>
    tpu.vector_store %arg4[%c0_28, %c0_29, %c0_30], %58 {strides = array<i32>} : memref<1x16x256xbf16, #tpu.memory_space<vmem>>, vector<1x16x256xbf16>,
    return
  }
  func.func @transform_0(%arg0: i32) -> (i32, i32, i32) {
    %c0_i32 = arith.constant 0 : i32
    %c0_i32_0 = arith.constant 0 : i32
    %c0_i32_1 = arith.constant 0 : i32
    return %arg0, %c0_i32, %c0_i32_0 : i32, i32, i32
  }
  func.func @transform_1(%arg0: i32) -> (i32, i32, i32) {
    %c0_i32 = arith.constant 0 : i32
    %c0_i32_0 = arith.constant 0 : i32
    %c0_i32_1 = arith.constant 0 : i32
    return %arg0, %c0_i32, %c0_i32_0 : i32, i32, i32
  }
  func.func @transform_2(%arg0: i32) -> (i32, i32, i32) {
    %c0_i32 = arith.constant 0 : i32
    %c0_i32_0 = arith.constant 0 : i32
    %c0_i32_1 = arith.constant 0 : i32
    return %arg0, %c0_i32, %c0_i32_0 : i32, i32, i32
  }
  func.func @transform_3(%arg0: i32) -> (i32, i32, i32) {
    %c0_i32 = arith.constant 0 : i32
    %c0_i32_0 = arith.constant 0 : i32
    %c0_i32_1 = arith.constant 0 : i32
    return %arg0, %c0_i32, %c0_i32_0 : i32, i32, i32
  }
}

module attributes {stable_mosaic.version = 11 : i64} {
  func.func @_norm_gen_logsoftmax_kernel(%arg0: i32, %arg1: memref<32x256xbf16, #tpu.memory_space<vmem>>, %arg2: memref<1x256xf32, #tpu.memory_space<vmem>>, %arg3: memref<1x256xf32, #tpu.memory_space<vmem>>, %arg4: memref<256x512xbf16, #tpu.memory_space<vmem>>, %arg5: memref<1x512xf32, #tpu.memory_space<vmem>>, %arg6: memref<32x512xf32, #tpu.memory_space<vmem>>) attributes {dimension_semantics = [#tpu.dimension_semantics<parallel>], iteration_bounds = array<i64: 1>, scalar_prefetch = 0 : i64, scratch_operands = 0 : i64, tpu.core_type = #tpu.core_type<tc>, window_params = [{transform_indices = @transform_0, window_bounds = array<i64: 32, 256>}, {pipeline_mode = #tpu.pipeline_mode<synchronous>, transform_indices = @transform_1, window_bounds = array<i64: 1, 256>}, {pipeline_mode = #tpu.pipeline_mode<synchronous>, transform_indices = @transform_2, window_bounds = array<i64: 1, 256>}, {pipeline_mode = #tpu.pipeline_mode<synchronous>, transform_indices = @transform_3, window_bounds = array<i64: 256, 512>}, {pipeline_mode = #tpu.pipeline_mode<synchronous>, transform_indices = @transform_4, window_bounds = array<i64: 1, 512>}, {transform_indices = @transform_5, window_bounds = array<i64: 32, 512>}]} {
    %c0 = arith.constant 0 : index
    %c0_0 = arith.constant 0 : index
    %0 = vector.load %arg1[%c0, %c0_0] : memref<32x256xbf16, #tpu.memory_space<vmem>>, vector<32x256xbf16>
    %1 = arith.extf %0 : vector<32x256xbf16> to vector<32x256xf32>
    %cst = arith.constant dense<0.000000e+00> : vector<32xf32>
    %2 = vector.multi_reduction <add>, %1, %cst [1] : vector<32x256xf32> to vector<32xf32>
    %3 = vector.shape_cast %2 : vector<32xf32> to vector<32x1xf32>
    %cst_1 = arith.constant 2.560000e+02 : f32
    %4 = vector.broadcast %cst_1 : f32 to vector<32x1xf32>
    %5 = arith.divf %3, %4 : vector<32x1xf32>
    %6 = vector.broadcast %5 : vector<32x1xf32> to vector<32x256xf32>
    %7 = arith.subf %1, %6 : vector<32x256xf32>
    %8 = arith.mulf %7, %7 : vector<32x256xf32>
    %cst_2 = arith.constant dense<0.000000e+00> : vector<32xf32>
    %9 = vector.multi_reduction <add>, %8, %cst_2 [1] : vector<32x256xf32> to vector<32xf32>
    %10 = vector.shape_cast %9 : vector<32xf32> to vector<32x1xf32>
    %cst_3 = arith.constant 2.560000e+02 : f32
    %11 = vector.broadcast %cst_3 : f32 to vector<32x1xf32>
    %12 = arith.divf %10, %11 : vector<32x1xf32>
    %13 = vector.broadcast %5 : vector<32x1xf32> to vector<32x256xf32>
    %14 = arith.subf %1, %13 : vector<32x256xf32>
    %cst_4 = arith.constant 9.99999974E-6 : f32
    %15 = vector.broadcast %cst_4 : f32 to vector<32x1xf32>
    %16 = arith.addf %12, %15 : vector<32x1xf32>
    %17 = math.rsqrt %16 : vector<32x1xf32>
    %18 = vector.broadcast %17 : vector<32x1xf32> to vector<32x256xf32>
    %19 = arith.mulf %14, %18 : vector<32x256xf32>
    %c0_5 = arith.constant 0 : index
    %c0_6 = arith.constant 0 : index
    %20 = vector.load %arg2[%c0_5, %c0_6] : memref<1x256xf32, #tpu.memory_space<vmem>>, vector<1x256xf32>
    %21 = vector.broadcast %20 : vector<1x256xf32> to vector<32x256xf32>
    %22 = arith.mulf %19, %21 : vector<32x256xf32>
    %c0_7 = arith.constant 0 : index
    %c0_8 = arith.constant 0 : index
    %23 = vector.load %arg3[%c0_7, %c0_8] : memref<1x256xf32, #tpu.memory_space<vmem>>, vector<1x256xf32>
    %24 = vector.broadcast %23 : vector<1x256xf32> to vector<32x256xf32>
    %25 = arith.addf %22, %24 : vector<32x256xf32>
    %26 = arith.truncf %25 : vector<32x256xf32> to vector<32x256xbf16>
    %c0_9 = arith.constant 0 : index
    %c0_10 = arith.constant 0 : index
    %27 = vector.load %arg4[%c0_9, %c0_10] : memref<256x512xbf16, #tpu.memory_space<vmem>>, vector<256x512xbf16>
    %cst_11 = arith.constant dense<0.000000e+00> : vector<32x512xf32>
    %28 = tpu.matmul %26, %27, %cst_11 {dimension_numbers = #tpu.dot_dimension_numbers<[1], [0], [0], [1], [0, 0, 1, 1], [], []>} : vector<32x256xbf16>, vector<256x512xbf16>, vector<32x512xf32> -> vector<32x512xf32>
    %c0_12 = arith.constant 0 : index
    %c0_13 = arith.constant 0 : index
    %29 = vector.load %arg5[%c0_12, %c0_13] : memref<1x512xf32, #tpu.memory_space<vmem>>, vector<1x512xf32>
    %30 = vector.broadcast %29 : vector<1x512xf32> to vector<32x512xf32>
    %31 = arith.addf %28, %30 : vector<32x512xf32>
    %cst_14 = arith.constant dense<0xFF800000> : vector<32xf32>
    %32 = vector.multi_reduction <maximumf>, %31, %cst_14 [1] : vector<32x512xf32> to vector<32xf32>
    %33 = vector.shape_cast %32 : vector<32xf32> to vector<32x1xf32>
    %34 = vector.broadcast %33 : vector<32x1xf32> to vector<32x512xf32>
    %35 = arith.subf %31, %34 : vector<32x512xf32>
    %36 = math.exp %35 : vector<32x512xf32>
    %cst_15 = arith.constant dense<0.000000e+00> : vector<32xf32>
    %37 = vector.multi_reduction <add>, %36, %cst_15 [1] : vector<32x512xf32> to vector<32xf32>
    %38 = vector.shape_cast %37 : vector<32xf32> to vector<32x1xf32>
    %39 = math.log %38 : vector<32x1xf32>
    %40 = vector.broadcast %39 : vector<32x1xf32> to vector<32x512xf32>
    %41 = arith.subf %35, %40 : vector<32x512xf32>
    %c0_16 = arith.constant 0 : index
    %c0_17 = arith.constant 0 : index
    %42 = vector.load %arg6[%c0_16, %c0_17] : memref<32x512xf32, #tpu.memory_space<vmem>>, vector<32x512xf32>
    tpu.vector_store %arg6[%c0_16, %c0_17], %41 {strides = array<i32>} : memref<32x512xf32, #tpu.memory_space<vmem>>, vector<32x512xf32>,
    return
  }
  func.func @transform_0(%arg0: i32) -> (i32, i32) {
    %c0_i32 = arith.constant 0 : i32
    %c0_i32_0 = arith.constant 0 : i32
    return %arg0, %c0_i32 : i32, i32
  }
  func.func @transform_1(%arg0: i32) -> (i32, i32) {
    %c0_i32 = arith.constant 0 : i32
    %c0_i32_0 = arith.constant 0 : i32
    %c0_i32_1 = arith.constant 0 : i32
    return %c0_i32, %c0_i32_0 : i32, i32
  }
  func.func @transform_2(%arg0: i32) -> (i32, i32) {
    %c0_i32 = arith.constant 0 : i32
    %c0_i32_0 = arith.constant 0 : i32
    %c0_i32_1 = arith.constant 0 : i32
    return %c0_i32, %c0_i32_0 : i32, i32
  }
  func.func @transform_3(%arg0: i32) -> (i32, i32) {
    %c0_i32 = arith.constant 0 : i32
    %c0_i32_0 = arith.constant 0 : i32
    %c0_i32_1 = arith.constant 0 : i32
    return %c0_i32, %c0_i32_0 : i32, i32
  }
  func.func @transform_4(%arg0: i32) -> (i32, i32) {
    %c0_i32 = arith.constant 0 : i32
    %c0_i32_0 = arith.constant 0 : i32
    %c0_i32_1 = arith.constant 0 : i32
    return %c0_i32, %c0_i32_0 : i32, i32
  }
  func.func @transform_5(%arg0: i32) -> (i32, i32) {
    %c0_i32 = arith.constant 0 : i32
    %c0_i32_0 = arith.constant 0 : i32
    return %arg0, %c0_i32 : i32, i32
  }
}

</mosaic_0001>

<llo_original>
// kernel: transformer_forward.30
$region0: #{transformer_forward.30}
  #allocation0 [shape = 'u32[]', space=smem, size = 0x4, offset = 0x4, fixed_abs, tag = 'smem constant byte address 0x4 - core index']
  #allocation1 [shape = 'u32[144,128]{1,0:T(1,128)}', space=vmem, size = 0x12000, scoped, tag = 'internal scratch']
  #allocation2 [shape = 'f32[32,256]{1,0:T(8,128)}', space=vmem, size = 0x8000, scoped, tag = 'scratch operand']
  %s0 = inlined_call_operand.vmem [shape: bf16[32,256], index: 0, kind: input, shape index: {}]
  %s1 = inlined_call_operand.vmem [shape: bf16[256,256], index: 1, kind: input, shape index: {}]
  %s2 = inlined_call_operand.vmem [shape: f32[1,256], index: 2, kind: input, shape index: {}]
  %s3 = inlined_call_operand.vmem [shape: bf16[32,256], index: 3, kind: output, shape index: {}]
  %s4 = sld [smem:[#allocation0]]
  $region30: #{transformer_forward.30} parent=0
    _
  %s6 = ssub.s32 1, %s4
  %s7 = scalar_select 0, %s6, %s4
  // Predicated region
  $region2: #{transformer_forward.30} parent=0 // pred_check
    _
  $region3: #{transformer_forward.30} parent=0 // pred_check_branch
    %9 = sbr.rel (0) target = $region5
  $region4: #{transformer_forward.30} parent=0 // pred_region
    _
  $region5: #{transformer_forward.30} parent=0 // pred_fallthru
    _
  // Predicated region
  $region6: #{transformer_forward.30} parent=0 // pred_check
    _
  $region7: #{transformer_forward.30} parent=0 // pred_check_branch
    %11 = sbr.rel (0) target = $region9
  $region8: #{transformer_forward.30} parent=0 // pred_region
    _
  $region9: #{transformer_forward.30} parent=0 // pred_fallthru
    _
  // Predicated region
  $region10: #{transformer_forward.30} parent=0 // pred_check
    _
  $region11: #{transformer_forward.30} parent=0 // pred_check_branch
    %13 = sbr.rel (0) target = $region13
  $region12: #{transformer_forward.30} parent=0 // pred_region
    _
  $region13: #{transformer_forward.30} parent=0 // pred_fallthru
    _
  %p14 = scmp.eq.s32.totalorder 0, 0
  // Predicated region
  $region14: #{transformer_forward.30} parent=0 // pred_check
    %p15 = pneg %p14
  $region15: #{transformer_forward.30} parent=0 // pred_check_branch
    %17 = sbr.rel (%p15) target = $region17
  $region16: #{transformer_forward.30} parent=0 // pred_region
    %18 = vst [vmem:[#allocation2] sm:$0xff] 0.0
    %19 = vst [vmem:[#allocation2 + $0x8] sm:$0xff] 0.0
    %20 = vst [vmem:[#allocation2 + $0x10] sm:$0xff] 0.0
    %21 = vst [vmem:[#allocation2 + $0x18] sm:$0xff] 0.0
    %22 = vst [vmem:[#allocation2 + $0x20] sm:$0xff] 0.0
    %23 = vst [vmem:[#allocation2 + $0x28] sm:$0xff] 0.0
    %24 = vst [vmem:[#allocation2 + $0x30] sm:$0xff] 0.0
    %25 = vst [vmem:[#allocation2 + $0x38] sm:$0xff] 0.0
  $region17: #{transformer_forward.30} parent=0 // pred_fallthru
    _
  %v26 = vld [vmem:[#allocation2] sm:$0xff]
  %v27 = vld [vmem:[#allocation2 + $0x8] sm:$0xff]
  %v28 = vld [vmem:[#allocation2 + $0x10] sm:$0xff]
  %v29 = vld [vmem:[#allocation2 + $0x18] sm:$0xff]
  %v30 = vld [vmem:[#allocation2 + $0x20] sm:$0xff]
  %v31 = vld [vmem:[#allocation2 + $0x28] sm:$0xff]
  %v32 = vld [vmem:[#allocation2 + $0x30] sm:$0xff]
  %v33 = vld [vmem:[#allocation2 + $0x38] sm:$0xff]
  %v34 = vld [vmem:[%s0] sm:$0xff]
  %v35 = vld [vmem:[%s0 + $0x8] sm:$0xff]
  %v36 = vld [vmem:[%s0 + $0x10] sm:$0xff]
  %v37 = vld [vmem:[%s0 + $0x18] sm:$0xff]
  %v38 = vld [vmem:[%s1] sm:$0xff]
  %v39 = vld [vmem:[%s1 + $0x8] sm:$0xff]
  %v40 = vld [vmem:[%s1 + $0x10] sm:$0xff]
  %v41 = vld [vmem:[%s1 + $0x18] sm:$0xff]
  %v42 = vld [vmem:[%s1 + $0x20] sm:$0xff]
  %v43 = vld [vmem:[%s1 + $0x28] sm:$0xff]
  %v44 = vld [vmem:[%s1 + $0x30] sm:$0xff]
  %v45 = vld [vmem:[%s1 + $0x38] sm:$0xff]
  %v46 = vld [vmem:[%s1 + $0x40] sm:$0xff]
  %v47 = vld [vmem:[%s1 + $0x48] sm:$0xff]
  %v48 = vld [vmem:[%s1 + $0x50] sm:$0xff]
  %v49 = vld [vmem:[%s1 + $0x58] sm:$0xff]
  %v50 = vld [vmem:[%s1 + $0x60] sm:$0xff]
  %v51 = vld [vmem:[%s1 + $0x68] sm:$0xff]
  %v52 = vld [vmem:[%s1 + $0x70] sm:$0xff]
  %v53 = vld [vmem:[%s1 + $0x78] sm:$0xff]
  %v54 = vld [vmem:[%s1 + $0x80] sm:$0xff]
  %v55 = vld [vmem:[%s1 + $0x88] sm:$0xff]
  %v56 = vld [vmem:[%s1 + $0x90] sm:$0xff]
  %v57 = vld [vmem:[%s1 + $0x98] sm:$0xff]
  %v58 = vld [vmem:[%s1 + $0xa0] sm:$0xff]
  %v59 = vld [vmem:[%s1 + $0xa8] sm:$0xff]
  %v60 = vld [vmem:[%s1 + $0xb0] sm:$0xff]
  %v61 = vld [vmem:[%s1 + $0xb8] sm:$0xff]
  %v62 = vld [vmem:[%s1 + $0xc0] sm:$0xff]
  %v63 = vld [vmem:[%s1 + $0xc8] sm:$0xff]
  %v64 = vld [vmem:[%s1 + $0xd0] sm:$0xff]
  %v65 = vld [vmem:[%s1 + $0xd8] sm:$0xff]
  %v66 = vld [vmem:[%s1 + $0xe0] sm:$0xff]
  %v67 = vld [vmem:[%s1 + $0xe8] sm:$0xff]
  %v68 = vld [vmem:[%s1 + $0xf0] sm:$0xff]
  %v69 = vld [vmem:[%s1 + $0xf8] sm:$0xff]
  %v74 = vunpack.c.l.b16 %v34
  %v75 = vunpack.c.h.b16 %v34
  %v76 = vunpack.c.l.b16 %v35
  %v77 = vunpack.c.h.b16 %v35
  %v78 = vunpack.c.l.b16 %v36
  %v79 = vunpack.c.h.b16 %v36
  %v80 = vunpack.c.l.b16 %v37
  %v81 = vunpack.c.h.b16 %v37
  %v82 = vpack.c.b16 %v76, %v74
  %v83 = vpack.c.b16 %v77, %v75
  %v84 = vpack.c.b16 %v80, %v78
  %v85 = vpack.c.b16 %v81, %v79
  %v122 = vunpack.c.l.b16 %v38
  %v123 = vunpack.c.h.b16 %v38
  %v124 = vunpack.c.l.b16 %v39
  %v125 = vunpack.c.h.b16 %v39
  %v126 = vunpack.c.l.b16 %v40
  %v127 = vunpack.c.h.b16 %v40
  %v128 = vunpack.c.l.b16 %v41
  %v129 = vunpack.c.h.b16 %v41
  %v130 = vunpack.c.l.b16 %v42
  %v131 = vunpack.c.h.b16 %v42
  %v132 = vunpack.c.l.b16 %v43
  %v133 = vunpack.c.h.b16 %v43
  %v134 = vunpack.c.l.b16 %v44
  %v135 = vunpack.c.h.b16 %v44
  %v136 = vunpack.c.l.b16 %v45
  %v137 = vunpack.c.h.b16 %v45
  %v138 = vunpack.c.l.b16 %v46
  %v139 = vunpack.c.h.b16 %v46
  %v140 = vunpack.c.l.b16 %v47
  %v141 = vunpack.c.h.b16 %v47
  %v142 = vunpack.c.l.b16 %v48
  %v143 = vunpack.c.h.b16 %v48
  %v144 = vunpack.c.l.b16 %v49
  %v145 = vunpack.c.h.b16 %v49
  %v146 = vunpack.c.l.b16 %v50
  %v147 = vunpack.c.h.b16 %v50
  %v148 = vunpack.c.l.b16 %v51
  %v149 = vunpack.c.h.b16 %v51
  %v150 = vunpack.c.l.b16 %v52
  %v151 = vunpack.c.h.b16 %v52
  %v152 = vunpack.c.l.b16 %v53
  %v153 = vunpack.c.h.b16 %v53
  %v154 = vunpack.c.l.b16 %v54
  %v155 = vunpack.c.h.b16 %v54
  %v156 = vunpack.c.l.b16 %v55
  %v157 = vunpack.c.h.b16 %v55
  %v158 = vunpack.c.l.b16 %v56
  %v159 = vunpack.c.h.b16 %v56
  %v160 = vunpack.c.l.b16 %v57
  %v161 = vunpack.c.h.b16 %v57
  %v162 = vunpack.c.l.b16 %v58
  %v163 = vunpack.c.h.b16 %v58
  %v164 = vunpack.c.l.b16 %v59
  %v165 = vunpack.c.h.b16 %v59
  %v166 = vunpack.c.l.b16 %v60
  %v167 = vunpack.c.h.b16 %v60
  %v168 = vunpack.c.l.b16 %v61
  %v169 = vunpack.c.h.b16 %v61
  %v170 = vunpack.c.l.b16 %v62
  %v171 = vunpack.c.h.b16 %v62
  %v172 = vunpack.c.l.b16 %v63
  %v173 = vunpack.c.h.b16 %v63
  %v174 = vunpack.c.l.b16 %v64
  %v175 = vunpack.c.h.b16 %v64
  %v176 = vunpack.c.l.b16 %v65
  %v177 = vunpack.c.h.b16 %v65
  %v178 = vunpack.c.l.b16 %v66
  %v179 = vunpack.c.h.b16 %v66
  %v180 = vunpack.c.l.b16 %v67
  %v181 = vunpack.c.h.b16 %v67
  %v182 = vunpack.c.l.b16 %v68
  %v183 = vunpack.c.h.b16 %v68
  %v184 = vunpack.c.l.b16 %v69
  %v185 = vunpack.c.h.b16 %v69
  %v186 = vpack.c.b16 %v124, %v122
  %v187 = vpack.c.b16 %v125, %v123
  %v188 = vpack.c.b16 %v128, %v126
  %v189 = vpack.c.b16 %v129, %v127
  %v190 = vpack.c.b16 %v132, %v130
  %v191 = vpack.c.b16 %v133, %v131
  %v192 = vpack.c.b16 %v136, %v134
  %v193 = vpack.c.b16 %v137, %v135
  %v194 = vpack.c.b16 %v140, %v138
  %v195 = vpack.c.b16 %v141, %v139
  %v196 = vpack.c.b16 %v144, %v142
  %v197 = vpack.c.b16 %v145, %v143
  %v198 = vpack.c.b16 %v148, %v146
  %v199 = vpack.c.b16 %v149, %v147
  %v200 = vpack.c.b16 %v152, %v150
  %v201 = vpack.c.b16 %v153, %v151
  %v202 = vpack.c.b16 %v156, %v154
  %v203 = vpack.c.b16 %v157, %v155
  %v204 = vpack.c.b16 %v160, %v158
  %v205 = vpack.c.b16 %v161, %v159
  %v206 = vpack.c.b16 %v164, %v162
  %v207 = vpack.c.b16 %v165, %v163
  %v208 = vpack.c.b16 %v168, %v166
  %v209 = vpack.c.b16 %v169, %v167
  %v210 = vpack.c.b16 %v172, %v170
  %v211 = vpack.c.b16 %v173, %v171
  %v212 = vpack.c.b16 %v176, %v174
  %v213 = vpack.c.b16 %v177, %v175
  %v214 = vpack.c.b16 %v180, %v178
  %v215 = vpack.c.b16 %v181, %v179
  %v216 = vpack.c.b16 %v184, %v182
  %v217 = vpack.c.b16 %v185, %v183
  %250 = vmatprep.subr.bf16.mxu0 %v187
  %251 = vmatpush1.bf16.msra.mxu0 %v186
  %252 = vmatprep.subr.bf16.mxu0 %v189
  %253 = vmatpush1.bf16.msra.mxu0 %v188
  %254 = vmatprep.subr.bf16.mxu0 %v191
  %255 = vmatpush1.bf16.msra.mxu0 %v190
  %256 = vmatprep.subr.bf16.mxu0 %v193
  %257 = vmatpush1.bf16.msra.mxu0 %v192
  %258 = vmatprep.subr.bf16.mxu0 %v195
  %259 = vmatpush1.bf16.msra.mxu0 %v194
  %260 = vmatprep.subr.bf16.mxu0 %v197
  %261 = vmatpush1.bf16.msra.mxu0 %v196
  %262 = vmatprep.subr.bf16.mxu0 %v199
  %263 = vmatpush1.bf16.msra.mxu0 %v198
  %264 = vmatprep.subr.bf16.mxu0 %v201
  %265 = vmatpush1.bf16.msra.mxu0 %v200
  %266 = vmatprep.subr.bf16.mxu0 %v203
  %267 = vmatpush1.bf16.msra.mxu0 %v202
  %268 = vmatprep.subr.bf16.mxu0 %v205
  %269 = vmatpush1.bf16.msra.mxu0 %v204
  %270 = vmatprep.subr.bf16.mxu0 %v207
  %271 = vmatpush1.bf16.msra.mxu0 %v206
  %272 = vmatprep.subr.bf16.mxu0 %v209
  %273 = vmatpush1.bf16.msra.mxu0 %v208
  %274 = vmatprep.subr.bf16.mxu0 %v211
  %275 = vmatpush1.bf16.msra.mxu0 %v210
  %276 = vmatprep.subr.bf16.mxu0 %v213
  %277 = vmatpush1.bf16.msra.mxu0 %v212
  %278 = vmatprep.subr.bf16.mxu0 %v215
  %279 = vmatpush1.bf16.msra.mxu0 %v214
  %280 = vmatprep.subr.bf16.mxu0 %v217
  %281 = vmatpush1.bf16.msra.mxu0 %v216
  %282 = vmatprep.mubr.bf16.mxu0 %v83
  %283 = vmatmul.mubr.bf16.gmra.mrb[0].mxu0 %v82
  %v284 = vpop.f32.mrb[0].mxu0
  %v285 = vadd.f32 0.0, %v284
  %v286 = vpop.f32.mrb[0].mxu0
  %v287 = vadd.f32 0.0, %v286
  %v288 = vpop.f32.mrb[0].mxu0
  %v289 = vadd.f32 0.0, %v288
  %v290 = vpop.f32.mrb[0].mxu0
  %v291 = vadd.f32 0.0, %v290
  %292 = vmatprep.mubr.bf16.mxu0 %v85
  %293 = vmatmul.mubr.bf16.gmra.mrb[0].mxu0 %v84
  %v294 = vpop.f32.mrb[0].mxu0
  %v295 = vadd.f32 0.0, %v294
  %v296 = vpop.f32.mrb[0].mxu0
  %v297 = vadd.f32 0.0, %v296
  %v298 = vpop.f32.mrb[0].mxu0
  %v299 = vadd.f32 0.0, %v298
  %v300 = vpop.f32.mrb[0].mxu0
  %v301 = vadd.f32 0.0, %v300
  %302 = vdwg.mxu0
  %v303 = vadd.f32 %v26, %v285
  %v304 = vadd.f32 %v27, %v287
  %v305 = vadd.f32 %v28, %v289
  %v306 = vadd.f32 %v29, %v291
  %v307 = vadd.f32 %v30, %v295
  %v308 = vadd.f32 %v31, %v297
  %v309 = vadd.f32 %v32, %v299
  %v310 = vadd.f32 %v33, %v301
  %311 = vst [vmem:[#allocation2] sm:$0xff] %v303
  %312 = vst [vmem:[#allocation2 + $0x8] sm:$0xff] %v304
  %313 = vst [vmem:[#allocation2 + $0x10] sm:$0xff] %v305
  %314 = vst [vmem:[#allocation2 + $0x18] sm:$0xff] %v306
  %315 = vst [vmem:[#allocation2 + $0x20] sm:$0xff] %v307
  %316 = vst [vmem:[#allocation2 + $0x28] sm:$0xff] %v308
  %317 = vst [vmem:[#allocation2 + $0x30] sm:$0xff] %v309
  %318 = vst [vmem:[#allocation2 + $0x38] sm:$0xff] %v310
  // Predicated region
  $region18: #{transformer_forward.30} parent=0 // pred_check
    %p319 = pneg %p14
  $region19: #{transformer_forward.30} parent=0 // pred_check_branch
    %321 = sbr.rel (%p319) target = $region21
  $region20: #{transformer_forward.30} parent=0 // pred_region
    %v322 = vld [vmem:[#allocation2] sm:$0xff]
    %v323 = vld [vmem:[#allocation2 + $0x8] sm:$0xff]
    %v324 = vld [vmem:[#allocation2 + $0x10] sm:$0xff]
    %v325 = vld [vmem:[#allocation2 + $0x18] sm:$0xff]
    %v326 = vld [vmem:[#allocation2 + $0x20] sm:$0xff]
    %v327 = vld [vmem:[#allocation2 + $0x28] sm:$0xff]
    %v328 = vld [vmem:[#allocation2 + $0x30] sm:$0xff]
    %v329 = vld [vmem:[#allocation2 + $0x38] sm:$0xff]
    %v330 = vld [vmem:[%s2] sm:$0x3]
    %v332 = vlaneseq
    %v333 = vshrl.u32 %v332, 7
    %v334 = vsub.s32 0, %v333
    %v335 = vrot.slane %v330, %v334
    %v336 = vlaneseq
    %v337 = vshrl.u32 %v336, 7
    %v338 = vsub.s32 1, %v337
    %v339 = vrot.slane %v330, %v338
    %v342 = vadd.f32 %v322, %v335
    %v343 = vadd.f32 %v323, %v339
    %v344 = vadd.f32 %v324, %v335
    %v345 = vadd.f32 %v325, %v339
    %v346 = vadd.f32 %v326, %v335
    %v347 = vadd.f32 %v327, %v339
    %v348 = vadd.f32 %v328, %v335
    %v349 = vadd.f32 %v329, %v339
    %v350 = vpack.c.bf16 %v344, %v342
    %v351 = vpack.c.bf16 %v345, %v343
    %v352 = vpack.c.bf16 %v348, %v346
    %v353 = vpack.c.bf16 %v349, %v347
    %v358 = vunpack.c.l.b16 %v350
    %v359 = vunpack.c.l.b16 %v351
    %v360 = vunpack.c.h.b16 %v350
    %v361 = vunpack.c.h.b16 %v351
    %v362 = vunpack.c.l.b16 %v352
    %v363 = vunpack.c.l.b16 %v353
    %v364 = vunpack.c.h.b16 %v352
    %v365 = vunpack.c.h.b16 %v353
    %v366 = vpack.c.b16 %v359, %v358
    %v367 = vpack.c.b16 %v361, %v360
    %v368 = vpack.c.b16 %v363, %v362
    %v369 = vpack.c.b16 %v365, %v364
    %374 = vst [vmem:[%s3] sm:$0xff] %v366
    %375 = vst [vmem:[%s3 + $0x8] sm:$0xff] %v367
    %376 = vst [vmem:[%s3 + $0x10] sm:$0xff] %v368
    %377 = vst [vmem:[%s3 + $0x18] sm:$0xff] %v369
  $region21: #{transformer_forward.30} parent=0 // pred_fallthru
    _
  // Predicated region
  $region22: #{transformer_forward.30} parent=0 // pred_check
    _
  $region23: #{transformer_forward.30} parent=0 // pred_check_branch
    %379 = sbr.rel (0) target = $region25
  $region24: #{transformer_forward.30} parent=0 // pred_region
    _
  $region25: #{transformer_forward.30} parent=0 // pred_fallthru
    _
  // Predicated region
  $region26: #{transformer_forward.30} parent=0 // pred_check
    _
  $region27: #{transformer_forward.30} parent=0 // pred_check_branch
    %381 = sbr.rel (0) target = $region29
  $region28: #{transformer_forward.30} parent=0 // pred_region
    _
  $region29: #{transformer_forward.30} parent=0 // pred_fallthru
    _

// kernel: transformer_forward.31
$region0: #{transformer_forward.31}
  #allocation0 [shape = 'u32[]', space=smem, size = 0x4, offset = 0x4, fixed_abs, tag = 'smem constant byte address 0x4 - core index']
  #allocation1 [shape = 'u32[144,128]{1,0:T(1,128)}', space=vmem, size = 0x12000, scoped, tag = 'internal scratch']
  #allocation2 [shape = 'f32[32,512]{1,0:T(8,128)}', space=vmem, size = 0x10000, scoped, tag = 'scratch operand']
  %s0 = inlined_call_operand.vmem [shape: bf16[32,256], index: 0, kind: input, shape index: {}]
  %s1 = inlined_call_operand.vmem [shape: bf16[256,512], index: 1, kind: input, shape index: {}]
  %s2 = inlined_call_operand.vmem [shape: f32[1,512], index: 2, kind: input, shape index: {}]
  %s3 = inlined_call_operand.vmem [shape: bf16[32,512], index: 3, kind: output, shape index: {}]
  %s4 = sld [smem:[#allocation0]]
  $region30: #{transformer_forward.31} parent=0
    _
  %s6 = ssub.s32 1, %s4
  %s7 = scalar_select 0, %s6, %s4
  // Predicated region
  $region2: #{transformer_forward.31} parent=0 // pred_check
    _
  $region3: #{transformer_forward.31} parent=0 // pred_check_branch
    %9 = sbr.rel (0) target = $region5
  $region4: #{transformer_forward.31} parent=0 // pred_region
    _
  $region5: #{transformer_forward.31} parent=0 // pred_fallthru
    _
  // Predicated region
  $region6: #{transformer_forward.31} parent=0 // pred_check
    _
  $region7: #{transformer_forward.31} parent=0 // pred_check_branch
    %11 = sbr.rel (0) target = $region9
  $region8: #{transformer_forward.31} parent=0 // pred_region
    _
  $region9: #{transformer_forward.31} parent=0 // pred_fallthru
    _
  // Predicated region
  $region10: #{transformer_forward.31} parent=0 // pred_check
    _
  $region11: #{transformer_forward.31} parent=0 // pred_check_branch
    %13 = sbr.rel (0) target = $region13
  $region12: #{transformer_forward.31} parent=0 // pred_region
    _
  $region13: #{transformer_forward.31} parent=0 // pred_fallthru
    _
  %p14 = scmp.eq.s32.totalorder 0, 0
  // Predicated region
  $region14: #{transformer_forward.31} parent=0 // pred_check
    %p15 = pneg %p14
  $region15: #{transformer_forward.31} parent=0 // pred_check_branch
    %17 = sbr.rel (%p15) target = $region17
  $region16: #{transformer_forward.31} parent=0 // pred_region
    %18 = vst [vmem:[#allocation2] sm:$0xff] 0.0
    %19 = vst [vmem:[#allocation2 + $0x8] sm:$0xff] 0.0
    %20 = vst [vmem:[#allocation2 + $0x10] sm:$0xff] 0.0
    %21 = vst [vmem:[#allocation2 + $0x18] sm:$0xff] 0.0
    %22 = vst [vmem:[#allocation2 + $0x20] sm:$0xff] 0.0
    %23 = vst [vmem:[#allocation2 + $0x28] sm:$0xff] 0.0
    %24 = vst [vmem:[#allocation2 + $0x30] sm:$0xff] 0.0
    %25 = vst [vmem:[#allocation2 + $0x38] sm:$0xff] 0.0
    %26 = vst [vmem:[#allocation2 + $0x40] sm:$0xff] 0.0
    %27 = vst [vmem:[#allocation2 + $0x48] sm:$0xff] 0.0
    %28 = vst [vmem:[#allocation2 + $0x50] sm:$0xff] 0.0
    %29 = vst [vmem:[#allocation2 + $0x58] sm:$0xff] 0.0
    %30 = vst [vmem:[#allocation2 + $0x60] sm:$0xff] 0.0
    %31 = vst [vmem:[#allocation2 + $0x68] sm:$0xff] 0.0
    %32 = vst [vmem:[#allocation2 + $0x70] sm:$0xff] 0.0
    %33 = vst [vmem:[#allocation2 + $0x78] sm:$0xff] 0.0
  $region17: #{transformer_forward.31} parent=0 // pred_fallthru
    _
  %v34 = vld [vmem:[#allocation2] sm:$0xff]
  %v35 = vld [vmem:[#allocation2 + $0x8] sm:$0xff]
  %v36 = vld [vmem:[#allocation2 + $0x10] sm:$0xff]
  %v37 = vld [vmem:[#allocation2 + $0x18] sm:$0xff]
  %v38 = vld [vmem:[#allocation2 + $0x20] sm:$0xff]
  %v39 = vld [vmem:[#allocation2 + $0x28] sm:$0xff]
  %v40 = vld [vmem:[#allocation2 + $0x30] sm:$0xff]
  %v41 = vld [vmem:[#allocation2 + $0x38] sm:$0xff]
  %v42 = vld [vmem:[#allocation2 + $0x40] sm:$0xff]
  %v43 = vld [vmem:[#allocation2 + $0x48] sm:$0xff]
  %v44 = vld [vmem:[#allocation2 + $0x50] sm:$0xff]
  %v45 = vld [vmem:[#allocation2 + $0x58] sm:$0xff]
  %v46 = vld [vmem:[#allocation2 + $0x60] sm:$0xff]
  %v47 = vld [vmem:[#allocation2 + $0x68] sm:$0xff]
  %v48 = vld [vmem:[#allocation2 + $0x70] sm:$0xff]
  %v49 = vld [vmem:[#allocation2 + $0x78] sm:$0xff]
  %v50 = vld [vmem:[%s0] sm:$0xff]
  %v51 = vld [vmem:[%s0 + $0x8] sm:$0xff]
  %v52 = vld [vmem:[%s0 + $0x10] sm:$0xff]
  %v53 = vld [vmem:[%s0 + $0x18] sm:$0xff]
  %v54 = vld [vmem:[%s1] sm:$0xff]
  %v55 = vld [vmem:[%s1 + $0x8] sm:$0xff]
  %v56 = vld [vmem:[%s1 + $0x10] sm:$0xff]
  %v57 = vld [vmem:[%s1 + $0x18] sm:$0xff]
  %v58 = vld [vmem:[%s1 + $0x20] sm:$0xff]
  %v59 = vld [vmem:[%s1 + $0x28] sm:$0xff]
  %v60 = vld [vmem:[%s1 + $0x30] sm:$0xff]
  %v61 = vld [vmem:[%s1 + $0x38] sm:$0xff]
  %v62 = vld [vmem:[%s1 + $0x40] sm:$0xff]
  %v63 = vld [vmem:[%s1 + $0x48] sm:$0xff]
  %v64 = vld [vmem:[%s1 + $0x50] sm:$0xff]
  %v65 = vld [vmem:[%s1 + $0x58] sm:$0xff]
  %v66 = vld [vmem:[%s1 + $0x60] sm:$0xff]
  %v67 = vld [vmem:[%s1 + $0x68] sm:$0xff]
  %v68 = vld [vmem:[%s1 + $0x70] sm:$0xff]
  %v69 = vld [vmem:[%s1 + $0x78] sm:$0xff]
  %v70 = vld [vmem:[%s1 + $0x80] sm:$0xff]
  %v71 = vld [vmem:[%s1 + $0x88] sm:$0xff]
  %v72 = vld [vmem:[%s1 + $0x90] sm:$0xff]
  %v73 = vld [vmem:[%s1 + $0x98] sm:$0xff]
  %v74 = vld [vmem:[%s1 + $0xa0] sm:$0xff]
  %v75 = vld [vmem:[%s1 + $0xa8] sm:$0xff]
  %v76 = vld [vmem:[%s1 + $0xb0] sm:$0xff]
  %v77 = vld [vmem:[%s1 + $0xb8] sm:$0xff]
  %v78 = vld [vmem:[%s1 + $0xc0] sm:$0xff]
  %v79 = vld [vmem:[%s1 + $0xc8] sm:$0xff]
  %v80 = vld [vmem:[%s1 + $0xd0] sm:$0xff]
  %v81 = vld [vmem:[%s1 + $0xd8] sm:$0xff]
  %v82 = vld [vmem:[%s1 + $0xe0] sm:$0xff]
  %v83 = vld [vmem:[%s1 + $0xe8] sm:$0xff]
  %v84 = vld [vmem:[%s1 + $0xf0] sm:$0xff]
  %v85 = vld [vmem:[%s1 + $0xf8] sm:$0xff]
  %v86 = vld [vmem:[%s1 + $0x100] sm:$0xff]
  %v87 = vld [vmem:[%s1 + $0x108] sm:$0xff]
  %v88 = vld [vmem:[%s1 + $0x110] sm:$0xff]
  %v89 = vld [vmem:[%s1 + $0x118] sm:$0xff]
  %v90 = vld [vmem:[%s1 + $0x120] sm:$0xff]
  %v91 = vld [vmem:[%s1 + $0x128] sm:$0xff]
  %v92 = vld [vmem:[%s1 + $0x130] sm:$0xff]
  %v93 = vld [vmem:[%s1 + $0x138] sm:$0xff]
  %v94 = vld [vmem:[%s1 + $0x140] sm:$0xff]
  %v95 = vld [vmem:[%s1 + $0x148] sm:$0xff]
  %v96 = vld [vmem:[%s1 + $0x150] sm:$0xff]
  %v97 = vld [vmem:[%s1 + $0x158] sm:$0xff]
  %v98 = vld [vmem:[%s1 + $0x160] sm:$0xff]
  %v99 = vld [vmem:[%s1 + $0x168] sm:$0xff]
  %v100 = vld [vmem:[%s1 + $0x170] sm:$0xff]
  %v101 = vld [vmem:[%s1 + $0x178] sm:$0xff]
  %v102 = vld [vmem:[%s1 + $0x180] sm:$0xff]
  %v103 = vld [vmem:[%s1 + $0x188] sm:$0xff]
  %v104 = vld [vmem:[%s1 + $0x190] sm:$0xff]
  %v105 = vld [vmem:[%s1 + $0x198] sm:$0xff]
  %v106 = vld [vmem:[%s1 + $0x1a0] sm:$0xff]
  %v107 = vld [vmem:[%s1 + $0x1a8] sm:$0xff]
  %v108 = vld [vmem:[%s1 + $0x1b0] sm:$0xff]
  %v109 = vld [vmem:[%s1 + $0x1b8] sm:$0xff]
  %v110 = vld [vmem:[%s1 + $0x1c0] sm:$0xff]
  %v111 = vld [vmem:[%s1 + $0x1c8] sm:$0xff]
  %v112 = vld [vmem:[%s1 + $0x1d0] sm:$0xff]
  %v113 = vld [vmem:[%s1 + $0x1d8] sm:$0xff]
  %v114 = vld [vmem:[%s1 + $0x1e0] sm:$0xff]
  %v115 = vld [vmem:[%s1 + $0x1e8] sm:$0xff]
  %v116 = vld [vmem:[%s1 + $0x1f0] sm:$0xff]
  %v117 = vld [vmem:[%s1 + $0x1f8] sm:$0xff]
  %v122 = vunpack.c.l.b16 %v50
  %v123 = vunpack.c.h.b16 %v50
  %v124 = vunpack.c.l.b16 %v51
  %v125 = vunpack.c.h.b16 %v51
  %v126 = vunpack.c.l.b16 %v52
  %v127 = vunpack.c.h.b16 %v52
  %v128 = vunpack.c.l.b16 %v53
  %v129 = vunpack.c.h.b16 %v53
  %v130 = vpack.c.b16 %v124, %v122
  %v131 = vpack.c.b16 %v125, %v123
  %v132 = vpack.c.b16 %v128, %v126
  %v133 = vpack.c.b16 %v129, %v127
  %v202 = vunpack.c.l.b16 %v54
  %v203 = vunpack.c.h.b16 %v54
  %v204 = vunpack.c.l.b16 %v55
  %v205 = vunpack.c.h.b16 %v55
  %v206 = vunpack.c.l.b16 %v56
  %v207 = vunpack.c.h.b16 %v56
  %v208 = vunpack.c.l.b16 %v57
  %v209 = vunpack.c.h.b16 %v57
  %v210 = vunpack.c.l.b16 %v58
  %v211 = vunpack.c.h.b16 %v58
  %v212 = vunpack.c.l.b16 %v59
  %v213 = vunpack.c.h.b16 %v59
  %v214 = vunpack.c.l.b16 %v60
  %v215 = vunpack.c.h.b16 %v60
  %v216 = vunpack.c.l.b16 %v61
  %v217 = vunpack.c.h.b16 %v61
  %v218 = vunpack.c.l.b16 %v62
  %v219 = vunpack.c.h.b16 %v62
  %v220 = vunpack.c.l.b16 %v63
  %v221 = vunpack.c.h.b16 %v63
  %v222 = vunpack.c.l.b16 %v64
  %v223 = vunpack.c.h.b16 %v64
  %v224 = vunpack.c.l.b16 %v65
  %v225 = vunpack.c.h.b16 %v65
  %v226 = vunpack.c.l.b16 %v66
  %v227 = vunpack.c.h.b16 %v66
  %v228 = vunpack.c.l.b16 %v67
  %v229 = vunpack.c.h.b16 %v67
  %v230 = vunpack.c.l.b16 %v68
  %v231 = vunpack.c.h.b16 %v68
  %v232 = vunpack.c.l.b16 %v69
  %v233 = vunpack.c.h.b16 %v69
  %v234 = vunpack.c.l.b16 %v70
  %v235 = vunpack.c.h.b16 %v70
  %v236 = vunpack.c.l.b16 %v71
  %v237 = vunpack.c.h.b16 %v71
  %v238 = vunpack.c.l.b16 %v72
  %v239 = vunpack.c.h.b16 %v72
  %v240 = vunpack.c.l.b16 %v73
  %v241 = vunpack.c.h.b16 %v73
  %v242 = vunpack.c.l.b16 %v74
  %v243 = vunpack.c.h.b16 %v74
  %v244 = vunpack.c.l.b16 %v75
  %v245 = vunpack.c.h.b16 %v75
  %v246 = vunpack.c.l.b16 %v76
  %v247 = vunpack.c.h.b16 %v76
  %v248 = vunpack.c.l.b16 %v77
  %v249 = vunpack.c.h.b16 %v77
  %v250 = vunpack.c.l.b16 %v78
  %v251 = vunpack.c.h.b16 %v78
  %v252 = vunpack.c.l.b16 %v79
  %v253 = vunpack.c.h.b16 %v79
  %v254 = vunpack.c.l.b16 %v80
  %v255 = vunpack.c.h.b16 %v80
  %v256 = vunpack.c.l.b16 %v81
  %v257 = vunpack.c.h.b16 %v81
  %v258 = vunpack.c.l.b16 %v82
  %v259 = vunpack.c.h.b16 %v82
  %v260 = vunpack.c.l.b16 %v83
  %v261 = vunpack.c.h.b16 %v83
  %v262 = vunpack.c.l.b16 %v84
  %v263 = vunpack.c.h.b16 %v84
  %v264 = vunpack.c.l.b16 %v85
  %v265 = vunpack.c.h.b16 %v85
  %v266 = vunpack.c.l.b16 %v86
  %v267 = vunpack.c.h.b16 %v86
  %v268 = vunpack.c.l.b16 %v87
  %v269 = vunpack.c.h.b16 %v87
  %v270 = vunpack.c.l.b16 %v88
  %v271 = vunpack.c.h.b16 %v88
  %v272 = vunpack.c.l.b16 %v89
  %v273 = vunpack.c.h.b16 %v89
  %v274 = vunpack.c.l.b16 %v90
  %v275 = vunpack.c.h.b16 %v90
  %v276 = vunpack.c.l.b16 %v91
  %v277 = vunpack.c.h.b16 %v91
  %v278 = vunpack.c.l.b16 %v92
  %v279 = vunpack.c.h.b16 %v92
  %v280 = vunpack.c.l.b16 %v93
  %v281 = vunpack.c.h.b16 %v93
  %v282 = vunpack.c.l.b16 %v94
  %v283 = vunpack.c.h.b16 %v94
  %v284 = vunpack.c.l.b16 %v95
  %v285 = vunpack.c.h.b16 %v95
  %v286 = vunpack.c.l.b16 %v96
  %v287 = vunpack.c.h.b16 %v96
  %v288 = vunpack.c.l.b16 %v97
  %v289 = vunpack.c.h.b16 %v97
  %v290 = vunpack.c.l.b16 %v98
  %v291 = vunpack.c.h.b16 %v98
  %v292 = vunpack.c.l.b16 %v99
  %v293 = vunpack.c.h.b16 %v99
  %v294 = vunpack.c.l.b16 %v100
  %v295 = vunpack.c.h.b16 %v100
  %v296 = vunpack.c.l.b16 %v101
  %v297 = vunpack.c.h.b16 %v101
  %v298 = vunpack.c.l.b16 %v102
  %v299 = vunpack.c.h.b16 %v102
  %v300 = vunpack.c.l.b16 %v103
  %v301 = vunpack.c.h.b16 %v103
  %v302 = vunpack.c.l.b16 %v104
  %v303 = vunpack.c.h.b16 %v104
  %v304 = vunpack.c.l.b16 %v105
  %v305 = vunpack.c.h.b16 %v105
  %v306 = vunpack.c.l.b16 %v106
  %v307 = vunpack.c.h.b16 %v106
  %v308 = vunpack.c.l.b16 %v107
  %v309 = vunpack.c.h.b16 %v107
  %v310 = vunpack.c.l.b16 %v108
  %v311 = vunpack.c.h.b16 %v108
  %v312 = vunpack.c.l.b16 %v109
  %v313 = vunpack.c.h.b16 %v109
  %v314 = vunpack.c.l.b16 %v110
  %v315 = vunpack.c.h.b16 %v110
  %v316 = vunpack.c.l.b16 %v111
  %v317 = vunpack.c.h.b16 %v111
  %v318 = vunpack.c.l.b16 %v112
  %v319 = vunpack.c.h.b16 %v112
  %v320 = vunpack.c.l.b16 %v113
  %v321 = vunpack.c.h.b16 %v113
  %v322 = vunpack.c.l.b16 %v114
  %v323 = vunpack.c.h.b16 %v114
  %v324 = vunpack.c.l.b16 %v115
  %v325 = vunpack.c.h.b16 %v115
  %v326 = vunpack.c.l.b16 %v116
  %v327 = vunpack.c.h.b16 %v116
  %v328 = vunpack.c.l.b16 %v117
  %v329 = vunpack.c.h.b16 %v117
  %v330 = vpack.c.b16 %v206, %v202
  %v331 = vpack.c.b16 %v207, %v203
  %v332 = vpack.c.b16 %v208, %v204
  %v333 = vpack.c.b16 %v209, %v205
  %v334 = vpack.c.b16 %v214, %v210
  %v335 = vpack.c.b16 %v215, %v211
  %v336 = vpack.c.b16 %v216, %v212
  %v337 = vpack.c.b16 %v217, %v213
  %v338 = vpack.c.b16 %v222, %v218
  %v339 = vpack.c.b16 %v223, %v219
  %v340 = vpack.c.b16 %v224, %v220
  %v341 = vpack.c.b16 %v225, %v221
  %v342 = vpack.c.b16 %v230, %v226
  %v343 = vpack.c.b16 %v231, %v227
  %v344 = vpack.c.b16 %v232, %v228
  %v345 = vpack.c.b16 %v233, %v229
  %v346 = vpack.c.b16 %v238, %v234
  %v347 = vpack.c.b16 %v239, %v235
  %v348 = vpack.c.b16 %v240, %v236
  %v349 = vpack.c.b16 %v241, %v237
  %v350 = vpack.c.b16 %v246, %v242
  %v351 = vpack.c.b16 %v247, %v243
  %v352 = vpack.c.b16 %v248, %v244
  %v353 = vpack.c.b16 %v249, %v245
  %v354 = vpack.c.b16 %v254, %v250
  %v355 = vpack.c.b16 %v255, %v251
  %v356 = vpack.c.b16 %v256, %v252
  %v357 = vpack.c.b16 %v257, %v253
  %v358 = vpack.c.b16 %v262, %v258
  %v359 = vpack.c.b16 %v263, %v259
  %v360 = vpack.c.b16 %v264, %v260
  %v361 = vpack.c.b16 %v265, %v261
  %v362 = vpack.c.b16 %v270, %v266
  %v363 = vpack.c.b16 %v271, %v267
  %v364 = vpack.c.b16 %v272, %v268
  %v365 = vpack.c.b16 %v273, %v269
  %v366 = vpack.c.b16 %v278, %v274
  %v367 = vpack.c.b16 %v279, %v275
  %v368 = vpack.c.b16 %v280, %v276
  %v369 = vpack.c.b16 %v281, %v277
  %v370 = vpack.c.b16 %v286, %v282
  %v371 = vpack.c.b16 %v287, %v283
  %v372 = vpack.c.b16 %v288, %v284
  %v373 = vpack.c.b16 %v289, %v285
  %v374 = vpack.c.b16 %v294, %v290
  %v375 = vpack.c.b16 %v295, %v291
  %v376 = vpack.c.b16 %v296, %v292
  %v377 = vpack.c.b16 %v297, %v293
  %v378 = vpack.c.b16 %v302, %v298
  %v379 = vpack.c.b16 %v303, %v299
  %v380 = vpack.c.b16 %v304, %v300
  %v381 = vpack.c.b16 %v305, %v301
  %v382 = vpack.c.b16 %v310, %v306
  %v383 = vpack.c.b16 %v311, %v307
  %v384 = vpack.c.b16 %v312, %v308
  %v385 = vpack.c.b16 %v313, %v309
  %v386 = vpack.c.b16 %v318, %v314
  %v387 = vpack.c.b16 %v319, %v315
  %v388 = vpack.c.b16 %v320, %v316
  %v389 = vpack.c.b16 %v321, %v317
  %v390 = vpack.c.b16 %v326, %v322
  %v391 = vpack.c.b16 %v327, %v323
  %v392 = vpack.c.b16 %v328, %v324
  %v393 = vpack.c.b16 %v329, %v325
  %458 = vmatprep.subr.bf16.mxu0 %v331
  %459 = vmatpush1.bf16.msra.mxu0 %v330
  %460 = vmatprep.subr.bf16.mxu0 %v335
  %461 = vmatpush1.bf16.msra.mxu0 %v334
  %462 = vmatprep.subr.bf16.mxu0 %v339
  %463 = vmatpush1.bf16.msra.mxu0 %v338
  %464 = vmatprep.subr.bf16.mxu0 %v343
  %465 = vmatpush1.bf16.msra.mxu0 %v342
  %466 = vmatprep.subr.bf16.mxu0 %v347
  %467 = vmatpush1.bf16.msra.mxu0 %v346
  %468 = vmatprep.subr.bf16.mxu0 %v351
  %469 = vmatpush1.bf16.msra.mxu0 %v350
  %470 = vmatprep.subr.bf16.mxu0 %v355
  %471 = vmatpush1.bf16.msra.mxu0 %v354
  %472 = vmatprep.subr.bf16.mxu0 %v359
  %473 = vmatpush1.bf16.msra.mxu0 %v358
  %474 = vmatprep.subr.bf16.mxu0 %v363
  %475 = vmatpush1.bf16.msra.mxu0 %v362
  %476 = vmatprep.subr.bf16.mxu0 %v367
  %477 = vmatpush1.bf16.msra.mxu0 %v366
  %478 = vmatprep.subr.bf16.mxu0 %v371
  %479 = vmatpush1.bf16.msra.mxu0 %v370
  %480 = vmatprep.subr.bf16.mxu0 %v375
  %481 = vmatpush1.bf16.msra.mxu0 %v374
  %482 = vmatprep.subr.bf16.mxu0 %v379
  %483 = vmatpush1.bf16.msra.mxu0 %v378
  %484 = vmatprep.subr.bf16.mxu0 %v383
  %485 = vmatpush1.bf16.msra.mxu0 %v382
  %486 = vmatprep.subr.bf16.mxu0 %v387
  %487 = vmatpush1.bf16.msra.mxu0 %v386
  %488 = vmatprep.subr.bf16.mxu0 %v391
  %489 = vmatpush1.bf16.msra.mxu0 %v390
  %490 = vmatprep.mubr.bf16.mxu0 %v131
  %491 = vmatmul.mubr.bf16.gmra.mrb[0].mxu0 %v130
  %v492 = vpop.f32.mrb[0].mxu0
  %v493 = vadd.f32 0.0, %v492
  %v494 = vpop.f32.mrb[0].mxu0
  %v495 = vadd.f32 0.0, %v494
  %v496 = vpop.f32.mrb[0].mxu0
  %v497 = vadd.f32 0.0, %v496
  %v498 = vpop.f32.mrb[0].mxu0
  %v499 = vadd.f32 0.0, %v498
  %500 = vmatprep.mubr.bf16.mxu0 %v133
  %501 = vmatmul.mubr.bf16.gmra.mrb[0].mxu0 %v132
  %v502 = vpop.f32.mrb[0].mxu0
  %v503 = vadd.f32 0.0, %v502
  %v504 = vpop.f32.mrb[0].mxu0
  %v505 = vadd.f32 0.0, %v504
  %v506 = vpop.f32.mrb[0].mxu0
  %v507 = vadd.f32 0.0, %v506
  %v508 = vpop.f32.mrb[0].mxu0
  %v509 = vadd.f32 0.0, %v508
  %510 = vdwg.mxu0
  %511 = vmatprep.subr.bf16.mxu0 %v333
  %512 = vmatpush1.bf16.msra.mxu0 %v332
  %513 = vmatprep.subr.bf16.mxu0 %v337
  %514 = vmatpush1.bf16.msra.mxu0 %v336
  %515 = vmatprep.subr.bf16.mxu0 %v341
  %516 = vmatpush1.bf16.msra.mxu0 %v340
  %517 = vmatprep.subr.bf16.mxu0 %v345
  %518 = vmatpush1.bf16.msra.mxu0 %v344
  %519 = vmatprep.subr.bf16.mxu0 %v349
  %520 = vmatpush1.bf16.msra.mxu0 %v348
  %521 = vmatprep.subr.bf16.mxu0 %v353
  %522 = vmatpush1.bf16.msra.mxu0 %v352
  %523 = vmatprep.subr.bf16.mxu0 %v357
  %524 = vmatpush1.bf16.msra.mxu0 %v356
  %525 = vmatprep.subr.bf16.mxu0 %v361
  %526 = vmatpush1.bf16.msra.mxu0 %v360
  %527 = vmatprep.subr.bf16.mxu0 %v365
  %528 = vmatpush1.bf16.msra.mxu0 %v364
  %529 = vmatprep.subr.bf16.mxu0 %v369
  %530 = vmatpush1.bf16.msra.mxu0 %v368
  %531 = vmatprep.subr.bf16.mxu0 %v373
  %532 = vmatpush1.bf16.msra.mxu0 %v372
  %533 = vmatprep.subr.bf16.mxu0 %v377
  %534 = vmatpush1.bf16.msra.mxu0 %v376
  %535 = vmatprep.subr.bf16.mxu0 %v381
  %536 = vmatpush1.bf16.msra.mxu0 %v380
  %537 = vmatprep.subr.bf16.mxu0 %v385
  %538 = vmatpush1.bf16.msra.mxu0 %v384
  %539 = vmatprep.subr.bf16.mxu0 %v389
  %540 = vmatpush1.bf16.msra.mxu0 %v388
  %541 = vmatprep.subr.bf16.mxu0 %v393
  %542 = vmatpush1.bf16.msra.mxu0 %v392
  %543 = vmatprep.mubr.bf16.mxu0 %v131
  %544 = vmatmul.mubr.bf16.gmra.mrb[0].mxu0 %v130
  %v545 = vpop.f32.mrb[0].mxu0
  %v546 = vadd.f32 0.0, %v545
  %v547 = vpop.f32.mrb[0].mxu0
  %v548 = vadd.f32 0.0, %v547
  %v549 = vpop.f32.mrb[0].mxu0
  %v550 = vadd.f32 0.0, %v549
  %v551 = vpop.f32.mrb[0].mxu0
  %v552 = vadd.f32 0.0, %v551
  %553 = vmatprep.mubr.bf16.mxu0 %v133
  %554 = vmatmul.mubr.bf16.gmra.mrb[0].mxu0 %v132
  %v555 = vpop.f32.mrb[0].mxu0
  %v556 = vadd.f32 0.0, %v555
  %v557 = vpop.f32.mrb[0].mxu0
  %v558 = vadd.f32 0.0, %v557
  %v559 = vpop.f32.mrb[0].mxu0
  %v560 = vadd.f32 0.0, %v559
  %v561 = vpop.f32.mrb[0].mxu0
  %v562 = vadd.f32 0.0, %v561
  %563 = vdwg.mxu0
  %v564 = vadd.f32 %v34, %v493
  %v565 = vadd.f32 %v35, %v495
  %v566 = vadd.f32 %v36, %v546
  %v567 = vadd.f32 %v37, %v548
  %v568 = vadd.f32 %v38, %v497
  %v569 = vadd.f32 %v39, %v499
  %v570 = vadd.f32 %v40, %v550
  %v571 = vadd.f32 %v41, %v552
  %v572 = vadd.f32 %v42, %v503
  %v573 = vadd.f32 %v43, %v505
  %v574 = vadd.f32 %v44, %v556
  %v575 = vadd.f32 %v45, %v558
  %v576 = vadd.f32 %v46, %v507
  %v577 = vadd.f32 %v47, %v509
  %v578 = vadd.f32 %v48, %v560
  %v579 = vadd.f32 %v49, %v562
  %580 = vst [vmem:[#allocation2] sm:$0xff] %v564
  %581 = vst [vmem:[#allocation2 + $0x8] sm:$0xff] %v565
  %582 = vst [vmem:[#allocation2 + $0x10] sm:$0xff] %v566
  %583 = vst [vmem:[#allocation2 + $0x18] sm:$0xff] %v567
  %584 = vst [vmem:[#allocation2 + $0x20] sm:$0xff] %v568
  %585 = vst [vmem:[#allocation2 + $0x28] sm:$0xff] %v569
  %586 = vst [vmem:[#allocation2 + $0x30] sm:$0xff] %v570
  %587 = vst [vmem:[#allocation2 + $0x38] sm:$0xff] %v571
  %588 = vst [vmem:[#allocation2 + $0x40] sm:$0xff] %v572
  %589 = vst [vmem:[#allocation2 + $0x48] sm:$0xff] %v573
  %590 = vst [vmem:[#allocation2 + $0x50] sm:$0xff] %v574
  %591 = vst [vmem:[#allocation2 + $0x58] sm:$0xff] %v575
  %592 = vst [vmem:[#allocation2 + $0x60] sm:$0xff] %v576
  %593 = vst [vmem:[#allocation2 + $0x68] sm:$0xff] %v577
  %594 = vst [vmem:[#allocation2 + $0x70] sm:$0xff] %v578
  %595 = vst [vmem:[#allocation2 + $0x78] sm:$0xff] %v579
  // Predicated region
  $region18: #{transformer_forward.31} parent=0 // pred_check
    %p596 = pneg %p14
  $region19: #{transformer_forward.31} parent=0 // pred_check_branch
    %598 = sbr.rel (%p596) target = $region21
  $region20: #{transformer_forward.31} parent=0 // pred_region
    %v599 = vld [vmem:[#allocation2] sm:$0xff]
    %v600 = vld [vmem:[#allocation2 + $0x8] sm:$0xff]
    %v601 = vld [vmem:[#allocation2 + $0x10] sm:$0xff]
    %v602 = vld [vmem:[#allocation2 + $0x18] sm:$0xff]
    %v603 = vld [vmem:[#allocation2 + $0x20] sm:$0xff]
    %v604 = vld [vmem:[#allocation2 + $0x28] sm:$0xff]
    %v605 = vld [vmem:[#allocation2 + $0x30] sm:$0xff]
    %v606 = vld [vmem:[#allocation2 + $0x38] sm:$0xff]
    %v607 = vld [vmem:[#allocation2 + $0x40] sm:$0xff]
    %v608 = vld [vmem:[#allocation2 + $0x48] sm:$0xff]
    %v609 = vld [vmem:[#allocation2 + $0x50] sm:$0xff]
    %v610 = vld [vmem:[#allocation2 + $0x58] sm:$0xff]
    %v611 = vld [vmem:[#allocation2 + $0x60] sm:$0xff]
    %v612 = vld [vmem:[#allocation2 + $0x68] sm:$0xff]
    %v613 = vld [vmem:[#allocation2 + $0x70] sm:$0xff]
    %v614 = vld [vmem:[#allocation2 + $0x78] sm:$0xff]
    %v615 = vld [vmem:[%s2] sm:$0xf]
    %v617 = vlaneseq
    %v618 = vshrl.u32 %v617, 7
    %v619 = vsub.s32 0, %v618
    %v620 = vrot.slane %v615, %v619
    %v621 = vlaneseq
    %v622 = vshrl.u32 %v621, 7
    %v623 = vsub.s32 1, %v622
    %v624 = vrot.slane %v615, %v623
    %v625 = vlaneseq
    %v626 = vshrl.u32 %v625, 7
    %v627 = vsub.s32 2, %v626
    %v628 = vrot.slane %v615, %v627
    %v629 = vlaneseq
    %v630 = vshrl.u32 %v629, 7
    %v631 = vsub.s32 3, %v630
    %v632 = vrot.slane %v615, %v631
    %v637 = vadd.f32 %v599, %v620
    %v638 = vadd.f32 %v600, %v624
    %v639 = vadd.f32 %v601, %v628
    %v640 = vadd.f32 %v602, %v632
    %v641 = vadd.f32 %v603, %v620
    %v642 = vadd.f32 %v604, %v624
    %v643 = vadd.f32 %v605, %v628
    %v644 = vadd.f32 %v606, %v632
    %v645 = vadd.f32 %v607, %v620
    %v646 = vadd.f32 %v608, %v624
    %v647 = vadd.f32 %v609, %v628
    %v648 = vadd.f32 %v610, %v632
    %v649 = vadd.f32 %v611, %v620
    %v650 = vadd.f32 %v612, %v624
    %v651 = vadd.f32 %v613, %v628
    %v652 = vadd.f32 %v614, %v632
    %v653 = vpack.c.bf16 %v641, %v637
    %v654 = vpack.c.bf16 %v642, %v638
    %v655 = vpack.c.bf16 %v643, %v639
    %v656 = vpack.c.bf16 %v644, %v640
    %v657 = vpack.c.bf16 %v649, %v645
    %v658 = vpack.c.bf16 %v650, %v646
    %v659 = vpack.c.bf16 %v651, %v647
    %v660 = vpack.c.bf16 %v652, %v648
    %v669 = vunpack.c.l.b16 %v653
    %v670 = vunpack.c.l.b16 %v654
    %v671 = vunpack.c.l.b16 %v655
    %v672 = vunpack.c.l.b16 %v656
    %v673 = vunpack.c.h.b16 %v653
    %v674 = vunpack.c.h.b16 %v654
    %v675 = vunpack.c.h.b16 %v655
    %v676 = vunpack.c.h.b16 %v656
    %v677 = vunpack.c.l.b16 %v657
    %v678 = vunpack.c.l.b16 %v658
    %v679 = vunpack.c.l.b16 %v659
    %v680 = vunpack.c.l.b16 %v660
    %v681 = vunpack.c.h.b16 %v657
    %v682 = vunpack.c.h.b16 %v658
    %v683 = vunpack.c.h.b16 %v659
    %v684 = vunpack.c.h.b16 %v660
    %v685 = vpack.c.b16 %v670, %v669
    %v686 = vpack.c.b16 %v672, %v671
    %v687 = vpack.c.b16 %v674, %v673
    %v688 = vpack.c.b16 %v676, %v675
    %v689 = vpack.c.b16 %v678, %v677
    %v690 = vpack.c.b16 %v680, %v679
    %v691 = vpack.c.b16 %v682, %v681
    %v692 = vpack.c.b16 %v684, %v683
    %701 = vst [vmem:[%s3] sm:$0xff] %v685
    %702 = vst [vmem:[%s3 + $0x8] sm:$0xff] %v686
    %703 = vst [vmem:[%s3 + $0x10] sm:$0xff] %v687
    %704 = vst [vmem:[%s3 + $0x18] sm:$0xff] %v688
    %705 = vst [vmem:[%s3 + $0x20] sm:$0xff] %v689
    %706 = vst [vmem:[%s3 + $0x28] sm:$0xff] %v690
    %707 = vst [vmem:[%s3 + $0x30] sm:$0xff] %v691
    %708 = vst [vmem:[%s3 + $0x38] sm:$0xff] %v692
  $region21: #{transformer_forward.31} parent=0 // pred_fallthru
    _
  // Predicated region
  $region22: #{transformer_forward.31} parent=0 // pred_check
    _
  $region23: #{transformer_forward.31} parent=0 // pred_check_branch
    %710 = sbr.rel (0) target = $region25
  $region24: #{transformer_forward.31} parent=0 // pred_region
    _
  $region25: #{transformer_forward.31} parent=0 // pred_fallthru
    _
  // Predicated region
  $region26: #{transformer_forward.31} parent=0 // pred_check
    _
  $region27: #{transformer_forward.31} parent=0 // pred_check_branch
    %712 = sbr.rel (0) target = $region29
  $region28: #{transformer_forward.31} parent=0 // pred_region
    _
  $region29: #{transformer_forward.31} parent=0 // pred_fallthru
    _

// kernel: transformer_forward.32
$region0: #{transformer_forward.32}
  #allocation0 [shape = 'u32[]', space=smem, size = 0x4, offset = 0x4, fixed_abs, tag = 'smem constant byte address 0x4 - core index']
  #allocation1 [shape = 'u32[144,128]{1,0:T(1,128)}', space=vmem, size = 0x12000, scoped, tag = 'internal scratch']
  %s0 = inlined_call_operand.vmem [shape: bf16[2,16,256], index: 0, kind: input, shape index: {}]
  %s1 = inlined_call_operand.vmem [shape: bf16[2,16,512], index: 1, kind: input, shape index: {}]
  %s2 = inlined_call_operand.vmem [shape: f32[2,1,16], index: 2, kind: input, shape index: {}]
  %s3 = inlined_call_operand.vmem [shape: bf16[2,16,256], index: 3, kind: output, shape index: {}]
  %s4 = sld [smem:[#allocation0]]
  $region45: #{transformer_forward.32} parent=0
    _
  %s6 = ssub.s32 1, %s4
  %s7 = scalar_select 0, %s6, %s4
  loop: start=0, step=1, limit=4
  $region2: #{transformer_forward.32} parent=0 // loop_pre_header
    _
  $region3: #{transformer_forward.32} parent=0 // loop_header
    %s9 = sphi 0, %s13
    %p10 = scmp.ge.s32.totalorder %s9, 4
    %s19 = sphi 0, %s21
    %s22 = sphi 0, %s19
    %s23 = sphi 0, %s22
    %s39 = sphi 0, %s23
    %s45 = sphi 0, %s47
    %s48 = sphi 0, %s45
    %s49 = sphi 0, %s48
    %s65 = sphi 0, %s49
    %s71 = sphi 0, %s73
    %s74 = sphi 0, %s71
    %s75 = sphi 0, %s74
    %s91 = sphi 0, %s75
    %s97 = sphi 0, %s99
    %s100 = sphi 0, %s97
    %s101 = sphi 0, %s100
    %s117 = sphi 0, %s101
  $region4: #{transformer_forward.32} parent=0 // loop_header_branch
    %12 = sbr.rel (%p10) target = $region8
  $region5: #{transformer_forward.32} parent=0 // loop_body
    %s14 = ssub.s32 %s9, 1
    %s15 = ssub.s32 %s9, 2
    %s16 = sadd.s32 %s9, 1
    %s17 = ssub.s32 %s9, %s16
    %p18 = scmp.eq.s32.totalorder %s17, 0
    %s20 = sadd.s32 %s19, 1
    %s21 = scalar_select %p18, %s19, %s20
    %p24 = pneg %p18
    %p25 = scmp.eq.s32.totalorder %s9, 1
    %p26 = por %p24, %p25
    %p27 = scmp.ne.s32.totalorder %s19, %s22
    %p28 = scmp.eq.s32.totalorder %s9, 0
    %p29 = por %p27, %p28
    %p30 = scmp.ne.s32.totalorder %s19, %s22
    %p31 = scmp.eq.s32.totalorder %s14, 1
    %p32 = por %p30, %p31
    %p33 = scmp.ne.s32.totalorder %s22, %s23
    %p34 = scmp.eq.s32.totalorder %s14, 0
    %p35 = por %p33, %p34
    %p36 = scmp.ne.s32.totalorder %s22, %s23
    %p37 = scmp.eq.s32.totalorder %s15, 1
    %p38 = por %p36, %p37
    %p40 = scmp.ne.s32.totalorder %s23, %s39
    %p41 = scmp.eq.s32.totalorder %s15, 0
    %p42 = por %p40, %p41
    %s43 = ssub.s32 %s9, %s16
    %p44 = scmp.eq.s32.totalorder %s43, 0
    %s46 = sadd.s32 %s45, 1
    %s47 = scalar_select %p44, %s45, %s46
    %p50 = pneg %p44
    %p51 = scmp.eq.s32.totalorder %s9, 1
    %p52 = por %p50, %p51
    %p53 = scmp.ne.s32.totalorder %s45, %s48
    %p54 = scmp.eq.s32.totalorder %s9, 0
    %p55 = por %p53, %p54
    %p56 = scmp.ne.s32.totalorder %s45, %s48
    %p57 = scmp.eq.s32.totalorder %s14, 1
    %p58 = por %p56, %p57
    %p59 = scmp.ne.s32.totalorder %s48, %s49
    %p60 = scmp.eq.s32.totalorder %s14, 0
    %p61 = por %p59, %p60
    %p62 = scmp.ne.s32.totalorder %s48, %s49
    %p63 = scmp.eq.s32.totalorder %s15, 1
    %p64 = por %p62, %p63
    %p66 = scmp.ne.s32.totalorder %s49, %s65
    %p67 = scmp.eq.s32.totalorder %s15, 0
    %p68 = por %p66, %p67
    %s69 = ssub.s32 %s9, %s16
    %p70 = scmp.eq.s32.totalorder %s69, 0
    %s72 = sadd.s32 %s71, 1
    %s73 = scalar_select %p70, %s71, %s72
    %p76 = pneg %p70
    %p77 = scmp.eq.s32.totalorder %s9, 1
    %p78 = por %p76, %p77
    %p79 = scmp.ne.s32.totalorder %s71, %s74
    %p80 = scmp.eq.s32.totalorder %s9, 0
    %p81 = por %p79, %p80
    %p82 = scmp.ne.s32.totalorder %s71, %s74
    %p83 = scmp.eq.s32.totalorder %s14, 1
    %p84 = por %p82, %p83
    %p85 = scmp.ne.s32.totalorder %s74, %s75
    %p86 = scmp.eq.s32.totalorder %s14, 0
    %p87 = por %p85, %p86
    %p88 = scmp.ne.s32.totalorder %s74, %s75
    %p89 = scmp.eq.s32.totalorder %s15, 1
    %p90 = por %p88, %p89
    %p92 = scmp.ne.s32.totalorder %s75, %s91
    %p93 = scmp.eq.s32.totalorder %s15, 0
    %p94 = por %p92, %p93
    %s95 = ssub.s32 %s9, %s16
    %p96 = scmp.eq.s32.totalorder %s95, 0
    %s98 = sadd.s32 %s97, 1
    %s99 = scalar_select %p96, %s97, %s98
    %p102 = pneg %p96
    %p103 = scmp.eq.s32.totalorder %s9, 1
    %p104 = por %p102, %p103
    %p105 = scmp.ne.s32.totalorder %s97, %s100
    %p106 = scmp.eq.s32.totalorder %s9, 0
    %p107 = por %p105, %p106
    %p108 = scmp.ne.s32.totalorder %s97, %s100
    %p109 = scmp.eq.s32.totalorder %s14, 1
    %p110 = por %p108, %p109
    %p111 = scmp.ne.s32.totalorder %s100, %s101
    %p112 = scmp.eq.s32.totalorder %s14, 0
    %p113 = por %p111, %p112
    %p114 = scmp.ne.s32.totalorder %s100, %s101
    %p115 = scmp.eq.s32.totalorder %s15, 1
    %p116 = por %p114, %p115
    %p118 = scmp.ne.s32.totalorder %s101, %s117
    %p119 = scmp.eq.s32.totalorder %s15, 0
    %p120 = por %p118, %p119
    %p121 = scmp.le.s32.totalorder 1, %s9
    %p122 = scmp.lt.s32.totalorder %s9, 3
    %p123 = pnand %p121, %p122
    %p124 = pneg %p123
    // Predicated region
    $region9: #{transformer_forward.32} parent=5 // pred_check
      _
    $region10: #{transformer_forward.32} parent=5 // pred_check_branch
      %126 = sbr.rel (%p123) target = $region12
    $region11: #{transformer_forward.32} parent=5 // pred_region
      %s127 = ssub.s32 %s9, 1
    $region12: #{transformer_forward.32} parent=5 // pred_fallthru
      _
    %p128 = scmp.lt.s32.totalorder %s9, 2
    // Predicated region
    $region13: #{transformer_forward.32} parent=5 // pred_check
      %p129 = pneg %p128
    $region14: #{transformer_forward.32} parent=5 // pred_check_branch
      %131 = sbr.rel (%p129) target = $region16
    $region15: #{transformer_forward.32} parent=5 // pred_region
      // Predicated region
      $region17: #{transformer_forward.32} parent=15 // pred_check
        %p132 = pneg %p29
      $region18: #{transformer_forward.32} parent=15 // pred_check_branch
        %134 = sbr.rel (%p132) target = $region20
      $region19: #{transformer_forward.32} parent=15 // pred_region
        %p135 = scmp.lt.s32.totalorder %s9, 1
        %s136 = scalar_select %p135, %s9, 1
        %s137 = smul.addr %s136, 4
        %s138 = smul.addr %s137, 4
        %s139 = scalar_lea.vmem %s0, %s138
      $region20: #{transformer_forward.32} parent=15 // pred_fallthru
        _
      // Predicated region
      $region21: #{transformer_forward.32} parent=15 // pred_check
        %p140 = pneg %p55
      $region22: #{transformer_forward.32} parent=15 // pred_check_branch
        %142 = sbr.rel (%p140) target = $region24
      $region23: #{transformer_forward.32} parent=15 // pred_region
        %p143 = scmp.lt.s32.totalorder %s9, 1
        %s144 = scalar_select %p143, %s9, 1
        %s145 = smul.addr %s144, 8
        %s146 = smul.addr %s145, 4
        %s147 = scalar_lea.vmem %s1, %s146
      $region24: #{transformer_forward.32} parent=15 // pred_fallthru
        _
      // Predicated region
      $region25: #{transformer_forward.32} parent=15 // pred_check
        %p148 = pneg %p81
      $region26: #{transformer_forward.32} parent=15 // pred_check_branch
        %150 = sbr.rel (%p148) target = $region28
      $region27: #{transformer_forward.32} parent=15 // pred_region
        %p151 = scmp.lt.s32.totalorder %s9, 1
        %s152 = scalar_select %p151, %s9, 1
        %s153 = scalar_lea.vmem %s2, %s152
      $region28: #{transformer_forward.32} parent=15 // pred_fallthru
        _
    $region16: #{transformer_forward.32} parent=5 // pred_fallthru
      _
    %p154 = scmp.le.s32.totalorder 1, %s9
    %p155 = scmp.lt.s32.totalorder %s9, 3
    %p156 = pnand %p154, %p155
    %p157 = pneg %p156
    // Predicated region
    $region29: #{transformer_forward.32} parent=5 // pred_check
      _
    $region30: #{transformer_forward.32} parent=5 // pred_check_branch
      %159 = sbr.rel (%p156) target = $region32
    $region31: #{transformer_forward.32} parent=5 // pred_region
      %s160 = ssub.s32 %s9, 1
      %p161 = scmp.lt.s32.totalorder %s14, 1
      %s162 = scalar_select %p161, %s14, 1
      %s163 = smul.addr %s162, 4
      %s164 = smul.addr %s163, 4
      %s165 = scalar_lea.vmem %s0, %s164
      %p166 = pneg %p35
      %p167 = pneg %p32
      %p168 = scmp.lt.s32.totalorder %s14, 1
      %s169 = scalar_select %p168, %s14, 1
      %s170 = smul.addr %s169, 8
      %s171 = smul.addr %s170, 4
      %s172 = scalar_lea.vmem %s1, %s171
      %p173 = pneg %p61
      %p174 = pneg %p58
      %p175 = scmp.lt.s32.totalorder %s14, 1
      %s176 = scalar_select %p175, %s14, 1
      %s177 = scalar_lea.vmem %s2, %s176
      %p178 = pneg %p87
      %p179 = pneg %p84
      %p180 = pneg %p113
      %p181 = pneg %p110
      %p182 = scmp.lt.s32.totalorder %s14, 1
      %s183 = scalar_select %p182, %s14, 1
      %s184 = smul.addr %s183, 4
      %s185 = smul.addr %s184, 4
      %s186 = scalar_lea.vmem %s3, %s185
      %p187 = scmp.lt.s32.totalorder %s14, 1
      %s188 = scalar_select %p187, %s14, 1
      %s189 = smul.addr %s188, 4
      %s190 = smul.addr %s189, 4
      %s191 = scalar_lea.vmem %s0, %s190
      %p192 = scmp.lt.s32.totalorder %s14, 1
      %s193 = scalar_select %p192, %s14, 1
      %s194 = smul.addr %s193, 8
      %s195 = smul.addr %s194, 4
      %s196 = scalar_lea.vmem %s1, %s195
      %p197 = scmp.lt.s32.totalorder %s14, 1
      %s198 = scalar_select %p197, %s14, 1
      %s199 = scalar_lea.vmem %s2, %s198
      %p200 = scmp.lt.s32.totalorder %s14, 1
      %s201 = scalar_select %p200, %s14, 1
      %s202 = smul.addr %s201, 4
      %s203 = smul.addr %s202, 4
      %s204 = scalar_lea.vmem %s3, %s203
      %v206 = vld [vmem:[%s199] sm:$0x1]
      %v207 = vld [vmem:[%s191] sm:$0xf]
      %v208 = vld [vmem:[%s191 + $0x8] sm:$0xf]
      %v209 = vld [vmem:[%s196] sm:$0xf]
      %v210 = vld [vmem:[%s196 + $0x10] sm:$0xf]
      %v211 = vld [vmem:[%s196 + $0x8] sm:$0xf]
      %v212 = vld [vmem:[%s196 + $0x18] sm:$0xf]
      %v215 = vunpack.c.l.b16 %v207
      %v216 = vunpack.c.l.b16 %v208
      %v217 = vpack.c.b16 %v216, %v215
      %v221 = vunpack.c.l.b16 %v209
      %v222 = vunpack.c.l.b16 %v210
      %v223 = vpack.c.b16 %v222, %v221
      %225 = vmatprep.subr.bf16.mxu0 0
      %226 = vmatpush1.bf16.xpose.msra.mxu0 %v223
      %227 = vmatprep.subr.bf16.mxu0 0
      %228 = vmatpush1.bf16.xpose.msra.mxu0 0
      %229 = vmatprep.subr.bf16.mxu0 0
      %230 = vmatpush1.bf16.xpose.msra.mxu0 0
      %231 = vmatprep.subr.bf16.mxu0 0
      %232 = vmatpush1.bf16.xpose.msra.mxu0 0
      %233 = vmatprep.subr.bf16.mxu0 0
      %234 = vmatpush1.bf16.xpose.msra.mxu0 0
      %235 = vmatprep.subr.bf16.mxu0 0
      %236 = vmatpush1.bf16.xpose.msra.mxu0 0
      %237 = vmatprep.subr.bf16.mxu0 0
      %238 = vmatpush1.bf16.xpose.msra.mxu0 0
      %239 = vmatprep.subr.bf16.mxu0 0
      %240 = vmatpush1.bf16.xpose.msra.mxu0 0
      %241 = vmatprep.subr.bf16.mxu0 0
      %242 = vmatpush1.bf16.xpose.msra.mxu0 0
      %243 = vmatprep.subr.bf16.mxu0 0
      %244 = vmatpush1.bf16.xpose.msra.mxu0 0
      %245 = vmatprep.subr.bf16.mxu0 0
      %246 = vmatpush1.bf16.xpose.msra.mxu0 0
      %247 = vmatprep.subr.bf16.mxu0 0
      %248 = vmatpush1.bf16.xpose.msra.mxu0 0
      %249 = vmatprep.subr.bf16.mxu0 0
      %250 = vmatpush1.bf16.xpose.msra.mxu0 0
      %251 = vmatprep.subr.bf16.mxu0 0
      %252 = vmatpush1.bf16.xpose.msra.mxu0 0
      %253 = vmatprep.subr.bf16.mxu0 0
      %254 = vmatpush1.bf16.xpose.msra.mxu0 0
      %255 = vmatprep.subr.bf16.mxu0 0
      %256 = vmatpush1.bf16.xpose.msra.mxu0 0
      %257 = vmatprep.mubr.bf16.mxu0 0
      %258 = vmatmul.mubr.bf16.gmra.mrb[0].mxu0 %v217
      %v259 = vpop.f32.mrb[0].mxu0
      %v260 = vadd.f32 0.0, %v259
      %v261 = vpop.f32.mrb[0].mxu0
      %v262 = vpop.f32.mrb[0].mxu0
      %v263 = vadd.f32 0.0, %v262
      %v264 = vpop.f32.mrb[0].mxu0
      %265 = vdwg.mxu0
      %v266 = vmul.f32 %v260, 0.088388346
      %v267 = vmul.f32 %v263, 0.088388346
      %v269 = vlaneseq
      %v270 = vshrl.u32 %v269, 7
      %v271 = vsub.s32 0, %v270
      %v272 = vrot.slane %v206, %v271
      %v274 = vadd.f32 %v266, %v272
      %v275 = vadd.f32 %v267, %v272
      %vm276 = vcmask 130048
      %v277 = vsel %vm276, %v274, -inf
      %278 = vmax.xlane.f32.xlu0 %v277
      %v279 = vpop.xlane.xlu0 %278
      %v280 = vsel %vm276, %v275, -inf
      %281 = vmax.xlane.f32.xlu0 %v280
      %v282 = vpop.xlane.xlu0 %281
      %v283 = vsub.f32 %v274, %v279
      %v284 = vsub.f32 %v275, %v282
      %v285 = vmul.f32 %v283, 1.442695
      %v286 = vpow.pop %v285
      %v287 = vmul.f32 %v284, 1.442695
      %v288 = vpow.pop %v287
      %v289 = vsel %vm276, %v286, 0.0
      %290 = vadd.xlane.f32.xlu0 %v289
      %v291 = vpop.xlane.xlu0 %290
      %v292 = vsel %vm276, %v288, 0.0
      %293 = vadd.xlane.f32.xlu0 %v292
      %v294 = vpop.xlane.xlu0 %293
      %v295 = vrcp.pop %v291
      %v296 = vrcp.pop %v294
      %v297 = vmul.f32 %v286, %v295
      %v298 = vmul.f32 %v288, %v296
      %v299 = vpack.c.bf16 %v298, %v297
      %v302 = vunpack.c.l.b16 %v211
      %v303 = vunpack.c.l.b16 %v212
      %v304 = vpack.c.b16 %v303, %v302
      %v307 = vsel %vm276, %v299, 0
      %309 = vmatprep.subr.bf16.mxu0 0
      %310 = vmatpush1.bf16.msra.mxu0 %v304
      %311 = vmatprep.subr.bf16.mxu0 0
      %312 = vmatpush1.bf16.msra.mxu0 0
      %313 = vmatprep.subr.bf16.mxu0 0
      %314 = vmatpush1.bf16.msra.mxu0 0
      %315 = vmatprep.subr.bf16.mxu0 0
      %316 = vmatpush1.bf16.msra.mxu0 0
      %317 = vmatprep.subr.bf16.mxu0 0
      %318 = vmatpush1.bf16.msra.mxu0 0
      %319 = vmatprep.subr.bf16.mxu0 0
      %320 = vmatpush1.bf16.msra.mxu0 0
      %321 = vmatprep.subr.bf16.mxu0 0
      %322 = vmatpush1.bf16.msra.mxu0 0
      %323 = vmatprep.subr.bf16.mxu0 0
      %324 = vmatpush1.bf16.msra.mxu0 0
      %325 = vmatprep.subr.bf16.mxu0 0
      %326 = vmatpush1.bf16.msra.mxu0 0
      %327 = vmatprep.subr.bf16.mxu0 0
      %328 = vmatpush1.bf16.msra.mxu0 0
      %329 = vmatprep.subr.bf16.mxu0 0
      %330 = vmatpush1.bf16.msra.mxu0 0
      %331 = vmatprep.subr.bf16.mxu0 0
      %332 = vmatpush1.bf16.msra.mxu0 0
      %333 = vmatprep.subr.bf16.mxu0 0
      %334 = vmatpush1.bf16.msra.mxu0 0
      %335 = vmatprep.subr.bf16.mxu0 0
      %336 = vmatpush1.bf16.msra.mxu0 0
      %337 = vmatprep.subr.bf16.mxu0 0
      %338 = vmatpush1.bf16.msra.mxu0 0
      %339 = vmatprep.subr.bf16.mxu0 0
      %340 = vmatpush1.bf16.msra.mxu0 0
      %341 = vmatprep.mubr.bf16.mxu0 0
      %342 = vmatmul.mubr.bf16.gmra.mrb[0].mxu0 %v307
      %v343 = vpop.f32.mrb[0].mxu0
      %v344 = vadd.f32 0.0, %v343
      %v345 = vpop.f32.mrb[0].mxu0
      %v346 = vpop.f32.mrb[0].mxu0
      %v347 = vadd.f32 0.0, %v346
      %v348 = vpop.f32.mrb[0].mxu0
      %349 = vdwg.mxu0
      %v350 = vld [vmem:[%s191 + $0x4] sm:$0xf]
      %v351 = vld [vmem:[%s191 + $0xc] sm:$0xf]
      %v352 = vld [vmem:[%s196 + $0x4] sm:$0xf]
      %v353 = vld [vmem:[%s196 + $0x14] sm:$0xf]
      %v354 = vld [vmem:[%s196 + $0xc] sm:$0xf]
      %v355 = vld [vmem:[%s196 + $0x1c] sm:$0xf]
      %v358 = vunpack.c.l.b16 %v350
      %v359 = vunpack.c.l.b16 %v351
      %v360 = vpack.c.b16 %v359, %v358
      %v364 = vunpack.c.l.b16 %v352
      %v365 = vunpack.c.l.b16 %v353
      %v366 = vpack.c.b16 %v365, %v364
      %368 = vmatprep.subr.bf16.mxu0 0
      %369 = vmatpush1.bf16.xpose.msra.mxu0 %v366
      %370 = vmatprep.subr.bf16.mxu0 0
      %371 = vmatpush1.bf16.xpose.msra.mxu0 0
      %372 = vmatprep.subr.bf16.mxu0 0
      %373 = vmatpush1.bf16.xpose.msra.mxu0 0
      %374 = vmatprep.subr.bf16.mxu0 0
      %375 = vmatpush1.bf16.xpose.msra.mxu0 0
      %376 = vmatprep.subr.bf16.mxu0 0
      %377 = vmatpush1.bf16.xpose.msra.mxu0 0
      %378 = vmatprep.subr.bf16.mxu0 0
      %379 = vmatpush1.bf16.xpose.msra.mxu0 0
      %380 = vmatprep.subr.bf16.mxu0 0
      %381 = vmatpush1.bf16.xpose.msra.mxu0 0
      %382 = vmatprep.subr.bf16.mxu0 0
      %383 = vmatpush1.bf16.xpose.msra.mxu0 0
      %384 = vmatprep.subr.bf16.mxu0 0
      %385 = vmatpush1.bf16.xpose.msra.mxu0 0
      %386 = vmatprep.subr.bf16.mxu0 0
      %387 = vmatpush1.bf16.xpose.msra.mxu0 0
      %388 = vmatprep.subr.bf16.mxu0 0
      %389 = vmatpush1.bf16.xpose.msra.mxu0 0
      %390 = vmatprep.subr.bf16.mxu0 0
      %391 = vmatpush1.bf16.xpose.msra.mxu0 0
      %392 = vmatprep.subr.bf16.mxu0 0
      %393 = vmatpush1.bf16.xpose.msra.mxu0 0
      %394 = vmatprep.subr.bf16.mxu0 0
      %395 = vmatpush1.bf16.xpose.msra.mxu0 0
      %396 = vmatprep.subr.bf16.mxu0 0
      %397 = vmatpush1.bf16.xpose.msra.mxu0 0
      %398 = vmatprep.subr.bf16.mxu0 0
      %399 = vmatpush1.bf16.xpose.msra.mxu0 0
      %400 = vmatprep.mubr.bf16.mxu0 0
      %401 = vmatmul.mubr.bf16.gmra.mrb[0].mxu0 %v360
      %v402 = vpop.f32.mrb[0].mxu0
      %v403 = vadd.f32 0.0, %v402
      %v404 = vpop.f32.mrb[0].mxu0
      %v405 = vpop.f32.mrb[0].mxu0
      %v406 = vadd.f32 0.0, %v405
      %v407 = vpop.f32.mrb[0].mxu0
      %408 = vdwg.mxu0
      %v409 = vmul.f32 %v403, 0.088388346
      %v410 = vmul.f32 %v406, 0.088388346
      %v411 = vadd.f32 %v409, %v272
      %v412 = vadd.f32 %v410, %v272
      %v413 = vsel %vm276, %v411, -inf
      %414 = vmax.xlane.f32.xlu0 %v413
      %v415 = vpop.xlane.xlu0 %414
      %v416 = vsel %vm276, %v412, -inf
      %417 = vmax.xlane.f32.xlu0 %v416
      %v418 = vpop.xlane.xlu0 %417
      %v419 = vsub.f32 %v411, %v415
      %v420 = vsub.f32 %v412, %v418
      %v421 = vmul.f32 %v419, 1.442695
      %v422 = vpow.pop %v421
      %v423 = vmul.f32 %v420, 1.442695
      %v424 = vpow.pop %v423
      %v425 = vsel %vm276, %v422, 0.0
      %426 = vadd.xlane.f32.xlu0 %v425
      %v427 = vpop.xlane.xlu0 %426
      %v428 = vsel %vm276, %v424, 0.0
      %429 = vadd.xlane.f32.xlu0 %v428
      %v430 = vpop.xlane.xlu0 %429
      %v431 = vrcp.pop %v427
      %v432 = vrcp.pop %v430
      %v433 = vmul.f32 %v422, %v431
      %v434 = vmul.f32 %v424, %v432
      %v435 = vpack.c.bf16 %v434, %v433
      %v438 = vunpack.c.l.b16 %v354
      %v439 = vunpack.c.l.b16 %v355
      %v440 = vpack.c.b16 %v439, %v438
      %v443 = vsel %vm276, %v435, 0
      %445 = vmatprep.subr.bf16.mxu0 0
      %446 = vmatpush1.bf16.msra.mxu0 %v440
      %447 = vmatprep.subr.bf16.mxu0 0
      %448 = vmatpush1.bf16.msra.mxu0 0
      %449 = vmatprep.subr.bf16.mxu0 0
      %450 = vmatpush1.bf16.msra.mxu0 0
      %451 = vmatprep.subr.bf16.mxu0 0
      %452 = vmatpush1.bf16.msra.mxu0 0
      %453 = vmatprep.subr.bf16.mxu0 0
      %454 = vmatpush1.bf16.msra.mxu0 0
      %455 = vmatprep.subr.bf16.mxu0 0
      %456 = vmatpush1.bf16.msra.mxu0 0
      %457 = vmatprep.subr.bf16.mxu0 0
      %458 = vmatpush1.bf16.msra.mxu0 0
      %459 = vmatprep.subr.bf16.mxu0 0
      %460 = vmatpush1.bf16.msra.mxu0 0
      %461 = vmatprep.subr.bf16.mxu0 0
      %462 = vmatpush1.bf16.msra.mxu0 0
      %463 = vmatprep.subr.bf16.mxu0 0
      %464 = vmatpush1.bf16.msra.mxu0 0
      %465 = vmatprep.subr.bf16.mxu0 0
      %466 = vmatpush1.bf16.msra.mxu0 0
      %467 = vmatprep.subr.bf16.mxu0 0
      %468 = vmatpush1.bf16.msra.mxu0 0
      %469 = vmatprep.subr.bf16.mxu0 0
      %470 = vmatpush1.bf16.msra.mxu0 0
      %471 = vmatprep.subr.bf16.mxu0 0
      %472 = vmatpush1.bf16.msra.mxu0 0
      %473 = vmatprep.subr.bf16.mxu0 0
      %474 = vmatpush1.bf16.msra.mxu0 0
      %475 = vmatprep.subr.bf16.mxu0 0
      %476 = vmatpush1.bf16.msra.mxu0 0
      %477 = vmatprep.mubr.bf16.mxu0 0
      %478 = vmatmul.mubr.bf16.gmra.mrb[0].mxu0 %v443
      %v479 = vpop.f32.mrb[0].mxu0
      %v480 = vadd.f32 0.0, %v479
      %v481 = vpop.f32.mrb[0].mxu0
      %v482 = vpop.f32.mrb[0].mxu0
      %v483 = vadd.f32 0.0, %v482
      %v484 = vpop.f32.mrb[0].mxu0
      %485 = vdwg.mxu0
      %v486 = vpack.c.bf16 %v347, %v344
      %v487 = vpack.c.bf16 %v483, %v480
      %v490 = vunpack.c.l.b16 %v486
      %v491 = vunpack.c.l.b16 %v487
      %v492 = vunpack.c.h.b16 %v486
      %v493 = vunpack.c.h.b16 %v487
      %v494 = vpack.c.b16 %v491, %v490
      %v495 = vpack.c.b16 %v493, %v492
      %498 = vst [vmem:[%s204] sm:$0xff] %v494
      %499 = vst [vmem:[%s204 + $0x8] sm:$0xff] %v495
      %p500 = scmp.lt.s32.totalorder %s14, 1
      %s501 = scalar_select %p500, %s14, 1
      %s502 = smul.addr %s501, 4
      %s503 = smul.addr %s502, 4
      %s504 = scalar_lea.vmem %s3, %s503
      // Predicated region
      $region33: #{transformer_forward.32} parent=31 // pred_check
        %p505 = pneg %p110
      $region34: #{transformer_forward.32} parent=31 // pred_check_branch
        %507 = sbr.rel (%p505) target = $region36
      $region35: #{transformer_forward.32} parent=31 // pred_region
        _
      $region36: #{transformer_forward.32} parent=31 // pred_fallthru
        _
    $region32: #{transformer_forward.32} parent=5 // pred_fallthru
      _
    %p508 = scmp.le.s32.totalorder 2, %s9
    // Predicated region
    $region37: #{transformer_forward.32} parent=5 // pred_check
      %p509 = pneg %p508
    $region38: #{transformer_forward.32} parent=5 // pred_check_branch
      %511 = sbr.rel (%p509) target = $region40
    $region39: #{transformer_forward.32} parent=5 // pred_region
      %s512 = ssub.s32 %s9, 2
      // Predicated region
      $region41: #{transformer_forward.32} parent=39 // pred_check
        %p513 = pneg %p116
      $region42: #{transformer_forward.32} parent=39 // pred_check_branch
        %515 = sbr.rel (%p513) target = $region44
      $region43: #{transformer_forward.32} parent=39 // pred_region
        %p516 = scmp.lt.s32.totalorder %s15, 1
        %s517 = scalar_select %p516, %s15, 1
        %s518 = smul.addr %s517, 4
        %s519 = smul.addr %s518, 4
        %s520 = scalar_lea.vmem %s3, %s519
      $region44: #{transformer_forward.32} parent=39 // pred_fallthru
        _
    $region40: #{transformer_forward.32} parent=5 // pred_fallthru
      _
  $region6: #{transformer_forward.32} parent=0 // loop_footer
    %s13 = sadd.s32 1, %s9
  $region7: #{transformer_forward.32} parent=0 // loop_footer_branch
    %8 = sbr.rel target = $region3
  $region8: #{transformer_forward.32} parent=0 // loop_exit
    _

// kernel: transformer_forward.33
$region0: #{transformer_forward.33}
  #allocation0 [shape = 'u32[]', space=smem, size = 0x4, offset = 0x4, fixed_abs, tag = 'smem constant byte address 0x4 - core index']
  #allocation1 [shape = 'u32[144,128]{1,0:T(1,128)}', space=vmem, size = 0x12000, scoped, tag = 'internal scratch']
  %s0 = inlined_call_operand.vmem [shape: bf16[32,256], index: 0, kind: input, shape index: {}]
  %s1 = inlined_call_operand.vmem [shape: bf16[256,256], index: 1, kind: input, shape index: {}]
  %s2 = inlined_call_operand.vmem [shape: f32[1,256], index: 2, kind: input, shape index: {}]
  %s3 = inlined_call_operand.vmem [shape: bf16[32,256], index: 3, kind: input, shape index: {}]
  %s4 = inlined_call_operand.vmem [shape: f32[1,256], index: 4, kind: input, shape index: {}]
  %s5 = inlined_call_operand.vmem [shape: f32[1,256], index: 5, kind: input, shape index: {}]
  %s6 = inlined_call_operand.vmem [shape: bf16[32,256], index: 6, kind: output, shape index: {}]
  %s7 = sld [smem:[#allocation0]]
  $region34: #{transformer_forward.33} parent=0
    _
  %s9 = ssub.s32 1, %s7
  %s10 = scalar_select 0, %s9, %s7
  // Predicated region
  $region2: #{transformer_forward.33} parent=0 // pred_check
    _
  $region3: #{transformer_forward.33} parent=0 // pred_check_branch
    %12 = sbr.rel (0) target = $region5
  $region4: #{transformer_forward.33} parent=0 // pred_region
    _
  $region5: #{transformer_forward.33} parent=0 // pred_fallthru
    _
  // Predicated region
  $region6: #{transformer_forward.33} parent=0 // pred_check
    _
  $region7: #{transformer_forward.33} parent=0 // pred_check_branch
    %14 = sbr.rel (0) target = $region9
  $region8: #{transformer_forward.33} parent=0 // pred_region
    _
  $region9: #{transformer_forward.33} parent=0 // pred_fallthru
    _
  // Predicated region
  $region10: #{transformer_forward.33} parent=0 // pred_check
    _
  $region11: #{transformer_forward.33} parent=0 // pred_check_branch
    %16 = sbr.rel (0) target = $region13
  $region12: #{transformer_forward.33} parent=0 // pred_region
    _
  $region13: #{transformer_forward.33} parent=0 // pred_fallthru
    _
  // Predicated region
  $region14: #{transformer_forward.33} parent=0 // pred_check
    _
  $region15: #{transformer_forward.33} parent=0 // pred_check_branch
    %18 = sbr.rel (0) target = $region17
  $region16: #{transformer_forward.33} parent=0 // pred_region
    _
  $region17: #{transformer_forward.33} parent=0 // pred_fallthru
    _
  // Predicated region
  $region18: #{transformer_forward.33} parent=0 // pred_check
    _
  $region19: #{transformer_forward.33} parent=0 // pred_check_branch
    %20 = sbr.rel (0) target = $region21
  $region20: #{transformer_forward.33} parent=0 // pred_region
    _
  $region21: #{transformer_forward.33} parent=0 // pred_fallthru
    _
  // Predicated region
  $region22: #{transformer_forward.33} parent=0 // pred_check
    _
  $region23: #{transformer_forward.33} parent=0 // pred_check_branch
    %22 = sbr.rel (0) target = $region25
  $region24: #{transformer_forward.33} parent=0 // pred_region
    _
  $region25: #{transformer_forward.33} parent=0 // pred_fallthru
    _
  %v23 = vld [vmem:[%s0] sm:$0xff]
  %v24 = vld [vmem:[%s0 + $0x8] sm:$0xff]
  %v25 = vld [vmem:[%s0 + $0x10] sm:$0xff]
  %v26 = vld [vmem:[%s0 + $0x18] sm:$0xff]
  %v27 = vld [vmem:[%s1] sm:$0xff]
  %v28 = vld [vmem:[%s1 + $0x8] sm:$0xff]
  %v29 = vld [vmem:[%s1 + $0x10] sm:$0xff]
  %v30 = vld [vmem:[%s1 + $0x18] sm:$0xff]
  %v31 = vld [vmem:[%s1 + $0x20] sm:$0xff]
  %v32 = vld [vmem:[%s1 + $0x28] sm:$0xff]
  %v33 = vld [vmem:[%s1 + $0x30] sm:$0xff]
  %v34 = vld [vmem:[%s1 + $0x38] sm:$0xff]
  %v35 = vld [vmem:[%s1 + $0x40] sm:$0xff]
  %v36 = vld [vmem:[%s1 + $0x48] sm:$0xff]
  %v37 = vld [vmem:[%s1 + $0x50] sm:$0xff]
  %v38 = vld [vmem:[%s1 + $0x58] sm:$0xff]
  %v39 = vld [vmem:[%s1 + $0x60] sm:$0xff]
  %v40 = vld [vmem:[%s1 + $0x68] sm:$0xff]
  %v41 = vld [vmem:[%s1 + $0x70] sm:$0xff]
  %v42 = vld [vmem:[%s1 + $0x78] sm:$0xff]
  %v43 = vld [vmem:[%s1 + $0x80] sm:$0xff]
  %v44 = vld [vmem:[%s1 + $0x88] sm:$0xff]
  %v45 = vld [vmem:[%s1 + $0x90] sm:$0xff]
  %v46 = vld [vmem:[%s1 + $0x98] sm:$0xff]
  %v47 = vld [vmem:[%s1 + $0xa0] sm:$0xff]
  %v48 = vld [vmem:[%s1 + $0xa8] sm:$0xff]
  %v49 = vld [vmem:[%s1 + $0xb0] sm:$0xff]
  %v50 = vld [vmem:[%s1 + $0xb8] sm:$0xff]
  %v51 = vld [vmem:[%s1 + $0xc0] sm:$0xff]
  %v52 = vld [vmem:[%s1 + $0xc8] sm:$0xff]
  %v53 = vld [vmem:[%s1 + $0xd0] sm:$0xff]
  %v54 = vld [vmem:[%s1 + $0xd8] sm:$0xff]
  %v55 = vld [vmem:[%s1 + $0xe0] sm:$0xff]
  %v56 = vld [vmem:[%s1 + $0xe8] sm:$0xff]
  %v57 = vld [vmem:[%s1 + $0xf0] sm:$0xff]
  %v58 = vld [vmem:[%s1 + $0xf8] sm:$0xff]
  %v59 = vld [vmem:[%s2] sm:$0x3]
  %v61 = vlaneseq
  %v62 = vshrl.u32 %v61, 7
  %v63 = vsub.s32 0, %v62
  %v64 = vrot.slane %v59, %v63
  %v65 = vlaneseq
  %v66 = vshrl.u32 %v65, 7
  %v67 = vsub.s32 1, %v66
  %v68 = vrot.slane %v59, %v67
  %v75 = vunpack.c.l.b16 %v23
  %v76 = vunpack.c.h.b16 %v23
  %v77 = vunpack.c.l.b16 %v24
  %v78 = vunpack.c.h.b16 %v24
  %v79 = vunpack.c.l.b16 %v25
  %v80 = vunpack.c.h.b16 %v25
  %v81 = vunpack.c.l.b16 %v26
  %v82 = vunpack.c.h.b16 %v26
  %v83 = vpack.c.b16 %v77, %v75
  %v84 = vpack.c.b16 %v78, %v76
  %v85 = vpack.c.b16 %v81, %v79
  %v86 = vpack.c.b16 %v82, %v80
  %v123 = vunpack.c.l.b16 %v27
  %v124 = vunpack.c.h.b16 %v27
  %v125 = vunpack.c.l.b16 %v28
  %v126 = vunpack.c.h.b16 %v28
  %v127 = vunpack.c.l.b16 %v29
  %v128 = vunpack.c.h.b16 %v29
  %v129 = vunpack.c.l.b16 %v30
  %v130 = vunpack.c.h.b16 %v30
  %v131 = vunpack.c.l.b16 %v31
  %v132 = vunpack.c.h.b16 %v31
  %v133 = vunpack.c.l.b16 %v32
  %v134 = vunpack.c.h.b16 %v32
  %v135 = vunpack.c.l.b16 %v33
  %v136 = vunpack.c.h.b16 %v33
  %v137 = vunpack.c.l.b16 %v34
  %v138 = vunpack.c.h.b16 %v34
  %v139 = vunpack.c.l.b16 %v35
  %v140 = vunpack.c.h.b16 %v35
  %v141 = vunpack.c.l.b16 %v36
  %v142 = vunpack.c.h.b16 %v36
  %v143 = vunpack.c.l.b16 %v37
  %v144 = vunpack.c.h.b16 %v37
  %v145 = vunpack.c.l.b16 %v38
  %v146 = vunpack.c.h.b16 %v38
  %v147 = vunpack.c.l.b16 %v39
  %v148 = vunpack.c.h.b16 %v39
  %v149 = vunpack.c.l.b16 %v40
  %v150 = vunpack.c.h.b16 %v40
  %v151 = vunpack.c.l.b16 %v41
  %v152 = vunpack.c.h.b16 %v41
  %v153 = vunpack.c.l.b16 %v42
  %v154 = vunpack.c.h.b16 %v42
  %v155 = vunpack.c.l.b16 %v43
  %v156 = vunpack.c.h.b16 %v43
  %v157 = vunpack.c.l.b16 %v44
  %v158 = vunpack.c.h.b16 %v44
  %v159 = vunpack.c.l.b16 %v45
  %v160 = vunpack.c.h.b16 %v45
  %v161 = vunpack.c.l.b16 %v46
  %v162 = vunpack.c.h.b16 %v46
  %v163 = vunpack.c.l.b16 %v47
  %v164 = vunpack.c.h.b16 %v47
  %v165 = vunpack.c.l.b16 %v48
  %v166 = vunpack.c.h.b16 %v48
  %v167 = vunpack.c.l.b16 %v49
  %v168 = vunpack.c.h.b16 %v49
  %v169 = vunpack.c.l.b16 %v50
  %v170 = vunpack.c.h.b16 %v50
  %v171 = vunpack.c.l.b16 %v51
  %v172 = vunpack.c.h.b16 %v51
  %v173 = vunpack.c.l.b16 %v52
  %v174 = vunpack.c.h.b16 %v52
  %v175 = vunpack.c.l.b16 %v53
  %v176 = vunpack.c.h.b16 %v53
  %v177 = vunpack.c.l.b16 %v54
  %v178 = vunpack.c.h.b16 %v54
  %v179 = vunpack.c.l.b16 %v55
  %v180 = vunpack.c.h.b16 %v55
  %v181 = vunpack.c.l.b16 %v56
  %v182 = vunpack.c.h.b16 %v56
  %v183 = vunpack.c.l.b16 %v57
  %v184 = vunpack.c.h.b16 %v57
  %v185 = vunpack.c.l.b16 %v58
  %v186 = vunpack.c.h.b16 %v58
  %v187 = vpack.c.b16 %v125, %v123
  %v188 = vpack.c.b16 %v126, %v124
  %v189 = vpack.c.b16 %v129, %v127
  %v190 = vpack.c.b16 %v130, %v128
  %v191 = vpack.c.b16 %v133, %v131
  %v192 = vpack.c.b16 %v134, %v132
  %v193 = vpack.c.b16 %v137, %v135
  %v194 = vpack.c.b16 %v138, %v136
  %v195 = vpack.c.b16 %v141, %v139
  %v196 = vpack.c.b16 %v142, %v140
  %v197 = vpack.c.b16 %v145, %v143
  %v198 = vpack.c.b16 %v146, %v144
  %v199 = vpack.c.b16 %v149, %v147
  %v200 = vpack.c.b16 %v150, %v148
  %v201 = vpack.c.b16 %v153, %v151
  %v202 = vpack.c.b16 %v154, %v152
  %v203 = vpack.c.b16 %v157, %v155
  %v204 = vpack.c.b16 %v158, %v156
  %v205 = vpack.c.b16 %v161, %v159
  %v206 = vpack.c.b16 %v162, %v160
  %v207 = vpack.c.b16 %v165, %v163
  %v208 = vpack.c.b16 %v166, %v164
  %v209 = vpack.c.b16 %v169, %v167
  %v210 = vpack.c.b16 %v170, %v168
  %v211 = vpack.c.b16 %v173, %v171
  %v212 = vpack.c.b16 %v174, %v172
  %v213 = vpack.c.b16 %v177, %v175
  %v214 = vpack.c.b16 %v178, %v176
  %v215 = vpack.c.b16 %v181, %v179
  %v216 = vpack.c.b16 %v182, %v180
  %v217 = vpack.c.b16 %v185, %v183
  %v218 = vpack.c.b16 %v186, %v184
  %251 = vmatprep.subr.bf16.mxu0 %v188
  %252 = vmatpush1.bf16.msra.mxu0 %v187
  %253 = vmatprep.subr.bf16.mxu0 %v190
  %254 = vmatpush1.bf16.msra.mxu0 %v189
  %255 = vmatprep.subr.bf16.mxu0 %v192
  %256 = vmatpush1.bf16.msra.mxu0 %v191
  %257 = vmatprep.subr.bf16.mxu0 %v194
  %258 = vmatpush1.bf16.msra.mxu0 %v193
  %259 = vmatprep.subr.bf16.mxu0 %v196
  %260 = vmatpush1.bf16.msra.mxu0 %v195
  %261 = vmatprep.subr.bf16.mxu0 %v198
  %262 = vmatpush1.bf16.msra.mxu0 %v197
  %263 = vmatprep.subr.bf16.mxu0 %v200
  %264 = vmatpush1.bf16.msra.mxu0 %v199
  %265 = vmatprep.subr.bf16.mxu0 %v202
  %266 = vmatpush1.bf16.msra.mxu0 %v201
  %267 = vmatprep.subr.bf16.mxu0 %v204
  %268 = vmatpush1.bf16.msra.mxu0 %v203
  %269 = vmatprep.subr.bf16.mxu0 %v206
  %270 = vmatpush1.bf16.msra.mxu0 %v205
  %271 = vmatprep.subr.bf16.mxu0 %v208
  %272 = vmatpush1.bf16.msra.mxu0 %v207
  %273 = vmatprep.subr.bf16.mxu0 %v210
  %274 = vmatpush1.bf16.msra.mxu0 %v209
  %275 = vmatprep.subr.bf16.mxu0 %v212
  %276 = vmatpush1.bf16.msra.mxu0 %v211
  %277 = vmatprep.subr.bf16.mxu0 %v214
  %278 = vmatpush1.bf16.msra.mxu0 %v213
  %279 = vmatprep.subr.bf16.mxu0 %v216
  %280 = vmatpush1.bf16.msra.mxu0 %v215
  %281 = vmatprep.subr.bf16.mxu0 %v218
  %282 = vmatpush1.bf16.msra.mxu0 %v217
  %283 = vmatprep.mubr.bf16.mxu0 %v84
  %284 = vmatmul.mubr.bf16.gmra.mrb[0].mxu0 %v83
  %v285 = vpop.f32.mrb[0].mxu0
  %v286 = vadd.f32 %v64, %v285
  %v287 = vpop.f32.mrb[0].mxu0
  %v288 = vadd.f32 %v68, %v287
  %v289 = vpop.f32.mrb[0].mxu0
  %v290 = vadd.f32 %v64, %v289
  %v291 = vpop.f32.mrb[0].mxu0
  %v292 = vadd.f32 %v68, %v291
  %293 = vmatprep.mubr.bf16.mxu0 %v86
  %294 = vmatmul.mubr.bf16.gmra.mrb[0].mxu0 %v85
  %v295 = vpop.f32.mrb[0].mxu0
  %v296 = vadd.f32 %v64, %v295
  %v297 = vpop.f32.mrb[0].mxu0
  %v298 = vadd.f32 %v68, %v297
  %v299 = vpop.f32.mrb[0].mxu0
  %v300 = vadd.f32 %v64, %v299
  %v301 = vpop.f32.mrb[0].mxu0
  %v302 = vadd.f32 %v68, %v301
  %303 = vdwg.mxu0
  %v304 = vld [vmem:[%s3] sm:$0xff]
  %v305 = vld [vmem:[%s3 + $0x8] sm:$0xff]
  %v306 = vld [vmem:[%s3 + $0x10] sm:$0xff]
  %v307 = vld [vmem:[%s3 + $0x18] sm:$0xff]
  %v308 = vunpack.c.l.bf16 %v304
  %v309 = vunpack.c.h.bf16 %v304
  %v310 = vunpack.c.l.bf16 %v305
  %v311 = vunpack.c.h.bf16 %v305
  %v312 = vunpack.c.l.bf16 %v306
  %v313 = vunpack.c.h.bf16 %v306
  %v314 = vunpack.c.l.bf16 %v307
  %v315 = vunpack.c.h.bf16 %v307
  %v316 = vadd.f32 %v286, %v308
  %v317 = vadd.f32 %v288, %v309
  %v318 = vadd.f32 %v290, %v310
  %v319 = vadd.f32 %v292, %v311
  %v320 = vadd.f32 %v296, %v312
  %v321 = vadd.f32 %v298, %v313
  %v322 = vadd.f32 %v300, %v314
  %v323 = vadd.f32 %v302, %v315
  %v324 = vadd.f32 %v316, %v317
  %325 = vadd.xlane.f32.xlu0 %v324
  %v326 = vpop.xlane.xlu0 %325
  %v327 = vadd.f32 %v318, %v319
  %328 = vadd.xlane.f32.xlu0 %v327
  %v329 = vpop.xlane.xlu0 %328
  %v330 = vadd.f32 %v320, %v321
  %331 = vadd.xlane.f32.xlu0 %v330
  %v332 = vpop.xlane.xlu0 %331
  %v333 = vadd.f32 %v322, %v323
  %334 = vadd.xlane.f32.xlu0 %v333
  %v335 = vpop.xlane.xlu0 %334
  %v336 = vrcp.pop 256.0
  %v337 = vmul.f32 %v326, %v336
  %v338 = vmul.f32 %v329, %v336
  %v339 = vmul.f32 %v332, %v336
  %v340 = vmul.f32 %v335, %v336
  %v341 = vsub.f32 %v316, %v337
  %v342 = vsub.f32 %v317, %v337
  %v343 = vsub.f32 %v318, %v338
  %v344 = vsub.f32 %v319, %v338
  %v345 = vsub.f32 %v320, %v339
  %v346 = vsub.f32 %v321, %v339
  %v347 = vsub.f32 %v322, %v340
  %v348 = vsub.f32 %v323, %v340
  %v349 = vmul.f32 %v341, %v341
  %v350 = vmul.f32 %v342, %v342
  %v351 = vmul.f32 %v343, %v343
  %v352 = vmul.f32 %v344, %v344
  %v353 = vmul.f32 %v345, %v345
  %v354 = vmul.f32 %v346, %v346
  %v355 = vmul.f32 %v347, %v347
  %v356 = vmul.f32 %v348, %v348
  %v357 = vadd.f32 %v349, %v350
  %358 = vadd.xlane.f32.xlu0 %v357
  %v359 = vpop.xlane.xlu0 %358
  %v360 = vadd.f32 %v351, %v352
  %361 = vadd.xlane.f32.xlu0 %v360
  %v362 = vpop.xlane.xlu0 %361
  %v363 = vadd.f32 %v353, %v354
  %364 = vadd.xlane.f32.xlu0 %v363
  %v365 = vpop.xlane.xlu0 %364
  %v366 = vadd.f32 %v355, %v356
  %367 = vadd.xlane.f32.xlu0 %v366
  %v368 = vpop.xlane.xlu0 %367
  %v369 = vmul.f32 %v359, %v336
  %v370 = vmul.f32 %v362, %v336
  %v371 = vmul.f32 %v365, %v336
  %v372 = vmul.f32 %v368, %v336
  %v373 = vadd.f32 %v369, 1e-05
  %v374 = vadd.f32 %v370, 1e-05
  %v375 = vadd.f32 %v371, 1e-05
  %v376 = vadd.f32 %v372, 1e-05
  %v377 = vrsqrt.pop %v373
  %v378 = vrsqrt.pop %v374
  %v379 = vrsqrt.pop %v375
  %v380 = vrsqrt.pop %v376
  %v381 = vmul.f32 %v341, %v377
  %v382 = vmul.f32 %v342, %v377
  %v383 = vmul.f32 %v343, %v378
  %v384 = vmul.f32 %v344, %v378
  %v385 = vmul.f32 %v345, %v379
  %v386 = vmul.f32 %v346, %v379
  %v387 = vmul.f32 %v347, %v380
  %v388 = vmul.f32 %v348, %v380
  %v389 = vld [vmem:[%s4] sm:$0x3]
  %v391 = vlaneseq
  %v392 = vshrl.u32 %v391, 7
  %v393 = vsub.s32 0, %v392
  %v394 = vrot.slane %v389, %v393
  %v395 = vlaneseq
  %v396 = vshrl.u32 %v395, 7
  %v397 = vsub.s32 1, %v396
  %v398 = vrot.slane %v389, %v397
  %v401 = vmul.f32 %v381, %v394
  %v402 = vmul.f32 %v382, %v398
  %v403 = vmul.f32 %v383, %v394
  %v404 = vmul.f32 %v384, %v398
  %v405 = vmul.f32 %v385, %v394
  %v406 = vmul.f32 %v386, %v398
  %v407 = vmul.f32 %v387, %v394
  %v408 = vmul.f32 %v388, %v398
  %v409 = vld [vmem:[%s5] sm:$0x3]
  %v411 = vlaneseq
  %v412 = vshrl.u32 %v411, 7
  %v413 = vsub.s32 0, %v412
  %v414 = vrot.slane %v409, %v413
  %v415 = vlaneseq
  %v416 = vshrl.u32 %v415, 7
  %v417 = vsub.s32 1, %v416
  %v418 = vrot.slane %v409, %v417
  %v421 = vadd.f32 %v401, %v414
  %v422 = vadd.f32 %v402, %v418
  %v423 = vadd.f32 %v403, %v414
  %v424 = vadd.f32 %v404, %v418
  %v425 = vadd.f32 %v405, %v414
  %v426 = vadd.f32 %v406, %v418
  %v427 = vadd.f32 %v407, %v414
  %v428 = vadd.f32 %v408, %v418
  %v429 = vpack.c.bf16 %v423, %v421
  %v430 = vpack.c.bf16 %v424, %v422
  %v431 = vpack.c.bf16 %v427, %v425
  %v432 = vpack.c.bf16 %v428, %v426
  %v437 = vunpack.c.l.b16 %v429
  %v438 = vunpack.c.l.b16 %v430
  %v439 = vunpack.c.h.b16 %v429
  %v440 = vunpack.c.h.b16 %v430
  %v441 = vunpack.c.l.b16 %v431
  %v442 = vunpack.c.l.b16 %v432
  %v443 = vunpack.c.h.b16 %v431
  %v444 = vunpack.c.h.b16 %v432
  %v445 = vpack.c.b16 %v438, %v437
  %v446 = vpack.c.b16 %v440, %v439
  %v447 = vpack.c.b16 %v442, %v441
  %v448 = vpack.c.b16 %v444, %v443
  %453 = vst [vmem:[%s6] sm:$0xff] %v445
  %454 = vst [vmem:[%s6 + $0x8] sm:$0xff] %v446
  %455 = vst [vmem:[%s6 + $0x10] sm:$0xff] %v447
  %456 = vst [vmem:[%s6 + $0x18] sm:$0xff] %v448
  // Predicated region
  $region26: #{transformer_forward.33} parent=0 // pred_check
    _
  $region27: #{transformer_forward.33} parent=0 // pred_check_branch
    %458 = sbr.rel (0) target = $region29
  $region28: #{transformer_forward.33} parent=0 // pred_region
    _
  $region29: #{transformer_forward.33} parent=0 // pred_fallthru
    _
  // Predicated region
  $region30: #{transformer_forward.33} parent=0 // pred_check
    _
  $region31: #{transformer_forward.33} parent=0 // pred_check_branch
    %460 = sbr.rel (0) target = $region33
  $region32: #{transformer_forward.33} parent=0 // pred_region
    _
  $region33: #{transformer_forward.33} parent=0 // pred_fallthru
    _

// kernel: transformer_forward.40
$region0: #{transformer_forward.40}
  #allocation0 [shape = 'u32[]', space=smem, size = 0x4, offset = 0x4, fixed_abs, tag = 'smem constant byte address 0x4 - core index']
  #allocation1 [shape = 'u32[144,128]{1,0:T(1,128)}', space=vmem, size = 0x12000, scoped, tag = 'internal scratch']
  %s0 = inlined_call_operand.vmem [shape: bf16[32,256], index: 0, kind: input, shape index: {}]
  %s1 = inlined_call_operand.vmem [shape: f32[1,256], index: 1, kind: input, shape index: {}]
  %s2 = inlined_call_operand.vmem [shape: f32[1,256], index: 2, kind: input, shape index: {}]
  %s3 = inlined_call_operand.vmem [shape: bf16[32,256], index: 3, kind: output, shape index: {}]
  %s4 = sld [smem:[#allocation0]]
  $region22: #{transformer_forward.40} parent=0
    _
  %s6 = ssub.s32 1, %s4
  %s7 = scalar_select 0, %s6, %s4
  // Predicated region
  $region2: #{transformer_forward.40} parent=0 // pred_check
    _
  $region3: #{transformer_forward.40} parent=0 // pred_check_branch
    %9 = sbr.rel (0) target = $region5
  $region4: #{transformer_forward.40} parent=0 // pred_region
    _
  $region5: #{transformer_forward.40} parent=0 // pred_fallthru
    _
  // Predicated region
  $region6: #{transformer_forward.40} parent=0 // pred_check
    _
  $region7: #{transformer_forward.40} parent=0 // pred_check_branch
    %11 = sbr.rel (0) target = $region9
  $region8: #{transformer_forward.40} parent=0 // pred_region
    _
  $region9: #{transformer_forward.40} parent=0 // pred_fallthru
    _
  // Predicated region
  $region10: #{transformer_forward.40} parent=0 // pred_check
    _
  $region11: #{transformer_forward.40} parent=0 // pred_check_branch
    %13 = sbr.rel (0) target = $region13
  $region12: #{transformer_forward.40} parent=0 // pred_region
    _
  $region13: #{transformer_forward.40} parent=0 // pred_fallthru
    _
  %v14 = vld [vmem:[%s0] sm:$0xff]
  %v15 = vld [vmem:[%s0 + $0x8] sm:$0xff]
  %v16 = vld [vmem:[%s0 + $0x10] sm:$0xff]
  %v17 = vld [vmem:[%s0 + $0x18] sm:$0xff]
  %v18 = vunpack.c.l.bf16 %v14
  %v19 = vunpack.c.h.bf16 %v14
  %v20 = vunpack.c.l.bf16 %v15
  %v21 = vunpack.c.h.bf16 %v15
  %v22 = vunpack.c.l.bf16 %v16
  %v23 = vunpack.c.h.bf16 %v16
  %v24 = vunpack.c.l.bf16 %v17
  %v25 = vunpack.c.h.bf16 %v17
  %v26 = vadd.f32 %v18, %v19
  %27 = vadd.xlane.f32.xlu0 %v26
  %v28 = vpop.xlane.xlu0 %27
  %v29 = vadd.f32 %v20, %v21
  %30 = vadd.xlane.f32.xlu0 %v29
  %v31 = vpop.xlane.xlu0 %30
  %v32 = vadd.f32 %v22, %v23
  %33 = vadd.xlane.f32.xlu0 %v32
  %v34 = vpop.xlane.xlu0 %33
  %v35 = vadd.f32 %v24, %v25
  %36 = vadd.xlane.f32.xlu0 %v35
  %v37 = vpop.xlane.xlu0 %36
  %v38 = vrcp.pop 256.0
  %v39 = vmul.f32 %v28, %v38
  %v40 = vmul.f32 %v31, %v38
  %v41 = vmul.f32 %v34, %v38
  %v42 = vmul.f32 %v37, %v38
  %v43 = vsub.f32 %v18, %v39
  %v44 = vsub.f32 %v19, %v39
  %v45 = vsub.f32 %v20, %v40
  %v46 = vsub.f32 %v21, %v40
  %v47 = vsub.f32 %v22, %v41
  %v48 = vsub.f32 %v23, %v41
  %v49 = vsub.f32 %v24, %v42
  %v50 = vsub.f32 %v25, %v42
  %v51 = vmul.f32 %v43, %v43
  %v52 = vmul.f32 %v44, %v44
  %v53 = vmul.f32 %v45, %v45
  %v54 = vmul.f32 %v46, %v46
  %v55 = vmul.f32 %v47, %v47
  %v56 = vmul.f32 %v48, %v48
  %v57 = vmul.f32 %v49, %v49
  %v58 = vmul.f32 %v50, %v50
  %v59 = vadd.f32 %v51, %v52
  %60 = vadd.xlane.f32.xlu0 %v59
  %v61 = vpop.xlane.xlu0 %60
  %v62 = vadd.f32 %v53, %v54
  %63 = vadd.xlane.f32.xlu0 %v62
  %v64 = vpop.xlane.xlu0 %63
  %v65 = vadd.f32 %v55, %v56
  %66 = vadd.xlane.f32.xlu0 %v65
  %v67 = vpop.xlane.xlu0 %66
  %v68 = vadd.f32 %v57, %v58
  %69 = vadd.xlane.f32.xlu0 %v68
  %v70 = vpop.xlane.xlu0 %69
  %v71 = vmul.f32 %v61, %v38
  %v72 = vmul.f32 %v64, %v38
  %v73 = vmul.f32 %v67, %v38
  %v74 = vmul.f32 %v70, %v38
  %v75 = vadd.f32 %v71, 1e-05
  %v76 = vadd.f32 %v72, 1e-05
  %v77 = vadd.f32 %v73, 1e-05
  %v78 = vadd.f32 %v74, 1e-05
  %v79 = vrsqrt.pop %v75
  %v80 = vrsqrt.pop %v76
  %v81 = vrsqrt.pop %v77
  %v82 = vrsqrt.pop %v78
  %v83 = vmul.f32 %v43, %v79
  %v84 = vmul.f32 %v44, %v79
  %v85 = vmul.f32 %v45, %v80
  %v86 = vmul.f32 %v46, %v80
  %v87 = vmul.f32 %v47, %v81
  %v88 = vmul.f32 %v48, %v81
  %v89 = vmul.f32 %v49, %v82
  %v90 = vmul.f32 %v50, %v82
  %v91 = vld [vmem:[%s1] sm:$0x3]
  %v93 = vlaneseq
  %v94 = vshrl.u32 %v93, 7
  %v95 = vsub.s32 0, %v94
  %v96 = vrot.slane %v91, %v95
  %v97 = vlaneseq
  %v98 = vshrl.u32 %v97, 7
  %v99 = vsub.s32 1, %v98
  %v100 = vrot.slane %v91, %v99
  %v103 = vmul.f32 %v83, %v96
  %v104 = vmul.f32 %v84, %v100
  %v105 = vmul.f32 %v85, %v96
  %v106 = vmul.f32 %v86, %v100
  %v107 = vmul.f32 %v87, %v96
  %v108 = vmul.f32 %v88, %v100
  %v109 = vmul.f32 %v89, %v96
  %v110 = vmul.f32 %v90, %v100
  %v111 = vld [vmem:[%s2] sm:$0x3]
  %v113 = vlaneseq
  %v114 = vshrl.u32 %v113, 7
  %v115 = vsub.s32 0, %v114
  %v116 = vrot.slane %v111, %v115
  %v117 = vlaneseq
  %v118 = vshrl.u32 %v117, 7
  %v119 = vsub.s32 1, %v118
  %v120 = vrot.slane %v111, %v119
  %v123 = vadd.f32 %v103, %v116
  %v124 = vadd.f32 %v104, %v120
  %v125 = vadd.f32 %v105, %v116
  %v126 = vadd.f32 %v106, %v120
  %v127 = vadd.f32 %v107, %v116
  %v128 = vadd.f32 %v108, %v120
  %v129 = vadd.f32 %v109, %v116
  %v130 = vadd.f32 %v110, %v120
  %v131 = vpack.c.bf16 %v125, %v123
  %v132 = vpack.c.bf16 %v126, %v124
  %v133 = vpack.c.bf16 %v129, %v127
  %v134 = vpack.c.bf16 %v130, %v128
  %v139 = vunpack.c.l.b16 %v131
  %v140 = vunpack.c.l.b16 %v132
  %v141 = vunpack.c.h.b16 %v131
  %v142 = vunpack.c.h.b16 %v132
  %v143 = vunpack.c.l.b16 %v133
  %v144 = vunpack.c.l.b16 %v134
  %v145 = vunpack.c.h.b16 %v133
  %v146 = vunpack.c.h.b16 %v134
  %v147 = vpack.c.b16 %v140, %v139
  %v148 = vpack.c.b16 %v142, %v141
  %v149 = vpack.c.b16 %v144, %v143
  %v150 = vpack.c.b16 %v146, %v145
  %155 = vst [vmem:[%s3] sm:$0xff] %v147
  %156 = vst [vmem:[%s3 + $0x8] sm:$0xff] %v148
  %157 = vst [vmem:[%s3 + $0x10] sm:$0xff] %v149
  %158 = vst [vmem:[%s3 + $0x18] sm:$0xff] %v150
  // Predicated region
  $region14: #{transformer_forward.40} parent=0 // pred_check
    _
  $region15: #{transformer_forward.40} parent=0 // pred_check_branch
    %160 = sbr.rel (0) target = $region17
  $region16: #{transformer_forward.40} parent=0 // pred_region
    _
  $region17: #{transformer_forward.40} parent=0 // pred_fallthru
    _
  // Predicated region
  $region18: #{transformer_forward.40} parent=0 // pred_check
    _
  $region19: #{transformer_forward.40} parent=0 // pred_check_branch
    %162 = sbr.rel (0) target = $region21
  $region20: #{transformer_forward.40} parent=0 // pred_region
    _
  $region21: #{transformer_forward.40} parent=0 // pred_fallthru
    _

// kernel: transformer_forward.34
$region0: #{transformer_forward.34}
  #allocation0 [shape = 'u32[]', space=smem, size = 0x4, offset = 0x4, fixed_abs, tag = 'smem constant byte address 0x4 - core index']
  #allocation1 [shape = 'u32[144,128]{1,0:T(1,128)}', space=vmem, size = 0x12000, scoped, tag = 'internal scratch']
  %s0 = inlined_call_operand.vmem [shape: bf16[32,256], index: 0, kind: input, shape index: {}, may-alias: {0,5}]
  %s1 = inlined_call_operand.vmem [shape: bf16[256,512], index: 1, kind: input, shape index: {}]
  %s2 = inlined_call_operand.vmem [shape: f32[1,512], index: 2, kind: input, shape index: {}]
  %s3 = inlined_call_operand.vmem [shape: bf16[512,256], index: 3, kind: input, shape index: {}]
  %s4 = inlined_call_operand.vmem [shape: f32[1,256], index: 4, kind: input, shape index: {}]
  %s5 = inlined_call_operand.vmem [shape: bf16[32,256], index: 5, kind: input, shape index: {}, may-alias: {0,5}]
  %s6 = inlined_call_operand.vmem [shape: f32[1,256], index: 6, kind: input, shape index: {}]
  %s7 = inlined_call_operand.vmem [shape: f32[1,256], index: 7, kind: input, shape index: {}]
  %s8 = inlined_call_operand.vmem [shape: bf16[32,256], index: 8, kind: output, shape index: {}]
  %s9 = sld [smem:[#allocation0]]
  $region42: #{transformer_forward.34} parent=0
    _
  %s11 = ssub.s32 1, %s9
  %s12 = scalar_select 0, %s11, %s9
  // Predicated region
  $region2: #{transformer_forward.34} parent=0 // pred_check
    _
  $region3: #{transformer_forward.34} parent=0 // pred_check_branch
    %14 = sbr.rel (0) target = $region5
  $region4: #{transformer_forward.34} parent=0 // pred_region
    _
  $region5: #{transformer_forward.34} parent=0 // pred_fallthru
    _
  // Predicated region
  $region6: #{transformer_forward.34} parent=0 // pred_check
    _
  $region7: #{transformer_forward.34} parent=0 // pred_check_branch
    %16 = sbr.rel (0) target = $region9
  $region8: #{transformer_forward.34} parent=0 // pred_region
    _
  $region9: #{transformer_forward.34} parent=0 // pred_fallthru
    _
  // Predicated region
  $region10: #{transformer_forward.34} parent=0 // pred_check
    _
  $region11: #{transformer_forward.34} parent=0 // pred_check_branch
    %18 = sbr.rel (0) target = $region13
  $region12: #{transformer_forward.34} parent=0 // pred_region
    _
  $region13: #{transformer_forward.34} parent=0 // pred_fallthru
    _
  // Predicated region
  $region14: #{transformer_forward.34} parent=0 // pred_check
    _
  $region15: #{transformer_forward.34} parent=0 // pred_check_branch
    %20 = sbr.rel (0) target = $region17
  $region16: #{transformer_forward.34} parent=0 // pred_region
    _
  $region17: #{transformer_forward.34} parent=0 // pred_fallthru
    _
  // Predicated region
  $region18: #{transformer_forward.34} parent=0 // pred_check
    _
  $region19: #{transformer_forward.34} parent=0 // pred_check_branch
    %22 = sbr.rel (0) target = $region21
  $region20: #{transformer_forward.34} parent=0 // pred_region
    _
  $region21: #{transformer_forward.34} parent=0 // pred_fallthru
    _
  // Predicated region
  $region22: #{transformer_forward.34} parent=0 // pred_check
    _
  $region23: #{transformer_forward.34} parent=0 // pred_check_branch
    %24 = sbr.rel (0) target = $region25
  $region24: #{transformer_forward.34} parent=0 // pred_region
    _
  $region25: #{transformer_forward.34} parent=0 // pred_fallthru
    _
  // Predicated region
  $region26: #{transformer_forward.34} parent=0 // pred_check
    _
  $region27: #{transformer_forward.34} parent=0 // pred_check_branch
    %26 = sbr.rel (0) target = $region29
  $region28: #{transformer_forward.34} parent=0 // pred_region
    _
  $region29: #{transformer_forward.34} parent=0 // pred_fallthru
    _
  // Predicated region
  $region30: #{transformer_forward.34} parent=0 // pred_check
    _
  $region31: #{transformer_forward.34} parent=0 // pred_check_branch
    %28 = sbr.rel (0) target = $region33
  $region32: #{transformer_forward.34} parent=0 // pred_region
    _
  $region33: #{transformer_forward.34} parent=0 // pred_fallthru
    _
  %v29 = vld [vmem:[%s0] sm:$0xff]
  %v30 = vld [vmem:[%s0 + $0x8] sm:$0xff]
  %v31 = vld [vmem:[%s0 + $0x10] sm:$0xff]
  %v32 = vld [vmem:[%s0 + $0x18] sm:$0xff]
  %v33 = vld [vmem:[%s1] sm:$0xff]
  %v34 = vld [vmem:[%s1 + $0x8] sm:$0xff]
  %v35 = vld [vmem:[%s1 + $0x10] sm:$0xff]
  %v36 = vld [vmem:[%s1 + $0x18] sm:$0xff]
  %v37 = vld [vmem:[%s1 + $0x20] sm:$0xff]
  %v38 = vld [vmem:[%s1 + $0x28] sm:$0xff]
  %v39 = vld [vmem:[%s1 + $0x30] sm:$0xff]
  %v40 = vld [vmem:[%s1 + $0x38] sm:$0xff]
  %v41 = vld [vmem:[%s1 + $0x40] sm:$0xff]
  %v42 = vld [vmem:[%s1 + $0x48] sm:$0xff]
  %v43 = vld [vmem:[%s1 + $0x50] sm:$0xff]
  %v44 = vld [vmem:[%s1 + $0x58] sm:$0xff]
  %v45 = vld [vmem:[%s1 + $0x60] sm:$0xff]
  %v46 = vld [vmem:[%s1 + $0x68] sm:$0xff]
  %v47 = vld [vmem:[%s1 + $0x70] sm:$0xff]
  %v48 = vld [vmem:[%s1 + $0x78] sm:$0xff]
  %v49 = vld [vmem:[%s1 + $0x80] sm:$0xff]
  %v50 = vld [vmem:[%s1 + $0x88] sm:$0xff]
  %v51 = vld [vmem:[%s1 + $0x90] sm:$0xff]
  %v52 = vld [vmem:[%s1 + $0x98] sm:$0xff]
  %v53 = vld [vmem:[%s1 + $0xa0] sm:$0xff]
  %v54 = vld [vmem:[%s1 + $0xa8] sm:$0xff]
  %v55 = vld [vmem:[%s1 + $0xb0] sm:$0xff]
  %v56 = vld [vmem:[%s1 + $0xb8] sm:$0xff]
  %v57 = vld [vmem:[%s1 + $0xc0] sm:$0xff]
  %v58 = vld [vmem:[%s1 + $0xc8] sm:$0xff]
  %v59 = vld [vmem:[%s1 + $0xd0] sm:$0xff]
  %v60 = vld [vmem:[%s1 + $0xd8] sm:$0xff]
  %v61 = vld [vmem:[%s1 + $0xe0] sm:$0xff]
  %v62 = vld [vmem:[%s1 + $0xe8] sm:$0xff]
  %v63 = vld [vmem:[%s1 + $0xf0] sm:$0xff]
  %v64 = vld [vmem:[%s1 + $0xf8] sm:$0xff]
  %v65 = vld [vmem:[%s1 + $0x100] sm:$0xff]
  %v66 = vld [vmem:[%s1 + $0x108] sm:$0xff]
  %v67 = vld [vmem:[%s1 + $0x110] sm:$0xff]
  %v68 = vld [vmem:[%s1 + $0x118] sm:$0xff]
  %v69 = vld [vmem:[%s1 + $0x120] sm:$0xff]
  %v70 = vld [vmem:[%s1 + $0x128] sm:$0xff]
  %v71 = vld [vmem:[%s1 + $0x130] sm:$0xff]
  %v72 = vld [vmem:[%s1 + $0x138] sm:$0xff]
  %v73 = vld [vmem:[%s1 + $0x140] sm:$0xff]
  %v74 = vld [vmem:[%s1 + $0x148] sm:$0xff]
  %v75 = vld [vmem:[%s1 + $0x150] sm:$0xff]
  %v76 = vld [vmem:[%s1 + $0x158] sm:$0xff]
  %v77 = vld [vmem:[%s1 + $0x160] sm:$0xff]
  %v78 = vld [vmem:[%s1 + $0x168] sm:$0xff]
  %v79 = vld [vmem:[%s1 + $0x170] sm:$0xff]
  %v80 = vld [vmem:[%s1 + $0x178] sm:$0xff]
  %v81 = vld [vmem:[%s1 + $0x180] sm:$0xff]
  %v82 = vld [vmem:[%s1 + $0x188] sm:$0xff]
  %v83 = vld [vmem:[%s1 + $0x190] sm:$0xff]
  %v84 = vld [vmem:[%s1 + $0x198] sm:$0xff]
  %v85 = vld [vmem:[%s1 + $0x1a0] sm:$0xff]
  %v86 = vld [vmem:[%s1 + $0x1a8] sm:$0xff]
  %v87 = vld [vmem:[%s1 + $0x1b0] sm:$0xff]
  %v88 = vld [vmem:[%s1 + $0x1b8] sm:$0xff]
  %v89 = vld [vmem:[%s1 + $0x1c0] sm:$0xff]
  %v90 = vld [vmem:[%s1 + $0x1c8] sm:$0xff]
  %v91 = vld [vmem:[%s1 + $0x1d0] sm:$0xff]
  %v92 = vld [vmem:[%s1 + $0x1d8] sm:$0xff]
  %v93 = vld [vmem:[%s1 + $0x1e0] sm:$0xff]
  %v94 = vld [vmem:[%s1 + $0x1e8] sm:$0xff]
  %v95 = vld [vmem:[%s1 + $0x1f0] sm:$0xff]
  %v96 = vld [vmem:[%s1 + $0x1f8] sm:$0xff]
  %v97 = vld [vmem:[%s2] sm:$0xf]
  %v99 = vlaneseq
  %v100 = vshrl.u32 %v99, 7
  %v101 = vsub.s32 0, %v100
  %v102 = vrot.slane %v97, %v101
  %v103 = vlaneseq
  %v104 = vshrl.u32 %v103, 7
  %v105 = vsub.s32 1, %v104
  %v106 = vrot.slane %v97, %v105
  %v107 = vlaneseq
  %v108 = vshrl.u32 %v107, 7
  %v109 = vsub.s32 2, %v108
  %v110 = vrot.slane %v97, %v109
  %v111 = vlaneseq
  %v112 = vshrl.u32 %v111, 7
  %v113 = vsub.s32 3, %v112
  %v114 = vrot.slane %v97, %v113
  %v123 = vunpack.c.l.b16 %v29
  %v124 = vunpack.c.h.b16 %v29
  %v125 = vunpack.c.l.b16 %v30
  %v126 = vunpack.c.h.b16 %v30
  %v127 = vunpack.c.l.b16 %v31
  %v128 = vunpack.c.h.b16 %v31
  %v129 = vunpack.c.l.b16 %v32
  %v130 = vunpack.c.h.b16 %v32
  %v131 = vpack.c.b16 %v125, %v123
  %v132 = vpack.c.b16 %v126, %v124
  %v133 = vpack.c.b16 %v129, %v127
  %v134 = vpack.c.b16 %v130, %v128
  %v203 = vunpack.c.l.b16 %v33
  %v204 = vunpack.c.h.b16 %v33
  %v205 = vunpack.c.l.b16 %v34
  %v206 = vunpack.c.h.b16 %v34
  %v207 = vunpack.c.l.b16 %v35
  %v208 = vunpack.c.h.b16 %v35
  %v209 = vunpack.c.l.b16 %v36
  %v210 = vunpack.c.h.b16 %v36
  %v211 = vunpack.c.l.b16 %v37
  %v212 = vunpack.c.h.b16 %v37
  %v213 = vunpack.c.l.b16 %v38
  %v214 = vunpack.c.h.b16 %v38
  %v215 = vunpack.c.l.b16 %v39
  %v216 = vunpack.c.h.b16 %v39
  %v217 = vunpack.c.l.b16 %v40
  %v218 = vunpack.c.h.b16 %v40
  %v219 = vunpack.c.l.b16 %v41
  %v220 = vunpack.c.h.b16 %v41
  %v221 = vunpack.c.l.b16 %v42
  %v222 = vunpack.c.h.b16 %v42
  %v223 = vunpack.c.l.b16 %v43
  %v224 = vunpack.c.h.b16 %v43
  %v225 = vunpack.c.l.b16 %v44
  %v226 = vunpack.c.h.b16 %v44
  %v227 = vunpack.c.l.b16 %v45
  %v228 = vunpack.c.h.b16 %v45
  %v229 = vunpack.c.l.b16 %v46
  %v230 = vunpack.c.h.b16 %v46
  %v231 = vunpack.c.l.b16 %v47
  %v232 = vunpack.c.h.b16 %v47
  %v233 = vunpack.c.l.b16 %v48
  %v234 = vunpack.c.h.b16 %v48
  %v235 = vunpack.c.l.b16 %v49
  %v236 = vunpack.c.h.b16 %v49
  %v237 = vunpack.c.l.b16 %v50
  %v238 = vunpack.c.h.b16 %v50
  %v239 = vunpack.c.l.b16 %v51
  %v240 = vunpack.c.h.b16 %v51
  %v241 = vunpack.c.l.b16 %v52
  %v242 = vunpack.c.h.b16 %v52
  %v243 = vunpack.c.l.b16 %v53
  %v244 = vunpack.c.h.b16 %v53
  %v245 = vunpack.c.l.b16 %v54
  %v246 = vunpack.c.h.b16 %v54
  %v247 = vunpack.c.l.b16 %v55
  %v248 = vunpack.c.h.b16 %v55
  %v249 = vunpack.c.l.b16 %v56
  %v250 = vunpack.c.h.b16 %v56
  %v251 = vunpack.c.l.b16 %v57
  %v252 = vunpack.c.h.b16 %v57
  %v253 = vunpack.c.l.b16 %v58
  %v254 = vunpack.c.h.b16 %v58
  %v255 = vunpack.c.l.b16 %v59
  %v256 = vunpack.c.h.b16 %v59
  %v257 = vunpack.c.l.b16 %v60
  %v258 = vunpack.c.h.b16 %v60
  %v259 = vunpack.c.l.b16 %v61
  %v260 = vunpack.c.h.b16 %v61
  %v261 = vunpack.c.l.b16 %v62
  %v262 = vunpack.c.h.b16 %v62
  %v263 = vunpack.c.l.b16 %v63
  %v264 = vunpack.c.h.b16 %v63
  %v265 = vunpack.c.l.b16 %v64
  %v266 = vunpack.c.h.b16 %v64
  %v267 = vunpack.c.l.b16 %v65
  %v268 = vunpack.c.h.b16 %v65
  %v269 = vunpack.c.l.b16 %v66
  %v270 = vunpack.c.h.b16 %v66
  %v271 = vunpack.c.l.b16 %v67
  %v272 = vunpack.c.h.b16 %v67
  %v273 = vunpack.c.l.b16 %v68
  %v274 = vunpack.c.h.b16 %v68
  %v275 = vunpack.c.l.b16 %v69
  %v276 = vunpack.c.h.b16 %v69
  %v277 = vunpack.c.l.b16 %v70
  %v278 = vunpack.c.h.b16 %v70
  %v279 = vunpack.c.l.b16 %v71
  %v280 = vunpack.c.h.b16 %v71
  %v281 = vunpack.c.l.b16 %v72
  %v282 = vunpack.c.h.b16 %v72
  %v283 = vunpack.c.l.b16 %v73
  %v284 = vunpack.c.h.b16 %v73
  %v285 = vunpack.c.l.b16 %v74
  %v286 = vunpack.c.h.b16 %v74
  %v287 = vunpack.c.l.b16 %v75
  %v288 = vunpack.c.h.b16 %v75
  %v289 = vunpack.c.l.b16 %v76
  %v290 = vunpack.c.h.b16 %v76
  %v291 = vunpack.c.l.b16 %v77
  %v292 = vunpack.c.h.b16 %v77
  %v293 = vunpack.c.l.b16 %v78
  %v294 = vunpack.c.h.b16 %v78
  %v295 = vunpack.c.l.b16 %v79
  %v296 = vunpack.c.h.b16 %v79
  %v297 = vunpack.c.l.b16 %v80
  %v298 = vunpack.c.h.b16 %v80
  %v299 = vunpack.c.l.b16 %v81
  %v300 = vunpack.c.h.b16 %v81
  %v301 = vunpack.c.l.b16 %v82
  %v302 = vunpack.c.h.b16 %v82
  %v303 = vunpack.c.l.b16 %v83
  %v304 = vunpack.c.h.b16 %v83
  %v305 = vunpack.c.l.b16 %v84
  %v306 = vunpack.c.h.b16 %v84
  %v307 = vunpack.c.l.b16 %v85
  %v308 = vunpack.c.h.b16 %v85
  %v309 = vunpack.c.l.b16 %v86
  %v310 = vunpack.c.h.b16 %v86
  %v311 = vunpack.c.l.b16 %v87
  %v312 = vunpack.c.h.b16 %v87
  %v313 = vunpack.c.l.b16 %v88
  %v314 = vunpack.c.h.b16 %v88
  %v315 = vunpack.c.l.b16 %v89
  %v316 = vunpack.c.h.b16 %v89
  %v317 = vunpack.c.l.b16 %v90
  %v318 = vunpack.c.h.b16 %v90
  %v319 = vunpack.c.l.b16 %v91
  %v320 = vunpack.c.h.b16 %v91
  %v321 = vunpack.c.l.b16 %v92
  %v322 = vunpack.c.h.b16 %v92
  %v323 = vunpack.c.l.b16 %v93
  %v324 = vunpack.c.h.b16 %v93
  %v325 = vunpack.c.l.b16 %v94
  %v326 = vunpack.c.h.b16 %v94
  %v327 = vunpack.c.l.b16 %v95
  %v328 = vunpack.c.h.b16 %v95
  %v329 = vunpack.c.l.b16 %v96
  %v330 = vunpack.c.h.b16 %v96
  %v331 = vpack.c.b16 %v207, %v203
  %v332 = vpack.c.b16 %v208, %v204
  %v333 = vpack.c.b16 %v209, %v205
  %v334 = vpack.c.b16 %v210, %v206
  %v335 = vpack.c.b16 %v215, %v211
  %v336 = vpack.c.b16 %v216, %v212
  %v337 = vpack.c.b16 %v217, %v213
  %v338 = vpack.c.b16 %v218, %v214
  %v339 = vpack.c.b16 %v223, %v219
  %v340 = vpack.c.b16 %v224, %v220
  %v341 = vpack.c.b16 %v225, %v221
  %v342 = vpack.c.b16 %v226, %v222
  %v343 = vpack.c.b16 %v231, %v227
  %v344 = vpack.c.b16 %v232, %v228
  %v345 = vpack.c.b16 %v233, %v229
  %v346 = vpack.c.b16 %v234, %v230
  %v347 = vpack.c.b16 %v239, %v235
  %v348 = vpack.c.b16 %v240, %v236
  %v349 = vpack.c.b16 %v241, %v237
  %v350 = vpack.c.b16 %v242, %v238
  %v351 = vpack.c.b16 %v247, %v243
  %v352 = vpack.c.b16 %v248, %v244
  %v353 = vpack.c.b16 %v249, %v245
  %v354 = vpack.c.b16 %v250, %v246
  %v355 = vpack.c.b16 %v255, %v251
  %v356 = vpack.c.b16 %v256, %v252
  %v357 = vpack.c.b16 %v257, %v253
  %v358 = vpack.c.b16 %v258, %v254
  %v359 = vpack.c.b16 %v263, %v259
  %v360 = vpack.c.b16 %v264, %v260
  %v361 = vpack.c.b16 %v265, %v261
  %v362 = vpack.c.b16 %v266, %v262
  %v363 = vpack.c.b16 %v271, %v267
  %v364 = vpack.c.b16 %v272, %v268
  %v365 = vpack.c.b16 %v273, %v269
  %v366 = vpack.c.b16 %v274, %v270
  %v367 = vpack.c.b16 %v279, %v275
  %v368 = vpack.c.b16 %v280, %v276
  %v369 = vpack.c.b16 %v281, %v277
  %v370 = vpack.c.b16 %v282, %v278
  %v371 = vpack.c.b16 %v287, %v283
  %v372 = vpack.c.b16 %v288, %v284
  %v373 = vpack.c.b16 %v289, %v285
  %v374 = vpack.c.b16 %v290, %v286
  %v375 = vpack.c.b16 %v295, %v291
  %v376 = vpack.c.b16 %v296, %v292
  %v377 = vpack.c.b16 %v297, %v293
  %v378 = vpack.c.b16 %v298, %v294
  %v379 = vpack.c.b16 %v303, %v299
  %v380 = vpack.c.b16 %v304, %v300
  %v381 = vpack.c.b16 %v305, %v301
  %v382 = vpack.c.b16 %v306, %v302
  %v383 = vpack.c.b16 %v311, %v307
  %v384 = vpack.c.b16 %v312, %v308
  %v385 = vpack.c.b16 %v313, %v309
  %v386 = vpack.c.b16 %v314, %v310
  %v387 = vpack.c.b16 %v319, %v315
  %v388 = vpack.c.b16 %v320, %v316
  %v389 = vpack.c.b16 %v321, %v317
  %v390 = vpack.c.b16 %v322, %v318
  %v391 = vpack.c.b16 %v327, %v323
  %v392 = vpack.c.b16 %v328, %v324
  %v393 = vpack.c.b16 %v329, %v325
  %v394 = vpack.c.b16 %v330, %v326
  %459 = vmatprep.subr.bf16.mxu0 %v332
  %460 = vmatpush1.bf16.msra.mxu0 %v331
  %461 = vmatprep.subr.bf16.mxu0 %v336
  %462 = vmatpush1.bf16.msra.mxu0 %v335
  %463 = vmatprep.subr.bf16.mxu0 %v340
  %464 = vmatpush1.bf16.msra.mxu0 %v339
  %465 = vmatprep.subr.bf16.mxu0 %v344
  %466 = vmatpush1.bf16.msra.mxu0 %v343
  %467 = vmatprep.subr.bf16.mxu0 %v348
  %468 = vmatpush1.bf16.msra.mxu0 %v347
  %469 = vmatprep.subr.bf16.mxu0 %v352
  %470 = vmatpush1.bf16.msra.mxu0 %v351
  %471 = vmatprep.subr.bf16.mxu0 %v356
  %472 = vmatpush1.bf16.msra.mxu0 %v355
  %473 = vmatprep.subr.bf16.mxu0 %v360
  %474 = vmatpush1.bf16.msra.mxu0 %v359
  %475 = vmatprep.subr.bf16.mxu0 %v364
  %476 = vmatpush1.bf16.msra.mxu0 %v363
  %477 = vmatprep.subr.bf16.mxu0 %v368
  %478 = vmatpush1.bf16.msra.mxu0 %v367
  %479 = vmatprep.subr.bf16.mxu0 %v372
  %480 = vmatpush1.bf16.msra.mxu0 %v371
  %481 = vmatprep.subr.bf16.mxu0 %v376
  %482 = vmatpush1.bf16.msra.mxu0 %v375
  %483 = vmatprep.subr.bf16.mxu0 %v380
  %484 = vmatpush1.bf16.msra.mxu0 %v379
  %485 = vmatprep.subr.bf16.mxu0 %v384
  %486 = vmatpush1.bf16.msra.mxu0 %v383
  %487 = vmatprep.subr.bf16.mxu0 %v388
  %488 = vmatpush1.bf16.msra.mxu0 %v387
  %489 = vmatprep.subr.bf16.mxu0 %v392
  %490 = vmatpush1.bf16.msra.mxu0 %v391
  %491 = vmatprep.mubr.bf16.mxu0 %v132
  %492 = vmatmul.mubr.bf16.gmra.mrb[0].mxu0 %v131
  %v493 = vpop.f32.mrb[0].mxu0
  %v494 = vadd.f32 %v102, %v493
  %v495 = vpop.f32.mrb[0].mxu0
  %v496 = vadd.f32 %v106, %v495
  %v497 = vpop.f32.mrb[0].mxu0
  %v498 = vadd.f32 %v102, %v497
  %v499 = vpop.f32.mrb[0].mxu0
  %v500 = vadd.f32 %v106, %v499
  %501 = vmatprep.mubr.bf16.mxu0 %v134
  %502 = vmatmul.mubr.bf16.gmra.mrb[0].mxu0 %v133
  %v503 = vpop.f32.mrb[0].mxu0
  %v504 = vadd.f32 %v102, %v503
  %v505 = vpop.f32.mrb[0].mxu0
  %v506 = vadd.f32 %v106, %v505
  %v507 = vpop.f32.mrb[0].mxu0
  %v508 = vadd.f32 %v102, %v507
  %v509 = vpop.f32.mrb[0].mxu0
  %v510 = vadd.f32 %v106, %v509
  %511 = vdwg.mxu0
  %512 = vmatprep.subr.bf16.mxu0 %v334
  %513 = vmatpush1.bf16.msra.mxu0 %v333
  %514 = vmatprep.subr.bf16.mxu0 %v338
  %515 = vmatpush1.bf16.msra.mxu0 %v337
  %516 = vmatprep.subr.bf16.mxu0 %v342
  %517 = vmatpush1.bf16.msra.mxu0 %v341
  %518 = vmatprep.subr.bf16.mxu0 %v346
  %519 = vmatpush1.bf16.msra.mxu0 %v345
  %520 = vmatprep.subr.bf16.mxu0 %v350
  %521 = vmatpush1.bf16.msra.mxu0 %v349
  %522 = vmatprep.subr.bf16.mxu0 %v354
  %523 = vmatpush1.bf16.msra.mxu0 %v353
  %524 = vmatprep.subr.bf16.mxu0 %v358
  %525 = vmatpush1.bf16.msra.mxu0 %v357
  %526 = vmatprep.subr.bf16.mxu0 %v362
  %527 = vmatpush1.bf16.msra.mxu0 %v361
  %528 = vmatprep.subr.bf16.mxu0 %v366
  %529 = vmatpush1.bf16.msra.mxu0 %v365
  %530 = vmatprep.subr.bf16.mxu0 %v370
  %531 = vmatpush1.bf16.msra.mxu0 %v369
  %532 = vmatprep.subr.bf16.mxu0 %v374
  %533 = vmatpush1.bf16.msra.mxu0 %v373
  %534 = vmatprep.subr.bf16.mxu0 %v378
  %535 = vmatpush1.bf16.msra.mxu0 %v377
  %536 = vmatprep.subr.bf16.mxu0 %v382
  %537 = vmatpush1.bf16.msra.mxu0 %v381
  %538 = vmatprep.subr.bf16.mxu0 %v386
  %539 = vmatpush1.bf16.msra.mxu0 %v385
  %540 = vmatprep.subr.bf16.mxu0 %v390
  %541 = vmatpush1.bf16.msra.mxu0 %v389
  %542 = vmatprep.subr.bf16.mxu0 %v394
  %543 = vmatpush1.bf16.msra.mxu0 %v393
  %544 = vmatprep.mubr.bf16.mxu0 %v132
  %545 = vmatmul.mubr.bf16.gmra.mrb[0].mxu0 %v131
  %v546 = vpop.f32.mrb[0].mxu0
  %v547 = vadd.f32 %v110, %v546
  %v548 = vpop.f32.mrb[0].mxu0
  %v549 = vadd.f32 %v114, %v548
  %v550 = vpop.f32.mrb[0].mxu0
  %v551 = vadd.f32 %v110, %v550
  %v552 = vpop.f32.mrb[0].mxu0
  %v553 = vadd.f32 %v114, %v552
  %554 = vmatprep.mubr.bf16.mxu0 %v134
  %555 = vmatmul.mubr.bf16.gmra.mrb[0].mxu0 %v133
  %v556 = vpop.f32.mrb[0].mxu0
  %v557 = vadd.f32 %v110, %v556
  %v558 = vpop.f32.mrb[0].mxu0
  %v559 = vadd.f32 %v114, %v558
  %v560 = vpop.f32.mrb[0].mxu0
  %v561 = vadd.f32 %v110, %v560
  %v562 = vpop.f32.mrb[0].mxu0
  %v563 = vadd.f32 %v114, %v562
  %564 = vdwg.mxu0
  %v565 = vmax.f32 %v494, 0.0
  %v566 = vmax.f32 %v496, 0.0
  %v567 = vmax.f32 %v547, 0.0
  %v568 = vmax.f32 %v549, 0.0
  %v569 = vmax.f32 %v498, 0.0
  %v570 = vmax.f32 %v500, 0.0
  %v571 = vmax.f32 %v551, 0.0
  %v572 = vmax.f32 %v553, 0.0
  %v573 = vmax.f32 %v504, 0.0
  %v574 = vmax.f32 %v506, 0.0
  %v575 = vmax.f32 %v557, 0.0
  %v576 = vmax.f32 %v559, 0.0
  %v577 = vmax.f32 %v508, 0.0
  %v578 = vmax.f32 %v510, 0.0
  %v579 = vmax.f32 %v561, 0.0
  %v580 = vmax.f32 %v563, 0.0
  %v581 = vpack.c.bf16 %v569, %v565
  %v582 = vpack.c.bf16 %v570, %v566
  %v583 = vpack.c.bf16 %v571, %v567
  %v584 = vpack.c.bf16 %v572, %v568
  %v585 = vpack.c.bf16 %v577, %v573
  %v586 = vpack.c.bf16 %v578, %v574
  %v587 = vpack.c.bf16 %v579, %v575
  %v588 = vpack.c.bf16 %v580, %v576
  %v589 = vld [vmem:[%s3] sm:$0xff]
  %v590 = vld [vmem:[%s3 + $0x8] sm:$0xff]
  %v591 = vld [vmem:[%s3 + $0x10] sm:$0xff]
  %v592 = vld [vmem:[%s3 + $0x18] sm:$0xff]
  %v593 = vld [vmem:[%s3 + $0x20] sm:$0xff]
  %v594 = vld [vmem:[%s3 + $0x28] sm:$0xff]
  %v595 = vld [vmem:[%s3 + $0x30] sm:$0xff]
  %v596 = vld [vmem:[%s3 + $0x38] sm:$0xff]
  %v597 = vld [vmem:[%s3 + $0x40] sm:$0xff]
  %v598 = vld [vmem:[%s3 + $0x48] sm:$0xff]
  %v599 = vld [vmem:[%s3 + $0x50] sm:$0xff]
  %v600 = vld [vmem:[%s3 + $0x58] sm:$0xff]
  %v601 = vld [vmem:[%s3 + $0x60] sm:$0xff]
  %v602 = vld [vmem:[%s3 + $0x68] sm:$0xff]
  %v603 = vld [vmem:[%s3 + $0x70] sm:$0xff]
  %v604 = vld [vmem:[%s3 + $0x78] sm:$0xff]
  %v605 = vld [vmem:[%s3 + $0x80] sm:$0xff]
  %v606 = vld [vmem:[%s3 + $0x88] sm:$0xff]
  %v607 = vld [vmem:[%s3 + $0x90] sm:$0xff]
  %v608 = vld [vmem:[%s3 + $0x98] sm:$0xff]
  %v609 = vld [vmem:[%s3 + $0xa0] sm:$0xff]
  %v610 = vld [vmem:[%s3 + $0xa8] sm:$0xff]
  %v611 = vld [vmem:[%s3 + $0xb0] sm:$0xff]
  %v612 = vld [vmem:[%s3 + $0xb8] sm:$0xff]
  %v613 = vld [vmem:[%s3 + $0xc0] sm:$0xff]
  %v614 = vld [vmem:[%s3 + $0xc8] sm:$0xff]
  %v615 = vld [vmem:[%s3 + $0xd0] sm:$0xff]
  %v616 = vld [vmem:[%s3 + $0xd8] sm:$0xff]
  %v617 = vld [vmem:[%s3 + $0xe0] sm:$0xff]
  %v618 = vld [vmem:[%s3 + $0xe8] sm:$0xff]
  %v619 = vld [vmem:[%s3 + $0xf0] sm:$0xff]
  %v620 = vld [vmem:[%s3 + $0xf8] sm:$0xff]
  %v621 = vld [vmem:[%s3 + $0x100] sm:$0xff]
  %v622 = vld [vmem:[%s3 + $0x108] sm:$0xff]
  %v623 = vld [vmem:[%s3 + $0x110] sm:$0xff]
  %v624 = vld [vmem:[%s3 + $0x118] sm:$0xff]
  %v625 = vld [vmem:[%s3 + $0x120] sm:$0xff]
  %v626 = vld [vmem:[%s3 + $0x128] sm:$0xff]
  %v627 = vld [vmem:[%s3 + $0x130] sm:$0xff]
  %v628 = vld [vmem:[%s3 + $0x138] sm:$0xff]
  %v629 = vld [vmem:[%s3 + $0x140] sm:$0xff]
  %v630 = vld [vmem:[%s3 + $0x148] sm:$0xff]
  %v631 = vld [vmem:[%s3 + $0x150] sm:$0xff]
  %v632 = vld [vmem:[%s3 + $0x158] sm:$0xff]
  %v633 = vld [vmem:[%s3 + $0x160] sm:$0xff]
  %v634 = vld [vmem:[%s3 + $0x168] sm:$0xff]
  %v635 = vld [vmem:[%s3 + $0x170] sm:$0xff]
  %v636 = vld [vmem:[%s3 + $0x178] sm:$0xff]
  %v637 = vld [vmem:[%s3 + $0x180] sm:$0xff]
  %v638 = vld [vmem:[%s3 + $0x188] sm:$0xff]
  %v639 = vld [vmem:[%s3 + $0x190] sm:$0xff]
  %v640 = vld [vmem:[%s3 + $0x198] sm:$0xff]
  %v641 = vld [vmem:[%s3 + $0x1a0] sm:$0xff]
  %v642 = vld [vmem:[%s3 + $0x1a8] sm:$0xff]
  %v643 = vld [vmem:[%s3 + $0x1b0] sm:$0xff]
  %v644 = vld [vmem:[%s3 + $0x1b8] sm:$0xff]
  %v645 = vld [vmem:[%s3 + $0x1c0] sm:$0xff]
  %v646 = vld [vmem:[%s3 + $0x1c8] sm:$0xff]
  %v647 = vld [vmem:[%s3 + $0x1d0] sm:$0xff]
  %v648 = vld [vmem:[%s3 + $0x1d8] sm:$0xff]
  %v649 = vld [vmem:[%s3 + $0x1e0] sm:$0xff]
  %v650 = vld [vmem:[%s3 + $0x1e8] sm:$0xff]
  %v651 = vld [vmem:[%s3 + $0x1f0] sm:$0xff]
  %v652 = vld [vmem:[%s3 + $0x1f8] sm:$0xff]
  %v653 = vld [vmem:[%s4] sm:$0x3]
  %v655 = vlaneseq
  %v656 = vshrl.u32 %v655, 7
  %v657 = vsub.s32 0, %v656
  %v658 = vrot.slane %v653, %v657
  %v659 = vlaneseq
  %v660 = vshrl.u32 %v659, 7
  %v661 = vsub.s32 1, %v660
  %v662 = vrot.slane %v653, %v661
  %v729 = vunpack.c.l.b16 %v589
  %v730 = vunpack.c.h.b16 %v589
  %v731 = vunpack.c.l.b16 %v590
  %v732 = vunpack.c.h.b16 %v590
  %v733 = vunpack.c.l.b16 %v591
  %v734 = vunpack.c.h.b16 %v591
  %v735 = vunpack.c.l.b16 %v592
  %v736 = vunpack.c.h.b16 %v592
  %v737 = vunpack.c.l.b16 %v593
  %v738 = vunpack.c.h.b16 %v593
  %v739 = vunpack.c.l.b16 %v594
  %v740 = vunpack.c.h.b16 %v594
  %v741 = vunpack.c.l.b16 %v595
  %v742 = vunpack.c.h.b16 %v595
  %v743 = vunpack.c.l.b16 %v596
  %v744 = vunpack.c.h.b16 %v596
  %v745 = vunpack.c.l.b16 %v597
  %v746 = vunpack.c.h.b16 %v597
  %v747 = vunpack.c.l.b16 %v598
  %v748 = vunpack.c.h.b16 %v598
  %v749 = vunpack.c.l.b16 %v599
  %v750 = vunpack.c.h.b16 %v599
  %v751 = vunpack.c.l.b16 %v600
  %v752 = vunpack.c.h.b16 %v600
  %v753 = vunpack.c.l.b16 %v601
  %v754 = vunpack.c.h.b16 %v601
  %v755 = vunpack.c.l.b16 %v602
  %v756 = vunpack.c.h.b16 %v602
  %v757 = vunpack.c.l.b16 %v603
  %v758 = vunpack.c.h.b16 %v603
  %v759 = vunpack.c.l.b16 %v604
  %v760 = vunpack.c.h.b16 %v604
  %v761 = vunpack.c.l.b16 %v605
  %v762 = vunpack.c.h.b16 %v605
  %v763 = vunpack.c.l.b16 %v606
  %v764 = vunpack.c.h.b16 %v606
  %v765 = vunpack.c.l.b16 %v607
  %v766 = vunpack.c.h.b16 %v607
  %v767 = vunpack.c.l.b16 %v608
  %v768 = vunpack.c.h.b16 %v608
  %v769 = vunpack.c.l.b16 %v609
  %v770 = vunpack.c.h.b16 %v609
  %v771 = vunpack.c.l.b16 %v610
  %v772 = vunpack.c.h.b16 %v610
  %v773 = vunpack.c.l.b16 %v611
  %v774 = vunpack.c.h.b16 %v611
  %v775 = vunpack.c.l.b16 %v612
  %v776 = vunpack.c.h.b16 %v612
  %v777 = vunpack.c.l.b16 %v613
  %v778 = vunpack.c.h.b16 %v613
  %v779 = vunpack.c.l.b16 %v614
  %v780 = vunpack.c.h.b16 %v614
  %v781 = vunpack.c.l.b16 %v615
  %v782 = vunpack.c.h.b16 %v615
  %v783 = vunpack.c.l.b16 %v616
  %v784 = vunpack.c.h.b16 %v616
  %v785 = vunpack.c.l.b16 %v617
  %v786 = vunpack.c.h.b16 %v617
  %v787 = vunpack.c.l.b16 %v618
  %v788 = vunpack.c.h.b16 %v618
  %v789 = vunpack.c.l.b16 %v619
  %v790 = vunpack.c.h.b16 %v619
  %v791 = vunpack.c.l.b16 %v620
  %v792 = vunpack.c.h.b16 %v620
  %v793 = vunpack.c.l.b16 %v621
  %v794 = vunpack.c.h.b16 %v621
  %v795 = vunpack.c.l.b16 %v622
  %v796 = vunpack.c.h.b16 %v622
  %v797 = vunpack.c.l.b16 %v623
  %v798 = vunpack.c.h.b16 %v623
  %v799 = vunpack.c.l.b16 %v624
  %v800 = vunpack.c.h.b16 %v624
  %v801 = vunpack.c.l.b16 %v625
  %v802 = vunpack.c.h.b16 %v625
  %v803 = vunpack.c.l.b16 %v626
  %v804 = vunpack.c.h.b16 %v626
  %v805 = vunpack.c.l.b16 %v627
  %v806 = vunpack.c.h.b16 %v627
  %v807 = vunpack.c.l.b16 %v628
  %v808 = vunpack.c.h.b16 %v628
  %v809 = vunpack.c.l.b16 %v629
  %v810 = vunpack.c.h.b16 %v629
  %v811 = vunpack.c.l.b16 %v630
  %v812 = vunpack.c.h.b16 %v630
  %v813 = vunpack.c.l.b16 %v631
  %v814 = vunpack.c.h.b16 %v631
  %v815 = vunpack.c.l.b16 %v632
  %v816 = vunpack.c.h.b16 %v632
  %v817 = vunpack.c.l.b16 %v633
  %v818 = vunpack.c.h.b16 %v633
  %v819 = vunpack.c.l.b16 %v634
  %v820 = vunpack.c.h.b16 %v634
  %v821 = vunpack.c.l.b16 %v635
  %v822 = vunpack.c.h.b16 %v635
  %v823 = vunpack.c.l.b16 %v636
  %v824 = vunpack.c.h.b16 %v636
  %v825 = vunpack.c.l.b16 %v637
  %v826 = vunpack.c.h.b16 %v637
  %v827 = vunpack.c.l.b16 %v638
  %v828 = vunpack.c.h.b16 %v638
  %v829 = vunpack.c.l.b16 %v639
  %v830 = vunpack.c.h.b16 %v639
  %v831 = vunpack.c.l.b16 %v640
  %v832 = vunpack.c.h.b16 %v640
  %v833 = vunpack.c.l.b16 %v641
  %v834 = vunpack.c.h.b16 %v641
  %v835 = vunpack.c.l.b16 %v642
  %v836 = vunpack.c.h.b16 %v642
  %v837 = vunpack.c.l.b16 %v643
  %v838 = vunpack.c.h.b16 %v643
  %v839 = vunpack.c.l.b16 %v644
  %v840 = vunpack.c.h.b16 %v644
  %v841 = vunpack.c.l.b16 %v645
  %v842 = vunpack.c.h.b16 %v645
  %v843 = vunpack.c.l.b16 %v646
  %v844 = vunpack.c.h.b16 %v646
  %v845 = vunpack.c.l.b16 %v647
  %v846 = vunpack.c.h.b16 %v647
  %v847 = vunpack.c.l.b16 %v648
  %v848 = vunpack.c.h.b16 %v648
  %v849 = vunpack.c.l.b16 %v649
  %v850 = vunpack.c.h.b16 %v649
  %v851 = vunpack.c.l.b16 %v650
  %v852 = vunpack.c.h.b16 %v650
  %v853 = vunpack.c.l.b16 %v651
  %v854 = vunpack.c.h.b16 %v651
  %v855 = vunpack.c.l.b16 %v652
  %v856 = vunpack.c.h.b16 %v652
  %v857 = vpack.c.b16 %v731, %v729
  %v858 = vpack.c.b16 %v732, %v730
  %v859 = vpack.c.b16 %v735, %v733
  %v860 = vpack.c.b16 %v736, %v734
  %v861 = vpack.c.b16 %v739, %v737
  %v862 = vpack.c.b16 %v740, %v738
  %v863 = vpack.c.b16 %v743, %v741
  %v864 = vpack.c.b16 %v744, %v742
  %v865 = vpack.c.b16 %v747, %v745
  %v866 = vpack.c.b16 %v748, %v746
  %v867 = vpack.c.b16 %v751, %v749
  %v868 = vpack.c.b16 %v752, %v750
  %v869 = vpack.c.b16 %v755, %v753
  %v870 = vpack.c.b16 %v756, %v754
  %v871 = vpack.c.b16 %v759, %v757
  %v872 = vpack.c.b16 %v760, %v758
  %v873 = vpack.c.b16 %v763, %v761
  %v874 = vpack.c.b16 %v764, %v762
  %v875 = vpack.c.b16 %v767, %v765
  %v876 = vpack.c.b16 %v768, %v766
  %v877 = vpack.c.b16 %v771, %v769
  %v878 = vpack.c.b16 %v772, %v770
  %v879 = vpack.c.b16 %v775, %v773
  %v880 = vpack.c.b16 %v776, %v774
  %v881 = vpack.c.b16 %v779, %v777
  %v882 = vpack.c.b16 %v780, %v778
  %v883 = vpack.c.b16 %v783, %v781
  %v884 = vpack.c.b16 %v784, %v782
  %v885 = vpack.c.b16 %v787, %v785
  %v886 = vpack.c.b16 %v788, %v786
  %v887 = vpack.c.b16 %v791, %v789
  %v888 = vpack.c.b16 %v792, %v790
  %v889 = vpack.c.b16 %v795, %v793
  %v890 = vpack.c.b16 %v796, %v794
  %v891 = vpack.c.b16 %v799, %v797
  %v892 = vpack.c.b16 %v800, %v798
  %v893 = vpack.c.b16 %v803, %v801
  %v894 = vpack.c.b16 %v804, %v802
  %v895 = vpack.c.b16 %v807, %v805
  %v896 = vpack.c.b16 %v808, %v806
  %v897 = vpack.c.b16 %v811, %v809
  %v898 = vpack.c.b16 %v812, %v810
  %v899 = vpack.c.b16 %v815, %v813
  %v900 = vpack.c.b16 %v816, %v814
  %v901 = vpack.c.b16 %v819, %v817
  %v902 = vpack.c.b16 %v820, %v818
  %v903 = vpack.c.b16 %v823, %v821
  %v904 = vpack.c.b16 %v824, %v822
  %v905 = vpack.c.b16 %v827, %v825
  %v906 = vpack.c.b16 %v828, %v826
  %v907 = vpack.c.b16 %v831, %v829
  %v908 = vpack.c.b16 %v832, %v830
  %v909 = vpack.c.b16 %v835, %v833
  %v910 = vpack.c.b16 %v836, %v834
  %v911 = vpack.c.b16 %v839, %v837
  %v912 = vpack.c.b16 %v840, %v838
  %v913 = vpack.c.b16 %v843, %v841
  %v914 = vpack.c.b16 %v844, %v842
  %v915 = vpack.c.b16 %v847, %v845
  %v916 = vpack.c.b16 %v848, %v846
  %v917 = vpack.c.b16 %v851, %v849
  %v918 = vpack.c.b16 %v852, %v850
  %v919 = vpack.c.b16 %v855, %v853
  %v920 = vpack.c.b16 %v856, %v854
  %985 = vmatprep.subr.bf16.mxu0 %v858
  %986 = vmatpush1.bf16.msra.mxu0 %v857
  %987 = vmatprep.subr.bf16.mxu0 %v860
  %988 = vmatpush1.bf16.msra.mxu0 %v859
  %989 = vmatprep.subr.bf16.mxu0 %v862
  %990 = vmatpush1.bf16.msra.mxu0 %v861
  %991 = vmatprep.subr.bf16.mxu0 %v864
  %992 = vmatpush1.bf16.msra.mxu0 %v863
  %993 = vmatprep.subr.bf16.mxu0 %v866
  %994 = vmatpush1.bf16.msra.mxu0 %v865
  %995 = vmatprep.subr.bf16.mxu0 %v868
  %996 = vmatpush1.bf16.msra.mxu0 %v867
  %997 = vmatprep.subr.bf16.mxu0 %v870
  %998 = vmatpush1.bf16.msra.mxu0 %v869
  %999 = vmatprep.subr.bf16.mxu0 %v872
  %1000 = vmatpush1.bf16.msra.mxu0 %v871
  %1001 = vmatprep.subr.bf16.mxu0 %v874
  %1002 = vmatpush1.bf16.msra.mxu0 %v873
  %1003 = vmatprep.subr.bf16.mxu0 %v876
  %1004 = vmatpush1.bf16.msra.mxu0 %v875
  %1005 = vmatprep.subr.bf16.mxu0 %v878
  %1006 = vmatpush1.bf16.msra.mxu0 %v877
  %1007 = vmatprep.subr.bf16.mxu0 %v880
  %1008 = vmatpush1.bf16.msra.mxu0 %v879
  %1009 = vmatprep.subr.bf16.mxu0 %v882
  %1010 = vmatpush1.bf16.msra.mxu0 %v881
  %1011 = vmatprep.subr.bf16.mxu0 %v884
  %1012 = vmatpush1.bf16.msra.mxu0 %v883
  %1013 = vmatprep.subr.bf16.mxu0 %v886
  %1014 = vmatpush1.bf16.msra.mxu0 %v885
  %1015 = vmatprep.subr.bf16.mxu0 %v888
  %1016 = vmatpush1.bf16.msra.mxu0 %v887
  %1017 = vmatprep.mubr.bf16.mxu0 %v582
  %1018 = vmatmul.mubr.bf16.gmra.mrb[0].mxu0 %v581
  %v1019 = vpop.f32.mrb[0].mxu0
  %v1020 = vadd.f32 %v658, %v1019
  %v1021 = vpop.f32.mrb[0].mxu0
  %v1022 = vadd.f32 %v662, %v1021
  %v1023 = vpop.f32.mrb[0].mxu0
  %v1024 = vadd.f32 %v658, %v1023
  %v1025 = vpop.f32.mrb[0].mxu0
  %v1026 = vadd.f32 %v662, %v1025
  %1027 = vmatprep.mubr.bf16.mxu0 %v586
  %1028 = vmatmul.mubr.bf16.gmra.mrb[0].mxu0 %v585
  %v1029 = vpop.f32.mrb[0].mxu0
  %v1030 = vadd.f32 %v658, %v1029
  %v1031 = vpop.f32.mrb[0].mxu0
  %v1032 = vadd.f32 %v662, %v1031
  %v1033 = vpop.f32.mrb[0].mxu0
  %v1034 = vadd.f32 %v658, %v1033
  %v1035 = vpop.f32.mrb[0].mxu0
  %v1036 = vadd.f32 %v662, %v1035
  %1037 = vdwg.mxu0
  %1038 = vmatprep.subr.bf16.mxu0 %v890
  %1039 = vmatpush1.bf16.msra.mxu0 %v889
  %1040 = vmatprep.subr.bf16.mxu0 %v892
  %1041 = vmatpush1.bf16.msra.mxu0 %v891
  %1042 = vmatprep.subr.bf16.mxu0 %v894
  %1043 = vmatpush1.bf16.msra.mxu0 %v893
  %1044 = vmatprep.subr.bf16.mxu0 %v896
  %1045 = vmatpush1.bf16.msra.mxu0 %v895
  %1046 = vmatprep.subr.bf16.mxu0 %v898
  %1047 = vmatpush1.bf16.msra.mxu0 %v897
  %1048 = vmatprep.subr.bf16.mxu0 %v900
  %1049 = vmatpush1.bf16.msra.mxu0 %v899
  %1050 = vmatprep.subr.bf16.mxu0 %v902
  %1051 = vmatpush1.bf16.msra.mxu0 %v901
  %1052 = vmatprep.subr.bf16.mxu0 %v904
  %1053 = vmatpush1.bf16.msra.mxu0 %v903
  %1054 = vmatprep.subr.bf16.mxu0 %v906
  %1055 = vmatpush1.bf16.msra.mxu0 %v905
  %1056 = vmatprep.subr.bf16.mxu0 %v908
  %1057 = vmatpush1.bf16.msra.mxu0 %v907
  %1058 = vmatprep.subr.bf16.mxu0 %v910
  %1059 = vmatpush1.bf16.msra.mxu0 %v909
  %1060 = vmatprep.subr.bf16.mxu0 %v912
  %1061 = vmatpush1.bf16.msra.mxu0 %v911
  %1062 = vmatprep.subr.bf16.mxu0 %v914
  %1063 = vmatpush1.bf16.msra.mxu0 %v913
  %1064 = vmatprep.subr.bf16.mxu0 %v916
  %1065 = vmatpush1.bf16.msra.mxu0 %v915
  %1066 = vmatprep.subr.bf16.mxu0 %v918
  %1067 = vmatpush1.bf16.msra.mxu0 %v917
  %1068 = vmatprep.subr.bf16.mxu0 %v920
  %1069 = vmatpush1.bf16.msra.mxu0 %v919
  %1070 = vmatprep.mubr.bf16.mxu0 %v584
  %1071 = vmatmul.mubr.bf16.gmra.mrb[0].mxu0 %v583
  %v1072 = vpop.f32.mrb[0].mxu0
  %v1073 = vadd.f32 %v1020, %v1072
  %v1074 = vpop.f32.mrb[0].mxu0
  %v1075 = vadd.f32 %v1022, %v1074
  %v1076 = vpop.f32.mrb[0].mxu0
  %v1077 = vadd.f32 %v1024, %v1076
  %v1078 = vpop.f32.mrb[0].mxu0
  %v1079 = vadd.f32 %v1026, %v1078
  %1080 = vmatprep.mubr.bf16.mxu0 %v588
  %1081 = vmatmul.mubr.bf16.gmra.mrb[0].mxu0 %v587
  %v1082 = vpop.f32.mrb[0].mxu0
  %v1083 = vadd.f32 %v1030, %v1082
  %v1084 = vpop.f32.mrb[0].mxu0
  %v1085 = vadd.f32 %v1032, %v1084
  %v1086 = vpop.f32.mrb[0].mxu0
  %v1087 = vadd.f32 %v1034, %v1086
  %v1088 = vpop.f32.mrb[0].mxu0
  %v1089 = vadd.f32 %v1036, %v1088
  %1090 = vdwg.mxu0
  %v1091 = vld [vmem:[%s5] sm:$0xff]
  %v1092 = vld [vmem:[%s5 + $0x8] sm:$0xff]
  %v1093 = vld [vmem:[%s5 + $0x10] sm:$0xff]
  %v1094 = vld [vmem:[%s5 + $0x18] sm:$0xff]
  %v1095 = vunpack.c.l.bf16 %v1091
  %v1096 = vunpack.c.h.bf16 %v1091
  %v1097 = vunpack.c.l.bf16 %v1092
  %v1098 = vunpack.c.h.bf16 %v1092
  %v1099 = vunpack.c.l.bf16 %v1093
  %v1100 = vunpack.c.h.bf16 %v1093
  %v1101 = vunpack.c.l.bf16 %v1094
  %v1102 = vunpack.c.h.bf16 %v1094
  %v1103 = vadd.f32 %v1073, %v1095
  %v1104 = vadd.f32 %v1075, %v1096
  %v1105 = vadd.f32 %v1077, %v1097
  %v1106 = vadd.f32 %v1079, %v1098
  %v1107 = vadd.f32 %v1083, %v1099
  %v1108 = vadd.f32 %v1085, %v1100
  %v1109 = vadd.f32 %v1087, %v1101
  %v1110 = vadd.f32 %v1089, %v1102
  %v1111 = vadd.f32 %v1103, %v1104
  %1112 = vadd.xlane.f32.xlu0 %v1111
  %v1113 = vpop.xlane.xlu0 %1112
  %v1114 = vadd.f32 %v1105, %v1106
  %1115 = vadd.xlane.f32.xlu0 %v1114
  %v1116 = vpop.xlane.xlu0 %1115
  %v1117 = vadd.f32 %v1107, %v1108
  %1118 = vadd.xlane.f32.xlu0 %v1117
  %v1119 = vpop.xlane.xlu0 %1118
  %v1120 = vadd.f32 %v1109, %v1110
  %1121 = vadd.xlane.f32.xlu0 %v1120
  %v1122 = vpop.xlane.xlu0 %1121
  %v1123 = vrcp.pop 256.0
  %v1124 = vmul.f32 %v1113, %v1123
  %v1125 = vmul.f32 %v1116, %v1123
  %v1126 = vmul.f32 %v1119, %v1123
  %v1127 = vmul.f32 %v1122, %v1123
  %v1128 = vsub.f32 %v1103, %v1124
  %v1129 = vsub.f32 %v1104, %v1124
  %v1130 = vsub.f32 %v1105, %v1125
  %v1131 = vsub.f32 %v1106, %v1125
  %v1132 = vsub.f32 %v1107, %v1126
  %v1133 = vsub.f32 %v1108, %v1126
  %v1134 = vsub.f32 %v1109, %v1127
  %v1135 = vsub.f32 %v1110, %v1127
  %v1136 = vmul.f32 %v1128, %v1128
  %v1137 = vmul.f32 %v1129, %v1129
  %v1138 = vmul.f32 %v1130, %v1130
  %v1139 = vmul.f32 %v1131, %v1131
  %v1140 = vmul.f32 %v1132, %v1132
  %v1141 = vmul.f32 %v1133, %v1133
  %v1142 = vmul.f32 %v1134, %v1134
  %v1143 = vmul.f32 %v1135, %v1135
  %v1144 = vadd.f32 %v1136, %v1137
  %1145 = vadd.xlane.f32.xlu0 %v1144
  %v1146 = vpop.xlane.xlu0 %1145
  %v1147 = vadd.f32 %v1138, %v1139
  %1148 = vadd.xlane.f32.xlu0 %v1147
  %v1149 = vpop.xlane.xlu0 %1148
  %v1150 = vadd.f32 %v1140, %v1141
  %1151 = vadd.xlane.f32.xlu0 %v1150
  %v1152 = vpop.xlane.xlu0 %1151
  %v1153 = vadd.f32 %v1142, %v1143
  %1154 = vadd.xlane.f32.xlu0 %v1153
  %v1155 = vpop.xlane.xlu0 %1154
  %v1156 = vmul.f32 %v1146, %v1123
  %v1157 = vmul.f32 %v1149, %v1123
  %v1158 = vmul.f32 %v1152, %v1123
  %v1159 = vmul.f32 %v1155, %v1123
  %v1160 = vadd.f32 %v1156, 1e-05
  %v1161 = vadd.f32 %v1157, 1e-05
  %v1162 = vadd.f32 %v1158, 1e-05
  %v1163 = vadd.f32 %v1159, 1e-05
  %v1164 = vrsqrt.pop %v1160
  %v1165 = vrsqrt.pop %v1161
  %v1166 = vrsqrt.pop %v1162
  %v1167 = vrsqrt.pop %v1163
  %v1168 = vmul.f32 %v1128, %v1164
  %v1169 = vmul.f32 %v1129, %v1164
  %v1170 = vmul.f32 %v1130, %v1165
  %v1171 = vmul.f32 %v1131, %v1165
  %v1172 = vmul.f32 %v1132, %v1166
  %v1173 = vmul.f32 %v1133, %v1166
  %v1174 = vmul.f32 %v1134, %v1167
  %v1175 = vmul.f32 %v1135, %v1167
  %v1176 = vld [vmem:[%s6] sm:$0x3]
  %v1178 = vlaneseq
  %v1179 = vshrl.u32 %v1178, 7
  %v1180 = vsub.s32 0, %v1179
  %v1181 = vrot.slane %v1176, %v1180
  %v1182 = vlaneseq
  %v1183 = vshrl.u32 %v1182, 7
  %v1184 = vsub.s32 1, %v1183
  %v1185 = vrot.slane %v1176, %v1184
  %v1188 = vmul.f32 %v1168, %v1181
  %v1189 = vmul.f32 %v1169, %v1185
  %v1190 = vmul.f32 %v1170, %v1181
  %v1191 = vmul.f32 %v1171, %v1185
  %v1192 = vmul.f32 %v1172, %v1181
  %v1193 = vmul.f32 %v1173, %v1185
  %v1194 = vmul.f32 %v1174, %v1181
  %v1195 = vmul.f32 %v1175, %v1185
  %v1196 = vld [vmem:[%s7] sm:$0x3]
  %v1198 = vlaneseq
  %v1199 = vshrl.u32 %v1198, 7
  %v1200 = vsub.s32 0, %v1199
  %v1201 = vrot.slane %v1196, %v1200
  %v1202 = vlaneseq
  %v1203 = vshrl.u32 %v1202, 7
  %v1204 = vsub.s32 1, %v1203
  %v1205 = vrot.slane %v1196, %v1204
  %v1208 = vadd.f32 %v1188, %v1201
  %v1209 = vadd.f32 %v1189, %v1205
  %v1210 = vadd.f32 %v1190, %v1201
  %v1211 = vadd.f32 %v1191, %v1205
  %v1212 = vadd.f32 %v1192, %v1201
  %v1213 = vadd.f32 %v1193, %v1205
  %v1214 = vadd.f32 %v1194, %v1201
  %v1215 = vadd.f32 %v1195, %v1205
  %v1216 = vpack.c.bf16 %v1210, %v1208
  %v1217 = vpack.c.bf16 %v1211, %v1209
  %v1218 = vpack.c.bf16 %v1214, %v1212
  %v1219 = vpack.c.bf16 %v1215, %v1213
  %v1224 = vunpack.c.l.b16 %v1216
  %v1225 = vunpack.c.l.b16 %v1217
  %v1226 = vunpack.c.h.b16 %v1216
  %v1227 = vunpack.c.h.b16 %v1217
  %v1228 = vunpack.c.l.b16 %v1218
  %v1229 = vunpack.c.l.b16 %v1219
  %v1230 = vunpack.c.h.b16 %v1218
  %v1231 = vunpack.c.h.b16 %v1219
  %v1232 = vpack.c.b16 %v1225, %v1224
  %v1233 = vpack.c.b16 %v1227, %v1226
  %v1234 = vpack.c.b16 %v1229, %v1228
  %v1235 = vpack.c.b16 %v1231, %v1230
  %1240 = vst [vmem:[%s8] sm:$0xff] %v1232
  %1241 = vst [vmem:[%s8 + $0x8] sm:$0xff] %v1233
  %1242 = vst [vmem:[%s8 + $0x10] sm:$0xff] %v1234
  %1243 = vst [vmem:[%s8 + $0x18] sm:$0xff] %v1235
  // Predicated region
  $region34: #{transformer_forward.34} parent=0 // pred_check
    _
  $region35: #{transformer_forward.34} parent=0 // pred_check_branch
    %1245 = sbr.rel (0) target = $region37
  $region36: #{transformer_forward.34} parent=0 // pred_region
    _
  $region37: #{transformer_forward.34} parent=0 // pred_fallthru
    _
  // Predicated region
  $region38: #{transformer_forward.34} parent=0 // pred_check
    _
  $region39: #{transformer_forward.34} parent=0 // pred_check_branch
    %1247 = sbr.rel (0) target = $region41
  $region40: #{transformer_forward.34} parent=0 // pred_region
    _
  $region41: #{transformer_forward.34} parent=0 // pred_fallthru
    _

// kernel: transformer_forward.43
$region0: #{transformer_forward.43}
  #allocation0 [shape = 'u32[]', space=smem, size = 0x4, offset = 0x4, fixed_abs, tag = 'smem constant byte address 0x4 - core index']
  #allocation1 [shape = 'u32[144,128]{1,0:T(1,128)}', space=vmem, size = 0x12000, scoped, tag = 'internal scratch']
  %s0 = inlined_call_operand.vmem [shape: bf16[2,16,256], index: 0, kind: input, shape index: {}]
  %s1 = inlined_call_operand.vmem [shape: bf16[2,16,512], index: 1, kind: input, shape index: {}]
  %s2 = inlined_call_operand.vmem [shape: f32[2,1,16], index: 2, kind: input, shape index: {}]
  %s3 = inlined_call_operand.vmem [shape: bf16[2,16,256], index: 3, kind: output, shape index: {}]
  %s4 = sld [smem:[#allocation0]]
  $region45: #{transformer_forward.43} parent=0
    _
  %s6 = ssub.s32 1, %s4
  %s7 = scalar_select 0, %s6, %s4
  loop: start=0, step=1, limit=4
  $region2: #{transformer_forward.43} parent=0 // loop_pre_header
    _
  $region3: #{transformer_forward.43} parent=0 // loop_header
    %s9 = sphi 0, %s13
    %p10 = scmp.ge.s32.totalorder %s9, 4
    %s19 = sphi 0, %s21
    %s22 = sphi 0, %s19
    %s23 = sphi 0, %s22
    %s39 = sphi 0, %s23
    %s45 = sphi 0, %s47
    %s48 = sphi 0, %s45
    %s49 = sphi 0, %s48
    %s65 = sphi 0, %s49
    %s71 = sphi 0, %s73
    %s74 = sphi 0, %s71
    %s75 = sphi 0, %s74
    %s91 = sphi 0, %s75
    %s97 = sphi 0, %s99
    %s100 = sphi 0, %s97
    %s101 = sphi 0, %s100
    %s117 = sphi 0, %s101
  $region4: #{transformer_forward.43} parent=0 // loop_header_branch
    %12 = sbr.rel (%p10) target = $region8
  $region5: #{transformer_forward.43} parent=0 // loop_body
    %s14 = ssub.s32 %s9, 1
    %s15 = ssub.s32 %s9, 2
    %s16 = sadd.s32 %s9, 1
    %s17 = ssub.s32 %s9, %s16
    %p18 = scmp.eq.s32.totalorder %s17, 0
    %s20 = sadd.s32 %s19, 1
    %s21 = scalar_select %p18, %s19, %s20
    %p24 = pneg %p18
    %p25 = scmp.eq.s32.totalorder %s9, 1
    %p26 = por %p24, %p25
    %p27 = scmp.ne.s32.totalorder %s19, %s22
    %p28 = scmp.eq.s32.totalorder %s9, 0
    %p29 = por %p27, %p28
    %p30 = scmp.ne.s32.totalorder %s19, %s22
    %p31 = scmp.eq.s32.totalorder %s14, 1
    %p32 = por %p30, %p31
    %p33 = scmp.ne.s32.totalorder %s22, %s23
    %p34 = scmp.eq.s32.totalorder %s14, 0
    %p35 = por %p33, %p34
    %p36 = scmp.ne.s32.totalorder %s22, %s23
    %p37 = scmp.eq.s32.totalorder %s15, 1
    %p38 = por %p36, %p37
    %p40 = scmp.ne.s32.totalorder %s23, %s39
    %p41 = scmp.eq.s32.totalorder %s15, 0
    %p42 = por %p40, %p41
    %s43 = ssub.s32 %s9, %s16
    %p44 = scmp.eq.s32.totalorder %s43, 0
    %s46 = sadd.s32 %s45, 1
    %s47 = scalar_select %p44, %s45, %s46
    %p50 = pneg %p44
    %p51 = scmp.eq.s32.totalorder %s9, 1
    %p52 = por %p50, %p51
    %p53 = scmp.ne.s32.totalorder %s45, %s48
    %p54 = scmp.eq.s32.totalorder %s9, 0
    %p55 = por %p53, %p54
    %p56 = scmp.ne.s32.totalorder %s45, %s48
    %p57 = scmp.eq.s32.totalorder %s14, 1
    %p58 = por %p56, %p57
    %p59 = scmp.ne.s32.totalorder %s48, %s49
    %p60 = scmp.eq.s32.totalorder %s14, 0
    %p61 = por %p59, %p60
    %p62 = scmp.ne.s32.totalorder %s48, %s49
    %p63 = scmp.eq.s32.totalorder %s15, 1
    %p64 = por %p62, %p63
    %p66 = scmp.ne.s32.totalorder %s49, %s65
    %p67 = scmp.eq.s32.totalorder %s15, 0
    %p68 = por %p66, %p67
    %s69 = ssub.s32 %s9, %s16
    %p70 = scmp.eq.s32.totalorder %s69, 0
    %s72 = sadd.s32 %s71, 1
    %s73 = scalar_select %p70, %s71, %s72
    %p76 = pneg %p70
    %p77 = scmp.eq.s32.totalorder %s9, 1
    %p78 = por %p76, %p77
    %p79 = scmp.ne.s32.totalorder %s71, %s74
    %p80 = scmp.eq.s32.totalorder %s9, 0
    %p81 = por %p79, %p80
    %p82 = scmp.ne.s32.totalorder %s71, %s74
    %p83 = scmp.eq.s32.totalorder %s14, 1
    %p84 = por %p82, %p83
    %p85 = scmp.ne.s32.totalorder %s74, %s75
    %p86 = scmp.eq.s32.totalorder %s14, 0
    %p87 = por %p85, %p86
    %p88 = scmp.ne.s32.totalorder %s74, %s75
    %p89 = scmp.eq.s32.totalorder %s15, 1
    %p90 = por %p88, %p89
    %p92 = scmp.ne.s32.totalorder %s75, %s91
    %p93 = scmp.eq.s32.totalorder %s15, 0
    %p94 = por %p92, %p93
    %s95 = ssub.s32 %s9, %s16
    %p96 = scmp.eq.s32.totalorder %s95, 0
    %s98 = sadd.s32 %s97, 1
    %s99 = scalar_select %p96, %s97, %s98
    %p102 = pneg %p96
    %p103 = scmp.eq.s32.totalorder %s9, 1
    %p104 = por %p102, %p103
    %p105 = scmp.ne.s32.totalorder %s97, %s100
    %p106 = scmp.eq.s32.totalorder %s9, 0
    %p107 = por %p105, %p106
    %p108 = scmp.ne.s32.totalorder %s97, %s100
    %p109 = scmp.eq.s32.totalorder %s14, 1
    %p110 = por %p108, %p109
    %p111 = scmp.ne.s32.totalorder %s100, %s101
    %p112 = scmp.eq.s32.totalorder %s14, 0
    %p113 = por %p111, %p112
    %p114 = scmp.ne.s32.totalorder %s100, %s101
    %p115 = scmp.eq.s32.totalorder %s15, 1
    %p116 = por %p114, %p115
    %p118 = scmp.ne.s32.totalorder %s101, %s117
    %p119 = scmp.eq.s32.totalorder %s15, 0
    %p120 = por %p118, %p119
    %p121 = scmp.le.s32.totalorder 1, %s9
    %p122 = scmp.lt.s32.totalorder %s9, 3
    %p123 = pnand %p121, %p122
    %p124 = pneg %p123
    // Predicated region
    $region9: #{transformer_forward.43} parent=5 // pred_check
      _
    $region10: #{transformer_forward.43} parent=5 // pred_check_branch
      %126 = sbr.rel (%p123) target = $region12
    $region11: #{transformer_forward.43} parent=5 // pred_region
      %s127 = ssub.s32 %s9, 1
    $region12: #{transformer_forward.43} parent=5 // pred_fallthru
      _
    %p128 = scmp.lt.s32.totalorder %s9, 2
    // Predicated region
    $region13: #{transformer_forward.43} parent=5 // pred_check
      %p129 = pneg %p128
    $region14: #{transformer_forward.43} parent=5 // pred_check_branch
      %131 = sbr.rel (%p129) target = $region16
    $region15: #{transformer_forward.43} parent=5 // pred_region
      // Predicated region
      $region17: #{transformer_forward.43} parent=15 // pred_check
        %p132 = pneg %p29
      $region18: #{transformer_forward.43} parent=15 // pred_check_branch
        %134 = sbr.rel (%p132) target = $region20
      $region19: #{transformer_forward.43} parent=15 // pred_region
        %p135 = scmp.lt.s32.totalorder %s9, 1
        %s136 = scalar_select %p135, %s9, 1
        %s137 = smul.addr %s136, 4
        %s138 = smul.addr %s137, 4
        %s139 = scalar_lea.vmem %s0, %s138
      $region20: #{transformer_forward.43} parent=15 // pred_fallthru
        _
      // Predicated region
      $region21: #{transformer_forward.43} parent=15 // pred_check
        %p140 = pneg %p55
      $region22: #{transformer_forward.43} parent=15 // pred_check_branch
        %142 = sbr.rel (%p140) target = $region24
      $region23: #{transformer_forward.43} parent=15 // pred_region
        %p143 = scmp.lt.s32.totalorder %s9, 1
        %s144 = scalar_select %p143, %s9, 1
        %s145 = smul.addr %s144, 8
        %s146 = smul.addr %s145, 4
        %s147 = scalar_lea.vmem %s1, %s146
      $region24: #{transformer_forward.43} parent=15 // pred_fallthru
        _
      // Predicated region
      $region25: #{transformer_forward.43} parent=15 // pred_check
        %p148 = pneg %p81
      $region26: #{transformer_forward.43} parent=15 // pred_check_branch
        %150 = sbr.rel (%p148) target = $region28
      $region27: #{transformer_forward.43} parent=15 // pred_region
        %p151 = scmp.lt.s32.totalorder %s9, 1
        %s152 = scalar_select %p151, %s9, 1
        %s153 = scalar_lea.vmem %s2, %s152
      $region28: #{transformer_forward.43} parent=15 // pred_fallthru
        _
    $region16: #{transformer_forward.43} parent=5 // pred_fallthru
      _
    %p154 = scmp.le.s32.totalorder 1, %s9
    %p155 = scmp.lt.s32.totalorder %s9, 3
    %p156 = pnand %p154, %p155
    %p157 = pneg %p156
    // Predicated region
    $region29: #{transformer_forward.43} parent=5 // pred_check
      _
    $region30: #{transformer_forward.43} parent=5 // pred_check_branch
      %159 = sbr.rel (%p156) target = $region32
    $region31: #{transformer_forward.43} parent=5 // pred_region
      %s160 = ssub.s32 %s9, 1
      %p161 = scmp.lt.s32.totalorder %s14, 1
      %s162 = scalar_select %p161, %s14, 1
      %s163 = smul.addr %s162, 4
      %s164 = smul.addr %s163, 4
      %s165 = scalar_lea.vmem %s0, %s164
      %p166 = pneg %p35
      %p167 = pneg %p32
      %p168 = scmp.lt.s32.totalorder %s14, 1
      %s169 = scalar_select %p168, %s14, 1
      %s170 = smul.addr %s169, 8
      %s171 = smul.addr %s170, 4
      %s172 = scalar_lea.vmem %s1, %s171
      %p173 = pneg %p61
      %p174 = pneg %p58
      %p175 = scmp.lt.s32.totalorder %s14, 1
      %s176 = scalar_select %p175, %s14, 1
      %s177 = scalar_lea.vmem %s2, %s176
      %p178 = pneg %p87
      %p179 = pneg %p84
      %p180 = pneg %p113
      %p181 = pneg %p110
      %p182 = scmp.lt.s32.totalorder %s14, 1
      %s183 = scalar_select %p182, %s14, 1
      %s184 = smul.addr %s183, 4
      %s185 = smul.addr %s184, 4
      %s186 = scalar_lea.vmem %s3, %s185
      %p187 = scmp.lt.s32.totalorder %s14, 1
      %s188 = scalar_select %p187, %s14, 1
      %s189 = smul.addr %s188, 4
      %s190 = smul.addr %s189, 4
      %s191 = scalar_lea.vmem %s0, %s190
      %p192 = scmp.lt.s32.totalorder %s14, 1
      %s193 = scalar_select %p192, %s14, 1
      %s194 = smul.addr %s193, 8
      %s195 = smul.addr %s194, 4
      %s196 = scalar_lea.vmem %s1, %s195
      %p197 = scmp.lt.s32.totalorder %s14, 1
      %s198 = scalar_select %p197, %s14, 1
      %s199 = scalar_lea.vmem %s2, %s198
      %p200 = scmp.lt.s32.totalorder %s14, 1
      %s201 = scalar_select %p200, %s14, 1
      %s202 = smul.addr %s201, 4
      %s203 = smul.addr %s202, 4
      %s204 = scalar_lea.vmem %s3, %s203
      %v206 = vld [vmem:[%s199] sm:$0x1]
      %v207 = vlaneseq
      %v208 = vshrl.u32 %v207, 7
      %v209 = vadd.s32 %v208, 8
      %v210 = vlaneseq
      %v211 = vand.u32 %v210, 127
      %vm212 = vcmp.gt.s32.totalorder %v211, %v208
      %vm213 = vcmp.gt.s32.totalorder %v211, %v209
      %v214 = vsel %vm212, -1e+30, 0.0
      %v215 = vsel %vm213, -1e+30, 0.0
      %v217 = vlaneseq
      %v218 = vshrl.u32 %v217, 7
      %v219 = vsub.s32 0, %v218
      %v220 = vrot.slane %v206, %v219
      %v222 = vadd.f32 %v220, %v214
      %v223 = vadd.f32 %v220, %v215
      %v224 = vld [vmem:[%s191] sm:$0xf]
      %v225 = vld [vmem:[%s191 + $0x8] sm:$0xf]
      %v226 = vld [vmem:[%s196] sm:$0xf]
      %v227 = vld [vmem:[%s196 + $0x10] sm:$0xf]
      %v228 = vld [vmem:[%s196 + $0x8] sm:$0xf]
      %v229 = vld [vmem:[%s196 + $0x18] sm:$0xf]
      %v232 = vunpack.c.l.b16 %v224
      %v233 = vunpack.c.l.b16 %v225
      %v234 = vpack.c.b16 %v233, %v232
      %v238 = vunpack.c.l.b16 %v226
      %v239 = vunpack.c.l.b16 %v227
      %v240 = vpack.c.b16 %v239, %v238
      %242 = vmatprep.subr.bf16.mxu0 0
      %243 = vmatpush1.bf16.xpose.msra.mxu0 %v240
      %244 = vmatprep.subr.bf16.mxu0 0
      %245 = vmatpush1.bf16.xpose.msra.mxu0 0
      %246 = vmatprep.subr.bf16.mxu0 0
      %247 = vmatpush1.bf16.xpose.msra.mxu0 0
      %248 = vmatprep.subr.bf16.mxu0 0
      %249 = vmatpush1.bf16.xpose.msra.mxu0 0
      %250 = vmatprep.subr.bf16.mxu0 0
      %251 = vmatpush1.bf16.xpose.msra.mxu0 0
      %252 = vmatprep.subr.bf16.mxu0 0
      %253 = vmatpush1.bf16.xpose.msra.mxu0 0
      %254 = vmatprep.subr.bf16.mxu0 0
      %255 = vmatpush1.bf16.xpose.msra.mxu0 0
      %256 = vmatprep.subr.bf16.mxu0 0
      %257 = vmatpush1.bf16.xpose.msra.mxu0 0
      %258 = vmatprep.subr.bf16.mxu0 0
      %259 = vmatpush1.bf16.xpose.msra.mxu0 0
      %260 = vmatprep.subr.bf16.mxu0 0
      %261 = vmatpush1.bf16.xpose.msra.mxu0 0
      %262 = vmatprep.subr.bf16.mxu0 0
      %263 = vmatpush1.bf16.xpose.msra.mxu0 0
      %264 = vmatprep.subr.bf16.mxu0 0
      %265 = vmatpush1.bf16.xpose.msra.mxu0 0
      %266 = vmatprep.subr.bf16.mxu0 0
      %267 = vmatpush1.bf16.xpose.msra.mxu0 0
      %268 = vmatprep.subr.bf16.mxu0 0
      %269 = vmatpush1.bf16.xpose.msra.mxu0 0
      %270 = vmatprep.subr.bf16.mxu0 0
      %271 = vmatpush1.bf16.xpose.msra.mxu0 0
      %272 = vmatprep.subr.bf16.mxu0 0
      %273 = vmatpush1.bf16.xpose.msra.mxu0 0
      %274 = vmatprep.mubr.bf16.mxu0 0
      %275 = vmatmul.mubr.bf16.gmra.mrb[0].mxu0 %v234
      %v276 = vpop.f32.mrb[0].mxu0
      %v277 = vadd.f32 0.0, %v276
      %v278 = vpop.f32.mrb[0].mxu0
      %v279 = vpop.f32.mrb[0].mxu0
      %v280 = vadd.f32 0.0, %v279
      %v281 = vpop.f32.mrb[0].mxu0
      %282 = vdwg.mxu0
      %v283 = vmul.f32 %v277, 0.088388346
      %v284 = vmul.f32 %v280, 0.088388346
      %v285 = vadd.f32 %v283, %v222
      %v286 = vadd.f32 %v284, %v223
      %vm287 = vcmask 130048
      %v288 = vsel %vm287, %v285, -inf
      %289 = vmax.xlane.f32.xlu0 %v288
      %v290 = vpop.xlane.xlu0 %289
      %v291 = vsel %vm287, %v286, -inf
      %292 = vmax.xlane.f32.xlu0 %v291
      %v293 = vpop.xlane.xlu0 %292
      %v294 = vsub.f32 %v285, %v290
      %v295 = vsub.f32 %v286, %v293
      %v296 = vmul.f32 %v294, 1.442695
      %v297 = vpow.pop %v296
      %v298 = vmul.f32 %v295, 1.442695
      %v299 = vpow.pop %v298
      %v300 = vsel %vm287, %v297, 0.0
      %301 = vadd.xlane.f32.xlu0 %v300
      %v302 = vpop.xlane.xlu0 %301
      %v303 = vsel %vm287, %v299, 0.0
      %304 = vadd.xlane.f32.xlu0 %v303
      %v305 = vpop.xlane.xlu0 %304
      %v306 = vrcp.pop %v302
      %v307 = vrcp.pop %v305
      %v308 = vmul.f32 %v297, %v306
      %v309 = vmul.f32 %v299, %v307
      %v310 = vpack.c.bf16 %v309, %v308
      %v313 = vunpack.c.l.b16 %v228
      %v314 = vunpack.c.l.b16 %v229
      %v315 = vpack.c.b16 %v314, %v313
      %v318 = vsel %vm287, %v310, 0
      %320 = vmatprep.subr.bf16.mxu0 0
      %321 = vmatpush1.bf16.msra.mxu0 %v315
      %322 = vmatprep.subr.bf16.mxu0 0
      %323 = vmatpush1.bf16.msra.mxu0 0
      %324 = vmatprep.subr.bf16.mxu0 0
      %325 = vmatpush1.bf16.msra.mxu0 0
      %326 = vmatprep.subr.bf16.mxu0 0
      %327 = vmatpush1.bf16.msra.mxu0 0
      %328 = vmatprep.subr.bf16.mxu0 0
      %329 = vmatpush1.bf16.msra.mxu0 0
      %330 = vmatprep.subr.bf16.mxu0 0
      %331 = vmatpush1.bf16.msra.mxu0 0
      %332 = vmatprep.subr.bf16.mxu0 0
      %333 = vmatpush1.bf16.msra.mxu0 0
      %334 = vmatprep.subr.bf16.mxu0 0
      %335 = vmatpush1.bf16.msra.mxu0 0
      %336 = vmatprep.subr.bf16.mxu0 0
      %337 = vmatpush1.bf16.msra.mxu0 0
      %338 = vmatprep.subr.bf16.mxu0 0
      %339 = vmatpush1.bf16.msra.mxu0 0
      %340 = vmatprep.subr.bf16.mxu0 0
      %341 = vmatpush1.bf16.msra.mxu0 0
      %342 = vmatprep.subr.bf16.mxu0 0
      %343 = vmatpush1.bf16.msra.mxu0 0
      %344 = vmatprep.subr.bf16.mxu0 0
      %345 = vmatpush1.bf16.msra.mxu0 0
      %346 = vmatprep.subr.bf16.mxu0 0
      %347 = vmatpush1.bf16.msra.mxu0 0
      %348 = vmatprep.subr.bf16.mxu0 0
      %349 = vmatpush1.bf16.msra.mxu0 0
      %350 = vmatprep.subr.bf16.mxu0 0
      %351 = vmatpush1.bf16.msra.mxu0 0
      %352 = vmatprep.mubr.bf16.mxu0 0
      %353 = vmatmul.mubr.bf16.gmra.mrb[0].mxu0 %v318
      %v354 = vpop.f32.mrb[0].mxu0
      %v355 = vadd.f32 0.0, %v354
      %v356 = vpop.f32.mrb[0].mxu0
      %v357 = vpop.f32.mrb[0].mxu0
      %v358 = vadd.f32 0.0, %v357
      %v359 = vpop.f32.mrb[0].mxu0
      %360 = vdwg.mxu0
      %v361 = vld [vmem:[%s191 + $0x4] sm:$0xf]
      %v362 = vld [vmem:[%s191 + $0xc] sm:$0xf]
      %v363 = vld [vmem:[%s196 + $0x4] sm:$0xf]
      %v364 = vld [vmem:[%s196 + $0x14] sm:$0xf]
      %v365 = vld [vmem:[%s196 + $0xc] sm:$0xf]
      %v366 = vld [vmem:[%s196 + $0x1c] sm:$0xf]
      %v369 = vunpack.c.l.b16 %v361
      %v370 = vunpack.c.l.b16 %v362
      %v371 = vpack.c.b16 %v370, %v369
      %v375 = vunpack.c.l.b16 %v363
      %v376 = vunpack.c.l.b16 %v364
      %v377 = vpack.c.b16 %v376, %v375
      %379 = vmatprep.subr.bf16.mxu0 0
      %380 = vmatpush1.bf16.xpose.msra.mxu0 %v377
      %381 = vmatprep.subr.bf16.mxu0 0
      %382 = vmatpush1.bf16.xpose.msra.mxu0 0
      %383 = vmatprep.subr.bf16.mxu0 0
      %384 = vmatpush1.bf16.xpose.msra.mxu0 0
      %385 = vmatprep.subr.bf16.mxu0 0
      %386 = vmatpush1.bf16.xpose.msra.mxu0 0
      %387 = vmatprep.subr.bf16.mxu0 0
      %388 = vmatpush1.bf16.xpose.msra.mxu0 0
      %389 = vmatprep.subr.bf16.mxu0 0
      %390 = vmatpush1.bf16.xpose.msra.mxu0 0
      %391 = vmatprep.subr.bf16.mxu0 0
      %392 = vmatpush1.bf16.xpose.msra.mxu0 0
      %393 = vmatprep.subr.bf16.mxu0 0
      %394 = vmatpush1.bf16.xpose.msra.mxu0 0
      %395 = vmatprep.subr.bf16.mxu0 0
      %396 = vmatpush1.bf16.xpose.msra.mxu0 0
      %397 = vmatprep.subr.bf16.mxu0 0
      %398 = vmatpush1.bf16.xpose.msra.mxu0 0
      %399 = vmatprep.subr.bf16.mxu0 0
      %400 = vmatpush1.bf16.xpose.msra.mxu0 0
      %401 = vmatprep.subr.bf16.mxu0 0
      %402 = vmatpush1.bf16.xpose.msra.mxu0 0
      %403 = vmatprep.subr.bf16.mxu0 0
      %404 = vmatpush1.bf16.xpose.msra.mxu0 0
      %405 = vmatprep.subr.bf16.mxu0 0
      %406 = vmatpush1.bf16.xpose.msra.mxu0 0
      %407 = vmatprep.subr.bf16.mxu0 0
      %408 = vmatpush1.bf16.xpose.msra.mxu0 0
      %409 = vmatprep.subr.bf16.mxu0 0
      %410 = vmatpush1.bf16.xpose.msra.mxu0 0
      %411 = vmatprep.mubr.bf16.mxu0 0
      %412 = vmatmul.mubr.bf16.gmra.mrb[0].mxu0 %v371
      %v413 = vpop.f32.mrb[0].mxu0
      %v414 = vadd.f32 0.0, %v413
      %v415 = vpop.f32.mrb[0].mxu0
      %v416 = vpop.f32.mrb[0].mxu0
      %v417 = vadd.f32 0.0, %v416
      %v418 = vpop.f32.mrb[0].mxu0
      %419 = vdwg.mxu0
      %v420 = vmul.f32 %v414, 0.088388346
      %v421 = vmul.f32 %v417, 0.088388346
      %v422 = vadd.f32 %v420, %v222
      %v423 = vadd.f32 %v421, %v223
      %v424 = vsel %vm287, %v422, -inf
      %425 = vmax.xlane.f32.xlu0 %v424
      %v426 = vpop.xlane.xlu0 %425
      %v427 = vsel %vm287, %v423, -inf
      %428 = vmax.xlane.f32.xlu0 %v427
      %v429 = vpop.xlane.xlu0 %428
      %v430 = vsub.f32 %v422, %v426
      %v431 = vsub.f32 %v423, %v429
      %v432 = vmul.f32 %v430, 1.442695
      %v433 = vpow.pop %v432
      %v434 = vmul.f32 %v431, 1.442695
      %v435 = vpow.pop %v434
      %v436 = vsel %vm287, %v433, 0.0
      %437 = vadd.xlane.f32.xlu0 %v436
      %v438 = vpop.xlane.xlu0 %437
      %v439 = vsel %vm287, %v435, 0.0
      %440 = vadd.xlane.f32.xlu0 %v439
      %v441 = vpop.xlane.xlu0 %440
      %v442 = vrcp.pop %v438
      %v443 = vrcp.pop %v441
      %v444 = vmul.f32 %v433, %v442
      %v445 = vmul.f32 %v435, %v443
      %v446 = vpack.c.bf16 %v445, %v444
      %v449 = vunpack.c.l.b16 %v365
      %v450 = vunpack.c.l.b16 %v366
      %v451 = vpack.c.b16 %v450, %v449
      %v454 = vsel %vm287, %v446, 0
      %456 = vmatprep.subr.bf16.mxu0 0
      %457 = vmatpush1.bf16.msra.mxu0 %v451
      %458 = vmatprep.subr.bf16.mxu0 0
      %459 = vmatpush1.bf16.msra.mxu0 0
      %460 = vmatprep.subr.bf16.mxu0 0
      %461 = vmatpush1.bf16.msra.mxu0 0
      %462 = vmatprep.subr.bf16.mxu0 0
      %463 = vmatpush1.bf16.msra.mxu0 0
      %464 = vmatprep.subr.bf16.mxu0 0
      %465 = vmatpush1.bf16.msra.mxu0 0
      %466 = vmatprep.subr.bf16.mxu0 0
      %467 = vmatpush1.bf16.msra.mxu0 0
      %468 = vmatprep.subr.bf16.mxu0 0
      %469 = vmatpush1.bf16.msra.mxu0 0
      %470 = vmatprep.subr.bf16.mxu0 0
      %471 = vmatpush1.bf16.msra.mxu0 0
      %472 = vmatprep.subr.bf16.mxu0 0
      %473 = vmatpush1.bf16.msra.mxu0 0
      %474 = vmatprep.subr.bf16.mxu0 0
      %475 = vmatpush1.bf16.msra.mxu0 0
      %476 = vmatprep.subr.bf16.mxu0 0
      %477 = vmatpush1.bf16.msra.mxu0 0
      %478 = vmatprep.subr.bf16.mxu0 0
      %479 = vmatpush1.bf16.msra.mxu0 0
      %480 = vmatprep.subr.bf16.mxu0 0
      %481 = vmatpush1.bf16.msra.mxu0 0
      %482 = vmatprep.subr.bf16.mxu0 0
      %483 = vmatpush1.bf16.msra.mxu0 0
      %484 = vmatprep.subr.bf16.mxu0 0
      %485 = vmatpush1.bf16.msra.mxu0 0
      %486 = vmatprep.subr.bf16.mxu0 0
      %487 = vmatpush1.bf16.msra.mxu0 0
      %488 = vmatprep.mubr.bf16.mxu0 0
      %489 = vmatmul.mubr.bf16.gmra.mrb[0].mxu0 %v454
      %v490 = vpop.f32.mrb[0].mxu0
      %v491 = vadd.f32 0.0, %v490
      %v492 = vpop.f32.mrb[0].mxu0
      %v493 = vpop.f32.mrb[0].mxu0
      %v494 = vadd.f32 0.0, %v493
      %v495 = vpop.f32.mrb[0].mxu0
      %496 = vdwg.mxu0
      %v497 = vpack.c.bf16 %v358, %v355
      %v498 = vpack.c.bf16 %v494, %v491
      %v501 = vunpack.c.l.b16 %v497
      %v502 = vunpack.c.l.b16 %v498
      %v503 = vunpack.c.h.b16 %v497
      %v504 = vunpack.c.h.b16 %v498
      %v505 = vpack.c.b16 %v502, %v501
      %v506 = vpack.c.b16 %v504, %v503
      %509 = vst [vmem:[%s204] sm:$0xff] %v505
      %510 = vst [vmem:[%s204 + $0x8] sm:$0xff] %v506
      %p511 = scmp.lt.s32.totalorder %s14, 1
      %s512 = scalar_select %p511, %s14, 1
      %s513 = smul.addr %s512, 4
      %s514 = smul.addr %s513, 4
      %s515 = scalar_lea.vmem %s3, %s514
      // Predicated region
      $region33: #{transformer_forward.43} parent=31 // pred_check
        %p516 = pneg %p110
      $region34: #{transformer_forward.43} parent=31 // pred_check_branch
        %518 = sbr.rel (%p516) target = $region36
      $region35: #{transformer_forward.43} parent=31 // pred_region
        _
      $region36: #{transformer_forward.43} parent=31 // pred_fallthru
        _
    $region32: #{transformer_forward.43} parent=5 // pred_fallthru
      _
    %p519 = scmp.le.s32.totalorder 2, %s9
    // Predicated region
    $region37: #{transformer_forward.43} parent=5 // pred_check
      %p520 = pneg %p519
    $region38: #{transformer_forward.43} parent=5 // pred_check_branch
      %522 = sbr.rel (%p520) target = $region40
    $region39: #{transformer_forward.43} parent=5 // pred_region
      %s523 = ssub.s32 %s9, 2
      // Predicated region
      $region41: #{transformer_forward.43} parent=39 // pred_check
        %p524 = pneg %p116
      $region42: #{transformer_forward.43} parent=39 // pred_check_branch
        %526 = sbr.rel (%p524) target = $region44
      $region43: #{transformer_forward.43} parent=39 // pred_region
        %p527 = scmp.lt.s32.totalorder %s15, 1
        %s528 = scalar_select %p527, %s15, 1
        %s529 = smul.addr %s528, 4
        %s530 = smul.addr %s529, 4
        %s531 = scalar_lea.vmem %s3, %s530
      $region44: #{transformer_forward.43} parent=39 // pred_fallthru
        _
    $region40: #{transformer_forward.43} parent=5 // pred_fallthru
      _
  $region6: #{transformer_forward.43} parent=0 // loop_footer
    %s13 = sadd.s32 1, %s9
  $region7: #{transformer_forward.43} parent=0 // loop_footer_branch
    %8 = sbr.rel target = $region3
  $region8: #{transformer_forward.43} parent=0 // loop_exit
    _

// kernel: transformer_forward.59
$region0: #{transformer_forward.59}
  #allocation0 [shape = 'u32[]', space=smem, size = 0x4, offset = 0x4, fixed_abs, tag = 'smem constant byte address 0x4 - core index']
  #allocation1 [shape = 'u32[144,128]{1,0:T(1,128)}', space=vmem, size = 0x12000, scoped, tag = 'internal scratch']
  %s0 = inlined_call_operand.vmem [shape: bf16[32,256], index: 0, kind: input, shape index: {}]
  %s1 = inlined_call_operand.vmem [shape: f32[1,256], index: 1, kind: input, shape index: {}]
  %s2 = inlined_call_operand.vmem [shape: f32[1,256], index: 2, kind: input, shape index: {}]
  %s3 = inlined_call_operand.vmem [shape: bf16[256,512], index: 3, kind: input, shape index: {}]
  %s4 = inlined_call_operand.vmem [shape: f32[1,512], index: 4, kind: input, shape index: {}]
  %s5 = inlined_call_operand.hbm [shape: f32[32,512], index: 5, kind: output, shape index: {}]
  %s6 = sld [smem:[#allocation0]]
  $region30: #{transformer_forward.59} parent=0
    _
  %s8 = ssub.s32 1, %s6
  %s9 = scalar_select 0, %s8, %s6
  $region1: #{transformer_forward.59} parent=0
    #allocation2 [shape = 'u8[65536]{0}', space=vmem, size = 0x10000, scoped, tag = 'output window, operand 0, single buffered']
    #allocation3 [shape = 's32[1]{0}', space=sflag, size = 0x4, scoped, tag = 'scoped memory for transformer_forward.59']
    %10 = vsyncpa [#allocation3], 0
    // Predicated region
    $region2: #{transformer_forward.59} parent=1 // pred_check
      _
    $region3: #{transformer_forward.59} parent=1 // pred_check_branch
      %12 = sbr.rel (0) target = $region5
    $region4: #{transformer_forward.59} parent=1 // pred_region
      _
    $region5: #{transformer_forward.59} parent=1 // pred_fallthru
      _
    // Predicated region
    $region6: #{transformer_forward.59} parent=1 // pred_check
      _
    $region7: #{transformer_forward.59} parent=1 // pred_check_branch
      %14 = sbr.rel (0) target = $region9
    $region8: #{transformer_forward.59} parent=1 // pred_region
      _
    $region9: #{transformer_forward.59} parent=1 // pred_fallthru
      _
    // Predicated region
    $region10: #{transformer_forward.59} parent=1 // pred_check
      _
    $region11: #{transformer_forward.59} parent=1 // pred_check_branch
      %16 = sbr.rel (0) target = $region13
    $region12: #{transformer_forward.59} parent=1 // pred_region
      _
    $region13: #{transformer_forward.59} parent=1 // pred_fallthru
      _
    // Predicated region
    $region14: #{transformer_forward.59} parent=1 // pred_check
      _
    $region15: #{transformer_forward.59} parent=1 // pred_check_branch
      %18 = sbr.rel (0) target = $region17
    $region16: #{transformer_forward.59} parent=1 // pred_region
      _
    $region17: #{transformer_forward.59} parent=1 // pred_fallthru
      _
    // Predicated region
    $region18: #{transformer_forward.59} parent=1 // pred_check
      _
    $region19: #{transformer_forward.59} parent=1 // pred_check_branch
      %20 = sbr.rel (0) target = $region21
    $region20: #{transformer_forward.59} parent=1 // pred_region
      _
    $region21: #{transformer_forward.59} parent=1 // pred_fallthru
      _
    %v21 = vld [vmem:[%s0] sm:$0xff]
    %v22 = vld [vmem:[%s0 + $0x8] sm:$0xff]
    %v23 = vld [vmem:[%s0 + $0x10] sm:$0xff]
    %v24 = vld [vmem:[%s0 + $0x18] sm:$0xff]
    %v25 = vunpack.c.l.bf16 %v21
    %v26 = vunpack.c.h.bf16 %v21
    %v27 = vunpack.c.l.bf16 %v22
    %v28 = vunpack.c.h.bf16 %v22
    %v29 = vunpack.c.l.bf16 %v23
    %v30 = vunpack.c.h.bf16 %v23
    %v31 = vunpack.c.l.bf16 %v24
    %v32 = vunpack.c.h.bf16 %v24
    %v33 = vadd.f32 %v25, %v26
    %34 = vadd.xlane.f32.xlu0 %v33
    %v35 = vpop.xlane.xlu0 %34
    %v36 = vadd.f32 %v27, %v28
    %37 = vadd.xlane.f32.xlu0 %v36
    %v38 = vpop.xlane.xlu0 %37
    %v39 = vadd.f32 %v29, %v30
    %40 = vadd.xlane.f32.xlu0 %v39
    %v41 = vpop.xlane.xlu0 %40
    %v42 = vadd.f32 %v31, %v32
    %43 = vadd.xlane.f32.xlu0 %v42
    %v44 = vpop.xlane.xlu0 %43
    %v45 = vrcp.pop 256.0
    %v46 = vmul.f32 %v35, %v45
    %v47 = vmul.f32 %v38, %v45
    %v48 = vmul.f32 %v41, %v45
    %v49 = vmul.f32 %v44, %v45
    %v50 = vsub.f32 %v25, %v46
    %v51 = vsub.f32 %v26, %v46
    %v52 = vsub.f32 %v27, %v47
    %v53 = vsub.f32 %v28, %v47
    %v54 = vsub.f32 %v29, %v48
    %v55 = vsub.f32 %v30, %v48
    %v56 = vsub.f32 %v31, %v49
    %v57 = vsub.f32 %v32, %v49
    %v58 = vmul.f32 %v50, %v50
    %v59 = vmul.f32 %v51, %v51
    %v60 = vmul.f32 %v52, %v52
    %v61 = vmul.f32 %v53, %v53
    %v62 = vmul.f32 %v54, %v54
    %v63 = vmul.f32 %v55, %v55
    %v64 = vmul.f32 %v56, %v56
    %v65 = vmul.f32 %v57, %v57
    %v66 = vadd.f32 %v58, %v59
    %67 = vadd.xlane.f32.xlu0 %v66
    %v68 = vpop.xlane.xlu0 %67
    %v69 = vadd.f32 %v60, %v61
    %70 = vadd.xlane.f32.xlu0 %v69
    %v71 = vpop.xlane.xlu0 %70
    %v72 = vadd.f32 %v62, %v63
    %73 = vadd.xlane.f32.xlu0 %v72
    %v74 = vpop.xlane.xlu0 %73
    %v75 = vadd.f32 %v64, %v65
    %76 = vadd.xlane.f32.xlu0 %v75
    %v77 = vpop.xlane.xlu0 %76
    %v78 = vmul.f32 %v68, %v45
    %v79 = vmul.f32 %v71, %v45
    %v80 = vmul.f32 %v74, %v45
    %v81 = vmul.f32 %v77, %v45
    %v82 = vadd.f32 %v78, 1e-05
    %v83 = vadd.f32 %v79, 1e-05
    %v84 = vadd.f32 %v80, 1e-05
    %v85 = vadd.f32 %v81, 1e-05
    %v86 = vrsqrt.pop %v82
    %v87 = vrsqrt.pop %v83
    %v88 = vrsqrt.pop %v84
    %v89 = vrsqrt.pop %v85
    %v90 = vmul.f32 %v50, %v86
    %v91 = vmul.f32 %v51, %v86
    %v92 = vmul.f32 %v52, %v87
    %v93 = vmul.f32 %v53, %v87
    %v94 = vmul.f32 %v54, %v88
    %v95 = vmul.f32 %v55, %v88
    %v96 = vmul.f32 %v56, %v89
    %v97 = vmul.f32 %v57, %v89
    %v98 = vld [vmem:[%s1] sm:$0x3]
    %v100 = vlaneseq
    %v101 = vshrl.u32 %v100, 7
    %v102 = vsub.s32 0, %v101
    %v103 = vrot.slane %v98, %v102
    %v104 = vlaneseq
    %v105 = vshrl.u32 %v104, 7
    %v106 = vsub.s32 1, %v105
    %v107 = vrot.slane %v98, %v106
    %v110 = vmul.f32 %v90, %v103
    %v111 = vmul.f32 %v91, %v107
    %v112 = vmul.f32 %v92, %v103
    %v113 = vmul.f32 %v93, %v107
    %v114 = vmul.f32 %v94, %v103
    %v115 = vmul.f32 %v95, %v107
    %v116 = vmul.f32 %v96, %v103
    %v117 = vmul.f32 %v97, %v107
    %v118 = vld [vmem:[%s2] sm:$0x3]
    %v120 = vlaneseq
    %v121 = vshrl.u32 %v120, 7
    %v122 = vsub.s32 0, %v121
    %v123 = vrot.slane %v118, %v122
    %v124 = vlaneseq
    %v125 = vshrl.u32 %v124, 7
    %v126 = vsub.s32 1, %v125
    %v127 = vrot.slane %v118, %v126
    %v130 = vadd.f32 %v110, %v123
    %v131 = vadd.f32 %v111, %v127
    %v132 = vadd.f32 %v112, %v123
    %v133 = vadd.f32 %v113, %v127
    %v134 = vadd.f32 %v114, %v123
    %v135 = vadd.f32 %v115, %v127
    %v136 = vadd.f32 %v116, %v123
    %v137 = vadd.f32 %v117, %v127
    %v138 = vpack.c.bf16 %v132, %v130
    %v139 = vpack.c.bf16 %v133, %v131
    %v140 = vpack.c.bf16 %v136, %v134
    %v141 = vpack.c.bf16 %v137, %v135
    %v142 = vld [vmem:[%s3] sm:$0xff]
    %v143 = vld [vmem:[%s3 + $0x8] sm:$0xff]
    %v144 = vld [vmem:[%s3 + $0x10] sm:$0xff]
    %v145 = vld [vmem:[%s3 + $0x18] sm:$0xff]
    %v146 = vld [vmem:[%s3 + $0x20] sm:$0xff]
    %v147 = vld [vmem:[%s3 + $0x28] sm:$0xff]
    %v148 = vld [vmem:[%s3 + $0x30] sm:$0xff]
    %v149 = vld [vmem:[%s3 + $0x38] sm:$0xff]
    %v150 = vld [vmem:[%s3 + $0x40] sm:$0xff]
    %v151 = vld [vmem:[%s3 + $0x48] sm:$0xff]
    %v152 = vld [vmem:[%s3 + $0x50] sm:$0xff]
    %v153 = vld [vmem:[%s3 + $0x58] sm:$0xff]
    %v154 = vld [vmem:[%s3 + $0x60] sm:$0xff]
    %v155 = vld [vmem:[%s3 + $0x68] sm:$0xff]
    %v156 = vld [vmem:[%s3 + $0x70] sm:$0xff]
    %v157 = vld [vmem:[%s3 + $0x78] sm:$0xff]
    %v158 = vld [vmem:[%s3 + $0x80] sm:$0xff]
    %v159 = vld [vmem:[%s3 + $0x88] sm:$0xff]
    %v160 = vld [vmem:[%s3 + $0x90] sm:$0xff]
    %v161 = vld [vmem:[%s3 + $0x98] sm:$0xff]
    %v162 = vld [vmem:[%s3 + $0xa0] sm:$0xff]
    %v163 = vld [vmem:[%s3 + $0xa8] sm:$0xff]
    %v164 = vld [vmem:[%s3 + $0xb0] sm:$0xff]
    %v165 = vld [vmem:[%s3 + $0xb8] sm:$0xff]
    %v166 = vld [vmem:[%s3 + $0xc0] sm:$0xff]
    %v167 = vld [vmem:[%s3 + $0xc8] sm:$0xff]
    %v168 = vld [vmem:[%s3 + $0xd0] sm:$0xff]
    %v169 = vld [vmem:[%s3 + $0xd8] sm:$0xff]
    %v170 = vld [vmem:[%s3 + $0xe0] sm:$0xff]
    %v171 = vld [vmem:[%s3 + $0xe8] sm:$0xff]
    %v172 = vld [vmem:[%s3 + $0xf0] sm:$0xff]
    %v173 = vld [vmem:[%s3 + $0xf8] sm:$0xff]
    %v174 = vld [vmem:[%s3 + $0x100] sm:$0xff]
    %v175 = vld [vmem:[%s3 + $0x108] sm:$0xff]
    %v176 = vld [vmem:[%s3 + $0x110] sm:$0xff]
    %v177 = vld [vmem:[%s3 + $0x118] sm:$0xff]
    %v178 = vld [vmem:[%s3 + $0x120] sm:$0xff]
    %v179 = vld [vmem:[%s3 + $0x128] sm:$0xff]
    %v180 = vld [vmem:[%s3 + $0x130] sm:$0xff]
    %v181 = vld [vmem:[%s3 + $0x138] sm:$0xff]
    %v182 = vld [vmem:[%s3 + $0x140] sm:$0xff]
    %v183 = vld [vmem:[%s3 + $0x148] sm:$0xff]
    %v184 = vld [vmem:[%s3 + $0x150] sm:$0xff]
    %v185 = vld [vmem:[%s3 + $0x158] sm:$0xff]
    %v186 = vld [vmem:[%s3 + $0x160] sm:$0xff]
    %v187 = vld [vmem:[%s3 + $0x168] sm:$0xff]
    %v188 = vld [vmem:[%s3 + $0x170] sm:$0xff]
    %v189 = vld [vmem:[%s3 + $0x178] sm:$0xff]
    %v190 = vld [vmem:[%s3 + $0x180] sm:$0xff]
    %v191 = vld [vmem:[%s3 + $0x188] sm:$0xff]
    %v192 = vld [vmem:[%s3 + $0x190] sm:$0xff]
    %v193 = vld [vmem:[%s3 + $0x198] sm:$0xff]
    %v194 = vld [vmem:[%s3 + $0x1a0] sm:$0xff]
    %v195 = vld [vmem:[%s3 + $0x1a8] sm:$0xff]
    %v196 = vld [vmem:[%s3 + $0x1b0] sm:$0xff]
    %v197 = vld [vmem:[%s3 + $0x1b8] sm:$0xff]
    %v198 = vld [vmem:[%s3 + $0x1c0] sm:$0xff]
    %v199 = vld [vmem:[%s3 + $0x1c8] sm:$0xff]
    %v200 = vld [vmem:[%s3 + $0x1d0] sm:$0xff]
    %v201 = vld [vmem:[%s3 + $0x1d8] sm:$0xff]
    %v202 = vld [vmem:[%s3 + $0x1e0] sm:$0xff]
    %v203 = vld [vmem:[%s3 + $0x1e8] sm:$0xff]
    %v204 = vld [vmem:[%s3 + $0x1f0] sm:$0xff]
    %v205 = vld [vmem:[%s3 + $0x1f8] sm:$0xff]
    %v206 = vld [vmem:[%s4] sm:$0xf]
    %v208 = vlaneseq
    %v209 = vshrl.u32 %v208, 7
    %v210 = vsub.s32 0, %v209
    %v211 = vrot.slane %v206, %v210
    %v212 = vlaneseq
    %v213 = vshrl.u32 %v212, 7
    %v214 = vsub.s32 1, %v213
    %v215 = vrot.slane %v206, %v214
    %v216 = vlaneseq
    %v217 = vshrl.u32 %v216, 7
    %v218 = vsub.s32 2, %v217
    %v219 = vrot.slane %v206, %v218
    %v220 = vlaneseq
    %v221 = vshrl.u32 %v220, 7
    %v222 = vsub.s32 3, %v221
    %v223 = vrot.slane %v206, %v222
    %v292 = vunpack.c.l.b16 %v142
    %v293 = vunpack.c.h.b16 %v142
    %v294 = vunpack.c.l.b16 %v143
    %v295 = vunpack.c.h.b16 %v143
    %v296 = vunpack.c.l.b16 %v144
    %v297 = vunpack.c.h.b16 %v144
    %v298 = vunpack.c.l.b16 %v145
    %v299 = vunpack.c.h.b16 %v145
    %v300 = vunpack.c.l.b16 %v146
    %v301 = vunpack.c.h.b16 %v146
    %v302 = vunpack.c.l.b16 %v147
    %v303 = vunpack.c.h.b16 %v147
    %v304 = vunpack.c.l.b16 %v148
    %v305 = vunpack.c.h.b16 %v148
    %v306 = vunpack.c.l.b16 %v149
    %v307 = vunpack.c.h.b16 %v149
    %v308 = vunpack.c.l.b16 %v150
    %v309 = vunpack.c.h.b16 %v150
    %v310 = vunpack.c.l.b16 %v151
    %v311 = vunpack.c.h.b16 %v151
    %v312 = vunpack.c.l.b16 %v152
    %v313 = vunpack.c.h.b16 %v152
    %v314 = vunpack.c.l.b16 %v153
    %v315 = vunpack.c.h.b16 %v153
    %v316 = vunpack.c.l.b16 %v154
    %v317 = vunpack.c.h.b16 %v154
    %v318 = vunpack.c.l.b16 %v155
    %v319 = vunpack.c.h.b16 %v155
    %v320 = vunpack.c.l.b16 %v156
    %v321 = vunpack.c.h.b16 %v156
    %v322 = vunpack.c.l.b16 %v157
    %v323 = vunpack.c.h.b16 %v157
    %v324 = vunpack.c.l.b16 %v158
    %v325 = vunpack.c.h.b16 %v158
    %v326 = vunpack.c.l.b16 %v159
    %v327 = vunpack.c.h.b16 %v159
    %v328 = vunpack.c.l.b16 %v160
    %v329 = vunpack.c.h.b16 %v160
    %v330 = vunpack.c.l.b16 %v161
    %v331 = vunpack.c.h.b16 %v161
    %v332 = vunpack.c.l.b16 %v162
    %v333 = vunpack.c.h.b16 %v162
    %v334 = vunpack.c.l.b16 %v163
    %v335 = vunpack.c.h.b16 %v163
    %v336 = vunpack.c.l.b16 %v164
    %v337 = vunpack.c.h.b16 %v164
    %v338 = vunpack.c.l.b16 %v165
    %v339 = vunpack.c.h.b16 %v165
    %v340 = vunpack.c.l.b16 %v166
    %v341 = vunpack.c.h.b16 %v166
    %v342 = vunpack.c.l.b16 %v167
    %v343 = vunpack.c.h.b16 %v167
    %v344 = vunpack.c.l.b16 %v168
    %v345 = vunpack.c.h.b16 %v168
    %v346 = vunpack.c.l.b16 %v169
    %v347 = vunpack.c.h.b16 %v169
    %v348 = vunpack.c.l.b16 %v170
    %v349 = vunpack.c.h.b16 %v170
    %v350 = vunpack.c.l.b16 %v171
    %v351 = vunpack.c.h.b16 %v171
    %v352 = vunpack.c.l.b16 %v172
    %v353 = vunpack.c.h.b16 %v172
    %v354 = vunpack.c.l.b16 %v173
    %v355 = vunpack.c.h.b16 %v173
    %v356 = vunpack.c.l.b16 %v174
    %v357 = vunpack.c.h.b16 %v174
    %v358 = vunpack.c.l.b16 %v175
    %v359 = vunpack.c.h.b16 %v175
    %v360 = vunpack.c.l.b16 %v176
    %v361 = vunpack.c.h.b16 %v176
    %v362 = vunpack.c.l.b16 %v177
    %v363 = vunpack.c.h.b16 %v177
    %v364 = vunpack.c.l.b16 %v178
    %v365 = vunpack.c.h.b16 %v178
    %v366 = vunpack.c.l.b16 %v179
    %v367 = vunpack.c.h.b16 %v179
    %v368 = vunpack.c.l.b16 %v180
    %v369 = vunpack.c.h.b16 %v180
    %v370 = vunpack.c.l.b16 %v181
    %v371 = vunpack.c.h.b16 %v181
    %v372 = vunpack.c.l.b16 %v182
    %v373 = vunpack.c.h.b16 %v182
    %v374 = vunpack.c.l.b16 %v183
    %v375 = vunpack.c.h.b16 %v183
    %v376 = vunpack.c.l.b16 %v184
    %v377 = vunpack.c.h.b16 %v184
    %v378 = vunpack.c.l.b16 %v185
    %v379 = vunpack.c.h.b16 %v185
    %v380 = vunpack.c.l.b16 %v186
    %v381 = vunpack.c.h.b16 %v186
    %v382 = vunpack.c.l.b16 %v187
    %v383 = vunpack.c.h.b16 %v187
    %v384 = vunpack.c.l.b16 %v188
    %v385 = vunpack.c.h.b16 %v188
    %v386 = vunpack.c.l.b16 %v189
    %v387 = vunpack.c.h.b16 %v189
    %v388 = vunpack.c.l.b16 %v190
    %v389 = vunpack.c.h.b16 %v190
    %v390 = vunpack.c.l.b16 %v191
    %v391 = vunpack.c.h.b16 %v191
    %v392 = vunpack.c.l.b16 %v192
    %v393 = vunpack.c.h.b16 %v192
    %v394 = vunpack.c.l.b16 %v193
    %v395 = vunpack.c.h.b16 %v193
    %v396 = vunpack.c.l.b16 %v194
    %v397 = vunpack.c.h.b16 %v194
    %v398 = vunpack.c.l.b16 %v195
    %v399 = vunpack.c.h.b16 %v195
    %v400 = vunpack.c.l.b16 %v196
    %v401 = vunpack.c.h.b16 %v196
    %v402 = vunpack.c.l.b16 %v197
    %v403 = vunpack.c.h.b16 %v197
    %v404 = vunpack.c.l.b16 %v198
    %v405 = vunpack.c.h.b16 %v198
    %v406 = vunpack.c.l.b16 %v199
    %v407 = vunpack.c.h.b16 %v199
    %v408 = vunpack.c.l.b16 %v200
    %v409 = vunpack.c.h.b16 %v200
    %v410 = vunpack.c.l.b16 %v201
    %v411 = vunpack.c.h.b16 %v201
    %v412 = vunpack.c.l.b16 %v202
    %v413 = vunpack.c.h.b16 %v202
    %v414 = vunpack.c.l.b16 %v203
    %v415 = vunpack.c.h.b16 %v203
    %v416 = vunpack.c.l.b16 %v204
    %v417 = vunpack.c.h.b16 %v204
    %v418 = vunpack.c.l.b16 %v205
    %v419 = vunpack.c.h.b16 %v205
    %v420 = vpack.c.b16 %v296, %v292
    %v421 = vpack.c.b16 %v297, %v293
    %v422 = vpack.c.b16 %v298, %v294
    %v423 = vpack.c.b16 %v299, %v295
    %v424 = vpack.c.b16 %v304, %v300
    %v425 = vpack.c.b16 %v305, %v301
    %v426 = vpack.c.b16 %v306, %v302
    %v427 = vpack.c.b16 %v307, %v303
    %v428 = vpack.c.b16 %v312, %v308
    %v429 = vpack.c.b16 %v313, %v309
    %v430 = vpack.c.b16 %v314, %v310
    %v431 = vpack.c.b16 %v315, %v311
    %v432 = vpack.c.b16 %v320, %v316
    %v433 = vpack.c.b16 %v321, %v317
    %v434 = vpack.c.b16 %v322, %v318
    %v435 = vpack.c.b16 %v323, %v319
    %v436 = vpack.c.b16 %v328, %v324
    %v437 = vpack.c.b16 %v329, %v325
    %v438 = vpack.c.b16 %v330, %v326
    %v439 = vpack.c.b16 %v331, %v327
    %v440 = vpack.c.b16 %v336, %v332
    %v441 = vpack.c.b16 %v337, %v333
    %v442 = vpack.c.b16 %v338, %v334
    %v443 = vpack.c.b16 %v339, %v335
    %v444 = vpack.c.b16 %v344, %v340
    %v445 = vpack.c.b16 %v345, %v341
    %v446 = vpack.c.b16 %v346, %v342
    %v447 = vpack.c.b16 %v347, %v343
    %v448 = vpack.c.b16 %v352, %v348
    %v449 = vpack.c.b16 %v353, %v349
    %v450 = vpack.c.b16 %v354, %v350
    %v451 = vpack.c.b16 %v355, %v351
    %v452 = vpack.c.b16 %v360, %v356
    %v453 = vpack.c.b16 %v361, %v357
    %v454 = vpack.c.b16 %v362, %v358
    %v455 = vpack.c.b16 %v363, %v359
    %v456 = vpack.c.b16 %v368, %v364
    %v457 = vpack.c.b16 %v369, %v365
    %v458 = vpack.c.b16 %v370, %v366
    %v459 = vpack.c.b16 %v371, %v367
    %v460 = vpack.c.b16 %v376, %v372
    %v461 = vpack.c.b16 %v377, %v373
    %v462 = vpack.c.b16 %v378, %v374
    %v463 = vpack.c.b16 %v379, %v375
    %v464 = vpack.c.b16 %v384, %v380
    %v465 = vpack.c.b16 %v385, %v381
    %v466 = vpack.c.b16 %v386, %v382
    %v467 = vpack.c.b16 %v387, %v383
    %v468 = vpack.c.b16 %v392, %v388
    %v469 = vpack.c.b16 %v393, %v389
    %v470 = vpack.c.b16 %v394, %v390
    %v471 = vpack.c.b16 %v395, %v391
    %v472 = vpack.c.b16 %v400, %v396
    %v473 = vpack.c.b16 %v401, %v397
    %v474 = vpack.c.b16 %v402, %v398
    %v475 = vpack.c.b16 %v403, %v399
    %v476 = vpack.c.b16 %v408, %v404
    %v477 = vpack.c.b16 %v409, %v405
    %v478 = vpack.c.b16 %v410, %v406
    %v479 = vpack.c.b16 %v411, %v407
    %v480 = vpack.c.b16 %v416, %v412
    %v481 = vpack.c.b16 %v417, %v413
    %v482 = vpack.c.b16 %v418, %v414
    %v483 = vpack.c.b16 %v419, %v415
    %548 = vmatprep.subr.bf16.mxu0 %v421
    %549 = vmatpush1.bf16.msra.mxu0 %v420
    %550 = vmatprep.subr.bf16.mxu0 %v425
    %551 = vmatpush1.bf16.msra.mxu0 %v424
    %552 = vmatprep.subr.bf16.mxu0 %v429
    %553 = vmatpush1.bf16.msra.mxu0 %v428
    %554 = vmatprep.subr.bf16.mxu0 %v433
    %555 = vmatpush1.bf16.msra.mxu0 %v432
    %556 = vmatprep.subr.bf16.mxu0 %v437
    %557 = vmatpush1.bf16.msra.mxu0 %v436
    %558 = vmatprep.subr.bf16.mxu0 %v441
    %559 = vmatpush1.bf16.msra.mxu0 %v440
    %560 = vmatprep.subr.bf16.mxu0 %v445
    %561 = vmatpush1.bf16.msra.mxu0 %v444
    %562 = vmatprep.subr.bf16.mxu0 %v449
    %563 = vmatpush1.bf16.msra.mxu0 %v448
    %564 = vmatprep.subr.bf16.mxu0 %v453
    %565 = vmatpush1.bf16.msra.mxu0 %v452
    %566 = vmatprep.subr.bf16.mxu0 %v457
    %567 = vmatpush1.bf16.msra.mxu0 %v456
    %568 = vmatprep.subr.bf16.mxu0 %v461
    %569 = vmatpush1.bf16.msra.mxu0 %v460
    %570 = vmatprep.subr.bf16.mxu0 %v465
    %571 = vmatpush1.bf16.msra.mxu0 %v464
    %572 = vmatprep.subr.bf16.mxu0 %v469
    %573 = vmatpush1.bf16.msra.mxu0 %v468
    %574 = vmatprep.subr.bf16.mxu0 %v473
    %575 = vmatpush1.bf16.msra.mxu0 %v472
    %576 = vmatprep.subr.bf16.mxu0 %v477
    %577 = vmatpush1.bf16.msra.mxu0 %v476
    %578 = vmatprep.subr.bf16.mxu0 %v481
    %579 = vmatpush1.bf16.msra.mxu0 %v480
    %580 = vmatprep.mubr.bf16.mxu0 %v139
    %581 = vmatmul.mubr.bf16.gmra.mrb[0].mxu0 %v138
    %v582 = vpop.f32.mrb[0].mxu0
    %v583 = vadd.f32 %v211, %v582
    %v584 = vpop.f32.mrb[0].mxu0
    %v585 = vadd.f32 %v215, %v584
    %v586 = vpop.f32.mrb[0].mxu0
    %v587 = vadd.f32 %v211, %v586
    %v588 = vpop.f32.mrb[0].mxu0
    %v589 = vadd.f32 %v215, %v588
    %590 = vmatprep.mubr.bf16.mxu0 %v141
    %591 = vmatmul.mubr.bf16.gmra.mrb[0].mxu0 %v140
    %v592 = vpop.f32.mrb[0].mxu0
    %v593 = vadd.f32 %v211, %v592
    %v594 = vpop.f32.mrb[0].mxu0
    %v595 = vadd.f32 %v215, %v594
    %v596 = vpop.f32.mrb[0].mxu0
    %v597 = vadd.f32 %v211, %v596
    %v598 = vpop.f32.mrb[0].mxu0
    %v599 = vadd.f32 %v215, %v598
    %600 = vdwg.mxu0
    %601 = vmatprep.subr.bf16.mxu0 %v423
    %602 = vmatpush1.bf16.msra.mxu0 %v422
    %603 = vmatprep.subr.bf16.mxu0 %v427
    %604 = vmatpush1.bf16.msra.mxu0 %v426
    %605 = vmatprep.subr.bf16.mxu0 %v431
    %606 = vmatpush1.bf16.msra.mxu0 %v430
    %607 = vmatprep.subr.bf16.mxu0 %v435
    %608 = vmatpush1.bf16.msra.mxu0 %v434
    %609 = vmatprep.subr.bf16.mxu0 %v439
    %610 = vmatpush1.bf16.msra.mxu0 %v438
    %611 = vmatprep.subr.bf16.mxu0 %v443
    %612 = vmatpush1.bf16.msra.mxu0 %v442
    %613 = vmatprep.subr.bf16.mxu0 %v447
    %614 = vmatpush1.bf16.msra.mxu0 %v446
    %615 = vmatprep.subr.bf16.mxu0 %v451
    %616 = vmatpush1.bf16.msra.mxu0 %v450
    %617 = vmatprep.subr.bf16.mxu0 %v455
    %618 = vmatpush1.bf16.msra.mxu0 %v454
    %619 = vmatprep.subr.bf16.mxu0 %v459
    %620 = vmatpush1.bf16.msra.mxu0 %v458
    %621 = vmatprep.subr.bf16.mxu0 %v463
    %622 = vmatpush1.bf16.msra.mxu0 %v462
    %623 = vmatprep.subr.bf16.mxu0 %v467
    %624 = vmatpush1.bf16.msra.mxu0 %v466
    %625 = vmatprep.subr.bf16.mxu0 %v471
    %626 = vmatpush1.bf16.msra.mxu0 %v470
    %627 = vmatprep.subr.bf16.mxu0 %v475
    %628 = vmatpush1.bf16.msra.mxu0 %v474
    %629 = vmatprep.subr.bf16.mxu0 %v479
    %630 = vmatpush1.bf16.msra.mxu0 %v478
    %631 = vmatprep.subr.bf16.mxu0 %v483
    %632 = vmatpush1.bf16.msra.mxu0 %v482
    %633 = vmatprep.mubr.bf16.mxu0 %v139
    %634 = vmatmul.mubr.bf16.gmra.mrb[0].mxu0 %v138
    %v635 = vpop.f32.mrb[0].mxu0
    %v636 = vadd.f32 %v219, %v635
    %v637 = vpop.f32.mrb[0].mxu0
    %v638 = vadd.f32 %v223, %v637
    %v639 = vpop.f32.mrb[0].mxu0
    %v640 = vadd.f32 %v219, %v639
    %v641 = vpop.f32.mrb[0].mxu0
    %v642 = vadd.f32 %v223, %v641
    %643 = vmatprep.mubr.bf16.mxu0 %v141
    %644 = vmatmul.mubr.bf16.gmra.mrb[0].mxu0 %v140
    %v645 = vpop.f32.mrb[0].mxu0
    %v646 = vadd.f32 %v219, %v645
    %v647 = vpop.f32.mrb[0].mxu0
    %v648 = vadd.f32 %v223, %v647
    %v649 = vpop.f32.mrb[0].mxu0
    %v650 = vadd.f32 %v219, %v649
    %v651 = vpop.f32.mrb[0].mxu0
    %v652 = vadd.f32 %v223, %v651
    %653 = vdwg.mxu0
    %v654 = vmax.f32 %v583, %v585
    %v655 = vmax.f32 %v654, %v636
    %v656 = vmax.f32 %v655, %v638
    %657 = vmax.xlane.f32.xlu0 %v656
    %v658 = vpop.xlane.xlu0 %657
    %v659 = vmax.f32 %v587, %v589
    %v660 = vmax.f32 %v659, %v640
    %v661 = vmax.f32 %v660, %v642
    %662 = vmax.xlane.f32.xlu0 %v661
    %v663 = vpop.xlane.xlu0 %662
    %v664 = vmax.f32 %v593, %v595
    %v665 = vmax.f32 %v664, %v646
    %v666 = vmax.f32 %v665, %v648
    %667 = vmax.xlane.f32.xlu0 %v666
    %v668 = vpop.xlane.xlu0 %667
    %v669 = vmax.f32 %v597, %v599
    %v670 = vmax.f32 %v669, %v650
    %v671 = vmax.f32 %v670, %v652
    %672 = vmax.xlane.f32.xlu0 %v671
    %v673 = vpop.xlane.xlu0 %672
    %v674 = vsub.f32 %v583, %v658
    %v675 = vsub.f32 %v585, %v658
    %v676 = vsub.f32 %v636, %v658
    %v677 = vsub.f32 %v638, %v658
    %v678 = vsub.f32 %v587, %v663
    %v679 = vsub.f32 %v589, %v663
    %v680 = vsub.f32 %v640, %v663
    %v681 = vsub.f32 %v642, %v663
    %v682 = vsub.f32 %v593, %v668
    %v683 = vsub.f32 %v595, %v668
    %v684 = vsub.f32 %v646, %v668
    %v685 = vsub.f32 %v648, %v668
    %v686 = vsub.f32 %v597, %v673
    %v687 = vsub.f32 %v599, %v673
    %v688 = vsub.f32 %v650, %v673
    %v689 = vsub.f32 %v652, %v673
    %v690 = vmul.f32 %v674, 1.442695
    %v691 = vpow.pop %v690
    %v692 = vmul.f32 %v675, 1.442695
    %v693 = vpow.pop %v692
    %v694 = vmul.f32 %v676, 1.442695
    %v695 = vpow.pop %v694
    %v696 = vmul.f32 %v677, 1.442695
    %v697 = vpow.pop %v696
    %v698 = vmul.f32 %v678, 1.442695
    %v699 = vpow.pop %v698
    %v700 = vmul.f32 %v679, 1.442695
    %v701 = vpow.pop %v700
    %v702 = vmul.f32 %v680, 1.442695
    %v703 = vpow.pop %v702
    %v704 = vmul.f32 %v681, 1.442695
    %v705 = vpow.pop %v704
    %v706 = vmul.f32 %v682, 1.442695
    %v707 = vpow.pop %v706
    %v708 = vmul.f32 %v683, 1.442695
    %v709 = vpow.pop %v708
    %v710 = vmul.f32 %v684, 1.442695
    %v711 = vpow.pop %v710
    %v712 = vmul.f32 %v685, 1.442695
    %v713 = vpow.pop %v712
    %v714 = vmul.f32 %v686, 1.442695
    %v715 = vpow.pop %v714
    %v716 = vmul.f32 %v687, 1.442695
    %v717 = vpow.pop %v716
    %v718 = vmul.f32 %v688, 1.442695
    %v719 = vpow.pop %v718
    %v720 = vmul.f32 %v689, 1.442695
    %v721 = vpow.pop %v720
    %v722 = vadd.f32 %v691, %v693
    %v723 = vadd.f32 %v722, %v695
    %v724 = vadd.f32 %v723, %v697
    %725 = vadd.xlane.f32.xlu0 %v724
    %v726 = vpop.xlane.xlu0 %725
    %v727 = vadd.f32 %v699, %v701
    %v728 = vadd.f32 %v727, %v703
    %v729 = vadd.f32 %v728, %v705
    %730 = vadd.xlane.f32.xlu0 %v729
    %v731 = vpop.xlane.xlu0 %730
    %v732 = vadd.f32 %v707, %v709
    %v733 = vadd.f32 %v732, %v711
    %v734 = vadd.f32 %v733, %v713
    %735 = vadd.xlane.f32.xlu0 %v734
    %v736 = vpop.xlane.xlu0 %735
    %v737 = vadd.f32 %v715, %v717
    %v738 = vadd.f32 %v737, %v719
    %v739 = vadd.f32 %v738, %v721
    %740 = vadd.xlane.f32.xlu0 %v739
    %v741 = vpop.xlane.xlu0 %740
    %v742 = vlog2.pop %v726
    %v743 = vmul.f32 %v742, 0.6931472
    %v744 = vlog2.pop %v731
    %v745 = vmul.f32 %v744, 0.6931472
    %v746 = vlog2.pop %v736
    %v747 = vmul.f32 %v746, 0.6931472
    %v748 = vlog2.pop %v741
    %v749 = vmul.f32 %v748, 0.6931472
    %v750 = vsub.f32 %v674, %v743
    %v751 = vsub.f32 %v675, %v743
    %v752 = vsub.f32 %v676, %v743
    %v753 = vsub.f32 %v677, %v743
    %v754 = vsub.f32 %v678, %v745
    %v755 = vsub.f32 %v679, %v745
    %v756 = vsub.f32 %v680, %v745
    %v757 = vsub.f32 %v681, %v745
    %v758 = vsub.f32 %v682, %v747
    %v759 = vsub.f32 %v683, %v747
    %v760 = vsub.f32 %v684, %v747
    %v761 = vsub.f32 %v685, %v747
    %v762 = vsub.f32 %v686, %v749
    %v763 = vsub.f32 %v687, %v749
    %v764 = vsub.f32 %v688, %v749
    %v765 = vsub.f32 %v689, %v749
    %766 = vst [vmem:[#allocation2] sm:$0xff] %v750
    %767 = vst [vmem:[#allocation2 + $0x8] sm:$0xff] %v751
    %768 = vst [vmem:[#allocation2 + $0x10] sm:$0xff] %v752
    %769 = vst [vmem:[#allocation2 + $0x18] sm:$0xff] %v753
    %770 = vst [vmem:[#allocation2 + $0x20] sm:$0xff] %v754
    %771 = vst [vmem:[#allocation2 + $0x28] sm:$0xff] %v755
    %772 = vst [vmem:[#allocation2 + $0x30] sm:$0xff] %v756
    %773 = vst [vmem:[#allocation2 + $0x38] sm:$0xff] %v757
    %774 = vst [vmem:[#allocation2 + $0x40] sm:$0xff] %v758
    %775 = vst [vmem:[#allocation2 + $0x48] sm:$0xff] %v759
    %776 = vst [vmem:[#allocation2 + $0x50] sm:$0xff] %v760
    %777 = vst [vmem:[#allocation2 + $0x58] sm:$0xff] %v761
    %778 = vst [vmem:[#allocation2 + $0x60] sm:$0xff] %v762
    %779 = vst [vmem:[#allocation2 + $0x68] sm:$0xff] %v763
    %780 = vst [vmem:[#allocation2 + $0x70] sm:$0xff] %v764
    %781 = vst [vmem:[#allocation2 + $0x78] sm:$0xff] %v765
    // Predicated region
    $region22: #{transformer_forward.59} parent=1 // pred_check
      _
    $region23: #{transformer_forward.59} parent=1 // pred_check_branch
      %783 = sbr.rel (0) target = $region25
    $region24: #{transformer_forward.59} parent=1 // pred_region
      %s785 = ssub.s32 2048, 2048
      %786 = vsyncadd [#allocation3], %s785
      %s787 = sshll.u32 [#allocation2], 4
      %s788 = int_to_ptr.vmem [resolvable:$true] %s787
      %793 = dma.vmem_to_hbm [thread:$0]  %s788, 2048, %s5, [#allocation3], 512, 512, 32
    $region25: #{transformer_forward.59} parent=1 // pred_fallthru
      _
    // Predicated region
    $region26: #{transformer_forward.59} parent=1 // pred_check
      _
    $region27: #{transformer_forward.59} parent=1 // pred_check_branch
      %795 = sbr.rel (0) target = $region29
    $region28: #{transformer_forward.59} parent=1 // pred_region
      %796 = dma.done [#allocation3], 2048
    $region29: #{transformer_forward.59} parent=1 // pred_fallthru
      _
    %797 = vsyncpa [#allocation3], 1

</llo_original>
